<compile_context>
chip_gen: v7x
topology: tpu7x:2x2x1
jax: 0.10.0
libtpu: 0.0.40
codegen_flags: <defaults>
</compile_context>

<pallas_src>
import functools

import jax
import jax.numpy as jnp
from jax.experimental import pallas as pl
from jax.experimental.pallas import tpu as pltpu


def _round_up(x, m):
    return ((x + m - 1) // m) * m


# ----------------------------------------------------------------------------
# Kernels
# ----------------------------------------------------------------------------
def _accum_step(x_ref, w_ref, b_ref, acc_ref):
    """One k-step of acc += x_tile @ w_tile, with bias seeding at k == 0.

    x_ref : (tm, tk)  activation tile (input dtype)
    w_ref : (tk, tn)  pre-transposed weight tile (bf16 or f32)
    b_ref : (1,  tn)  bias tile (f32)
    acc_ref: (tm, tn) f32 accumulator (output block or scratch)
    """
    k = pl.program_id(2)

    @pl.when(k == 0)
    def _():
        # Seed the accumulator with the bias -> bias is added exactly once.
        acc_ref[...] = jnp.broadcast_to(b_ref[...].astype(jnp.float32),
                                        acc_ref.shape)

    x = x_ref[...]
    if x.dtype != w_ref.dtype:           # static (trace-time) decision
        x = x.astype(w_ref.dtype)        # VPU cast of the tile; MXU runs bf16
    acc_ref[...] += jnp.dot(x, w_ref[...], preferred_element_type=jnp.float32)


def _linear_kernel_f32out(x_ref, w_ref, b_ref, o_ref):
    # f32 output: accumulate directly into the (resident) output block.
    _accum_step(x_ref, w_ref, b_ref, o_ref)


def _linear_kernel_generic(x_ref, w_ref, b_ref, o_ref, acc_ref):
    # non-f32 output: f32 scratch accumulator + cast on the last k step.
    _accum_step(x_ref, w_ref, b_ref, acc_ref)

    @pl.when(pl.program_id(2) == pl.num_programs(2) - 1)
    def _():
        o_ref[...] = acc_ref[...].astype(o_ref.dtype)


# ----------------------------------------------------------------------------
# One-time parameter preparation (pad / cast / transpose the weight ONCE)
# ----------------------------------------------------------------------------
def prepare_last_layer(w, b, *, compute_dtype=jnp.bfloat16,
                       tn_max=512, tk_max=2048):
    """Pre-process nn.Linear parameters for the Pallas forward.

    w: (O, H) torch-Linear layout, b: (O,).
    Returns a dict holding the padded, (optionally) bf16, pre-transposed
    weight wt: (Hp, Op), the padded f32 bias (1, Op) and the tile sizes.
    This runs once at init time, so the per-call path never re-reads or
    re-writes the full weight in HBM.
    """
    O, H = w.shape
    assert b.shape == (O,)

    if compute_dtype is not None:
        w = w.astype(compute_dtype)

    # Output tiling: lane-dense tiles, tn | Op.
    Op = _round_up(O, 128)
    tn = Op if Op <= tn_max else tn_max
    Op = _round_up(Op, tn)

    # Hidden tiling: take the whole (padded) hidden dim when it fits -> one
    # k step, no accumulator RMW sweeps (big win, esp. on v5e).
    Hp = _round_up(H, 128)
    tk = Hp if Hp <= tk_max else 1024
    Hp = _round_up(Hp, tk)

    # Pad then transpose to (Hp, Op): standard MXU contraction in the kernel,
    # no per-tile XLU transpose. Done exactly once.
    wt = jnp.pad(w, ((0, Op - O), (0, Hp - H))).T
    bp = jnp.pad(b.astype(jnp.float32), (0, Op - O)).reshape(1, Op)

    return {"wt": wt, "b": bp, "O": O, "H": H, "tn": tn, "tk": tk}


# ----------------------------------------------------------------------------
# Forward
# ----------------------------------------------------------------------------
def last_layer_forward(x, params, *, tm_max=512, small_fallback=True):
    """y = x @ W.T + b (matching torch.nn.Linear) using prepared params."""
    wt, bp = params["wt"], params["b"]
    O, H = params["O"], params["H"]
    tn, tk = params["tn"], params["tk"]

    B, Hx = x.shape
    assert Hx == H, f"hidden mismatch: {Hx} vs {H}"
    Hp, Op = wt.shape
    out_dtype = x.dtype

    # --- Tiny-problem fallback: XLA's fused dot beats fixed pallas overhead.
    if small_fallback and (B * Op * Hp) <= (1 << 18):
        y = jnp.dot(x, wt[:H, :O], preferred_element_type=jnp.float32)
        return (y + bp[0, :O]).astype(out_dtype)

    # --- Tile selection for the batch axis.
    Bp8 = _round_up(B, 8)
    tm = Bp8 if Bp8 <= tm_max else tm_max   # whole batch resident if it fits
    Bp = _round_up(B, tm)

    # Per-call padding of x only (x is small relative to W for a last layer).
    if (Bp, Hp) != (B, H):
        x = jnp.pad(x, ((0, Bp - B), (0, Hp - H)))

    grid = (Bp // tm, Op // tn, Hp // tk)   # i outer, j middle, k inner

    acc_in_out = (out_dtype == jnp.float32)
    kernel = _linear_kernel_f32out if acc_in_out else _linear_kernel_generic
    scratch = [] if acc_in_out else [pltpu.VMEM((tm, tn), jnp.float32)]

    isz = lambda dt: jnp.dtype(dt).itemsize
    # VMEM working set: double-buffered x / W / out tiles (+ acc scratch).
    tile_bytes = (2 * tm * tk * isz(x.dtype)
                  + 2 * tk * tn * isz(wt.dtype)
                  + 2 * tm * tn * isz(out_dtype)
                  + 2 * tn * isz(bp.dtype)
                  + (0 if acc_in_out else tm * tn * 4))
    vmem_limit = min(56 * 1024 * 1024,
                     max(32 * 1024 * 1024, int(tile_bytes * 1.5)))

    cost = pl.CostEstimate(
        flops=2 * Bp * Hp * Op,
        transcendentals=0,
        bytes_accessed=(Bp * Hp * isz(x.dtype) + Hp * Op * isz(wt.dtype)
                        + Op * isz(bp.dtype) + Bp * Op * isz(out_dtype)),
    )

    y_pad = pl.pallas_call(
        kernel,
        out_shape=jax.ShapeDtypeStruct((Bp, Op), out_dtype),
        grid_spec=pltpu.PrefetchScalarGridSpec(
            num_scalar_prefetch=0,
            grid=grid,
            in_specs=[
                pl.BlockSpec((tm, tk), lambda i, j, k: (i, k)),   # x
                pl.BlockSpec((tk, tn), lambda i, j, k: (k, j)),   # W^T (H, O)
                pl.BlockSpec((1, tn), lambda i, j, k: (0, j)),    # bias
            ],
            out_specs=pl.BlockSpec((tm, tn), lambda i, j, k: (i, j)),
            scratch_shapes=scratch,
        ),
        compiler_params=pltpu.CompilerParams(
            # With tm sized so the i axis is 1 for typical head shapes, the
            # megacore split lands on j (disjoint W column blocks on v7x).
            dimension_semantics=("parallel", "parallel", "arbitrary"),
            vmem_limit_bytes=vmem_limit,
        ),
        cost_estimate=cost,
    )(x, wt, bp)

    if (Bp, Op) != (B, O):
        y_pad = y_pad[:B, :O]
    return y_pad


# Convenience: build a LastLayer-equivalent forward closure.
def make_last_layer(w, b, *, compute_dtype=jnp.bfloat16):
    params = prepare_last_layer(w, b, compute_dtype=compute_dtype)
    return functools.partial(last_layer_forward, params=params)


# ----------------------------------------------------------------------------
# Self-test
# ----------------------------------------------------------------------------
if __name__ == "__main__":
    key = jax.random.PRNGKey(0)
    k1, k2, k3, k4, k5, k6 = jax.random.split(key, 6)

    # --- Case 1: the module's toy shape (batch=8, num_hidden=32, num_outputs=16)
    #     -> goes through the small-problem fallback (f32 weights, exact path).
    B, H, O = 8, 32, 16
    x = jax.random.normal(k1, (B, H), dtype=jnp.float32)
    bound = 1.0 / jnp.sqrt(H)
    w = jax.random.uniform(k2, (O, H), minval=-bound, maxval=bound,
                           dtype=jnp.float32)
    b = jax.random.uniform(k3, (O,), minval=-bound, maxval=bound,
                           dtype=jnp.float32)

    params_f32 = prepare_last_layer(w, b, compute_dtype=None)
    y = jax.block_until_ready(last_layer_forward(x, params_f32))
    y_ref = x @ w.T + b
    assert y.shape == (B, O)
    assert jnp.allclose(y, y_ref, atol=1e-4, rtol=1e-4), "case 1 mismatch"

    # --- Case 2: multi-tile Pallas path, f32 weights (exercises the kernel,
    #     resident-batch tiling, bias seeding, f32 in-place accumulation).
    B2, H2, O2 = 256, 1024, 512
    x2 = jax.random.normal(k4, (B2, H2), dtype=jnp.float32)
    bound2 = 1.0 / jnp.sqrt(H2)
    w2 = jax.random.uniform(k5, (O2, H2), minval=-bound2, maxval=bound2,
                            dtype=jnp.float32)
    b2 = jax.random.uniform(k6, (O2,), minval=-bound2, maxval=bound2,
                            dtype=jnp.float32)

    params2_f32 = prepare_last_layer(w2, b2, compute_dtype=None)
    y2 = jax.block_until_ready(last_layer_forward(x2, params2_f32))
    y2_ref = x2 @ w2.T + b2
    assert y2.shape == (B2, O2)
    assert jnp.allclose(y2, y2_ref, atol=1e-3, rtol=1e-3), "case 2 mismatch"

    # --- Case 3: same shapes, default bf16 weight path (persistent bf16 cast,
    #     in-kernel x cast, f32 accumulation). Looser tolerance for bf16.
    fwd_bf16 = make_last_layer(w2, b2)          # compute_dtype=bf16 default
    y3 = jax.block_until_ready(fwd_bf16(x2))
    assert y3.shape == (B2, O2)
    assert jnp.allclose(y3.astype(jnp.float32), y2_ref,
                        atol=3e-2, rtol=3e-2), "case 3 (bf16) mismatch"

    print("KERNEL_OK")
</pallas_src>

<mosaic_0001>
module attributes {stable_mosaic.version = 11 : i64} {
  func.func @_linear_kernel_f32out(%arg0: i32, %arg1: i32, %arg2: i32, %arg3: memref<256x1024xf32, #tpu.memory_space<vmem>>, %arg4: memref<1024x512xf32, #tpu.memory_space<vmem>>, %arg5: memref<1x512xf32, #tpu.memory_space<vmem>>, %arg6: memref<256x512xf32, #tpu.memory_space<vmem>>) attributes {dimension_semantics = [#tpu.dimension_semantics<parallel>, #tpu.dimension_semantics<parallel>, #tpu.dimension_semantics<arbitrary>], iteration_bounds = array<i64: 1, 1, 1>, scalar_prefetch = 0 : i64, scratch_operands = 0 : i64, tpu.core_type = #tpu.core_type<tc>, window_params = [{transform_indices = @transform_0, window_bounds = array<i64: 256, 1024>}, {transform_indices = @transform_1, window_bounds = array<i64: 1024, 512>}, {transform_indices = @transform_2, window_bounds = array<i64: 1, 512>}, {transform_indices = @transform_3, window_bounds = array<i64: 256, 512>}]} {
    %c0_i32 = arith.constant 0 : i32
    %0 = arith.cmpi eq, %arg2, %c0_i32 : i32
    %1 = arith.extui %0 : i1 to i32
    %c0_i32_0 = arith.constant 0 : i32
    %2 = arith.cmpi ne, %1, %c0_i32_0 : i32
    scf.if %2 {
      %c0_8 = arith.constant 0 : index
      %c0_9 = arith.constant 0 : index
      %9 = vector.load %arg5[%c0_8, %c0_9] : memref<1x512xf32, #tpu.memory_space<vmem>>, vector<1x512xf32>
      %10 = vector.shape_cast %9 : vector<1x512xf32> to vector<1x512xf32>
      %11 = vector.broadcast %10 : vector<1x512xf32> to vector<256x512xf32>
      %c0_10 = arith.constant 0 : index
      %c0_11 = arith.constant 0 : index
      %12 = vector.load %arg6[%c0_10, %c0_11] : memref<256x512xf32, #tpu.memory_space<vmem>>, vector<256x512xf32>
      tpu.vector_store %arg6[%c0_10, %c0_11], %11 {strides = array<i32>} : memref<256x512xf32, #tpu.memory_space<vmem>>, vector<256x512xf32>,
    } else {
    }
    %c0 = arith.constant 0 : index
    %c0_1 = arith.constant 0 : index
    %3 = vector.load %arg3[%c0, %c0_1] : memref<256x1024xf32, #tpu.memory_space<vmem>>, vector<256x1024xf32>
    %c0_2 = arith.constant 0 : index
    %c0_3 = arith.constant 0 : index
    %4 = vector.load %arg6[%c0_2, %c0_3] : memref<256x512xf32, #tpu.memory_space<vmem>>, vector<256x512xf32>
    %c0_4 = arith.constant 0 : index
    %c0_5 = arith.constant 0 : index
    %5 = vector.load %arg4[%c0_4, %c0_5] : memref<1024x512xf32, #tpu.memory_space<vmem>>, vector<1024x512xf32>
    %cst = arith.constant dense<0.000000e+00> : vector<256x512xf32>
    %6 = tpu.matmul %3, %5, %cst {dimension_numbers = #tpu.dot_dimension_numbers<[1], [0], [0], [1], [0, 0, 1, 1], [], []>} : vector<256x1024xf32>, vector<1024x512xf32>, vector<256x512xf32> -> vector<256x512xf32>
    %7 = arith.addf %4, %6 : vector<256x512xf32>
    %c0_6 = arith.constant 0 : index
    %c0_7 = arith.constant 0 : index
    %8 = vector.load %arg6[%c0_6, %c0_7] : memref<256x512xf32, #tpu.memory_space<vmem>>, vector<256x512xf32>
    tpu.vector_store %arg6[%c0_6, %c0_7], %7 {strides = array<i32>} : memref<256x512xf32, #tpu.memory_space<vmem>>, vector<256x512xf32>,
    return
  }
  func.func @transform_0(%arg0: i32, %arg1: i32, %arg2: i32) -> (i32, i32) {
    %c0_i32 = arith.constant 0 : i32
    return %arg0, %arg2 : i32, i32
  }
  func.func @transform_1(%arg0: i32, %arg1: i32, %arg2: i32) -> (i32, i32) {
    %c0_i32 = arith.constant 0 : i32
    return %arg2, %arg1 : i32, i32
  }
  func.func @transform_2(%arg0: i32, %arg1: i32, %arg2: i32) -> (i32, i32) {
    %c0_i32 = arith.constant 0 : i32
    %c0_i32_0 = arith.constant 0 : i32
    return %c0_i32, %arg1 : i32, i32
  }
  func.func @transform_3(%arg0: i32, %arg1: i32, %arg2: i32) -> (i32, i32) {
    %c0_i32 = arith.constant 0 : i32
    return %arg0, %arg1 : i32, i32
  }
}

</mosaic_0001>

<llo_original>
// kernel: tpu_custom_call.1
$region0: #{tpu_custom_call.1}
  #allocation0 [shape = 'u32[]', space=smem, size = 0x4, offset = 0x4, fixed_abs, tag = 'smem constant byte address 0x4 - core index']
  #allocation1 [shape = 'u32[144,128]{1,0:T(1,128)}', space=vmem, size = 0x12000, scoped, tag = 'internal scratch']
  %s0 = inlined_call_operand.hbm [shape: f32[256,1024], index: 0, kind: input, shape index: {}]
  %s1 = inlined_call_operand.hbm [shape: f32[1024,512], index: 1, kind: input, shape index: {}]
  %s2 = inlined_call_operand.hbm [shape: f32[1,512], index: 2, kind: input, shape index: {}]
  %s3 = inlined_call_operand.hbm [shape: f32[256,512], index: 3, kind: output, shape index: {}]
  %s4 = sld [smem:[#allocation0]]
  $region38: #{tpu_custom_call.1} parent=0
    _
  %s6 = ssub.s32 1, %s4
  %s7 = scalar_select 0, %s6, %s4
  $region1: #{tpu_custom_call.1} parent=0
    #allocation2 [shape = 'u8[1048576]{0}', space=vmem, size = 0x100000, scoped, tag = 'input window, operand 0, single buffered']
    #allocation3 [shape = 's32[1]{0}', space=sflag, size = 0x4, scoped, tag = 'scoped memory for tpu_custom_call.1']
    #allocation4 [shape = 's32[1]{0}', space=sflag, size = 0x4, scoped, tag = 'scoped memory for tpu_custom_call.1']
    #allocation5 [shape = 'u8[2097152]{0}', space=vmem, size = 0x200000, scoped, tag = 'input window, operand 1, single buffered']
    #allocation6 [shape = 's32[1]{0}', space=sflag, size = 0x4, scoped, tag = 'scoped memory for tpu_custom_call.1']
    #allocation7 [shape = 'u8[2048]{0}', space=vmem, size = 0x800, scoped, tag = 'input window, operand 2, single buffered']
    #allocation8 [shape = 'u8[524288]{0}', space=vmem, size = 0x80000, scoped, tag = 'output window, operand 0, single buffered']
    %8 = vsyncpa [#allocation3], 0
    %9 = vsyncpa [#allocation6], 0
    %10 = vsyncpa [#allocation4], 0
    // Predicated region
    $region2: #{tpu_custom_call.1} parent=1 // pred_check
      _
    $region3: #{tpu_custom_call.1} parent=1 // pred_check_branch
      %12 = sbr.rel (0) target = $region5
    $region4: #{tpu_custom_call.1} parent=1 // pred_region
      %s14 = ssub.s32 32768, 32768
      %15 = vsyncadd [#allocation3], %s14
      %s16 = sshll.u32 [#allocation2], 4
      %s17 = int_to_ptr.vmem [resolvable:$true] %s16
      %22 = dma.hbm_to_vmem [thread:$0]  %s0, 32768, %s17, [#allocation3], 1024, 1024, 64
    $region5: #{tpu_custom_call.1} parent=1 // pred_fallthru
      _
    // Predicated region
    $region6: #{tpu_custom_call.1} parent=1 // pred_check
      _
    $region7: #{tpu_custom_call.1} parent=1 // pred_check_branch
      %24 = sbr.rel (0) target = $region9
    $region8: #{tpu_custom_call.1} parent=1 // pred_region
      %s26 = ssub.s32 65536, 65536
      %27 = vsyncadd [#allocation6], %s26
      %s28 = sshll.u32 [#allocation5], 4
      %s29 = int_to_ptr.vmem [resolvable:$true] %s28
      %34 = dma.hbm_to_vmem [thread:$0]  %s1, 65536, %s29, [#allocation6], 512, 512, 32
    $region9: #{tpu_custom_call.1} parent=1 // pred_fallthru
      _
    // Predicated region
    $region10: #{tpu_custom_call.1} parent=1 // pred_check
      _
    $region11: #{tpu_custom_call.1} parent=1 // pred_check_branch
      %36 = sbr.rel (0) target = $region13
    $region12: #{tpu_custom_call.1} parent=1 // pred_region
      %s38 = ssub.s32 64, 64
      %39 = vsyncadd [#allocation6], %s38
      %s41 = sshll.u32 [#allocation7], 4
      %s42 = int_to_ptr.vmem [resolvable:$true] %s41
      %44 = dma.hbm_to_vmem [thread:$0]  %s2, 64, %s42, [#allocation6]
    $region13: #{tpu_custom_call.1} parent=1 // pred_fallthru
      _
    // Predicated region
    $region14: #{tpu_custom_call.1} parent=1 // pred_check
      _
    $region15: #{tpu_custom_call.1} parent=1 // pred_check_branch
      %46 = sbr.rel (0) target = $region17
    $region16: #{tpu_custom_call.1} parent=1 // pred_region
      %47 = dma.done [#allocation3], 32768
    $region17: #{tpu_custom_call.1} parent=1 // pred_fallthru
      _
    // Predicated region
    $region18: #{tpu_custom_call.1} parent=1 // pred_check
      _
    $region19: #{tpu_custom_call.1} parent=1 // pred_check_branch
      %49 = sbr.rel (0) target = $region21
    $region20: #{tpu_custom_call.1} parent=1 // pred_region
      %50 = dma.done [#allocation6], 65536
    $region21: #{tpu_custom_call.1} parent=1 // pred_fallthru
      _
    // Predicated region
    $region22: #{tpu_custom_call.1} parent=1 // pred_check
      _
    $region23: #{tpu_custom_call.1} parent=1 // pred_check_branch
      %52 = sbr.rel (0) target = $region25
    $region24: #{tpu_custom_call.1} parent=1 // pred_region
      %53 = dma.done [#allocation6], 64
    $region25: #{tpu_custom_call.1} parent=1 // pred_fallthru
      _
    %p54 = scmp.eq.s32.totalorder 0, 0
    // Predicated region
    $region26: #{tpu_custom_call.1} parent=1 // pred_check
      %p55 = pneg %p54
    $region27: #{tpu_custom_call.1} parent=1 // pred_check_branch
      %57 = sbr.rel (%p55) target = $region29
    $region28: #{tpu_custom_call.1} parent=1 // pred_region
      %v58 = vld [vmem:[#allocation7] sm:$0xf]
      %v60 = vlaneseq
      %v61 = vshrl.u32 %v60, 7
      %v62 = vsub.s32 0, %v61
      %v63 = vrot.slane %v58, %v62
      %v64 = vlaneseq
      %v65 = vshrl.u32 %v64, 7
      %v66 = vsub.s32 1, %v65
      %v67 = vrot.slane %v58, %v66
      %v68 = vlaneseq
      %v69 = vshrl.u32 %v68, 7
      %v70 = vsub.s32 2, %v69
      %v71 = vrot.slane %v58, %v70
      %v72 = vlaneseq
      %v73 = vshrl.u32 %v72, 7
      %v74 = vsub.s32 3, %v73
      %v75 = vrot.slane %v58, %v74
      %80 = vst [vmem:[#allocation8] sm:$0xff] %v63
      %81 = vst [vmem:[#allocation8 + $0x8] sm:$0xff] %v67
      %82 = vst [vmem:[#allocation8 + $0x10] sm:$0xff] %v71
      %83 = vst [vmem:[#allocation8 + $0x18] sm:$0xff] %v75
      %84 = vst [vmem:[#allocation8 + $0x20] sm:$0xff] %v63
      %85 = vst [vmem:[#allocation8 + $0x28] sm:$0xff] %v67
      %86 = vst [vmem:[#allocation8 + $0x30] sm:$0xff] %v71
      %87 = vst [vmem:[#allocation8 + $0x38] sm:$0xff] %v75
      %88 = vst [vmem:[#allocation8 + $0x40] sm:$0xff] %v63
      %89 = vst [vmem:[#allocation8 + $0x48] sm:$0xff] %v67
      %90 = vst [vmem:[#allocation8 + $0x50] sm:$0xff] %v71
      %91 = vst [vmem:[#allocation8 + $0x58] sm:$0xff] %v75
      %92 = vst [vmem:[#allocation8 + $0x60] sm:$0xff] %v63
      %93 = vst [vmem:[#allocation8 + $0x68] sm:$0xff] %v67
      %94 = vst [vmem:[#allocation8 + $0x70] sm:$0xff] %v71
      %95 = vst [vmem:[#allocation8 + $0x78] sm:$0xff] %v75
      %96 = vst [vmem:[#allocation8 + $0x80] sm:$0xff] %v63
      %97 = vst [vmem:[#allocation8 + $0x88] sm:$0xff] %v67
      %98 = vst [vmem:[#allocation8 + $0x90] sm:$0xff] %v71
      %99 = vst [vmem:[#allocation8 + $0x98] sm:$0xff] %v75
      %100 = vst [vmem:[#allocation8 + $0xa0] sm:$0xff] %v63
      %101 = vst [vmem:[#allocation8 + $0xa8] sm:$0xff] %v67
      %102 = vst [vmem:[#allocation8 + $0xb0] sm:$0xff] %v71
      %103 = vst [vmem:[#allocation8 + $0xb8] sm:$0xff] %v75
      %104 = vst [vmem:[#allocation8 + $0xc0] sm:$0xff] %v63
      %105 = vst [vmem:[#allocation8 + $0xc8] sm:$0xff] %v67
      %106 = vst [vmem:[#allocation8 + $0xd0] sm:$0xff] %v71
      %107 = vst [vmem:[#allocation8 + $0xd8] sm:$0xff] %v75
      %108 = vst [vmem:[#allocation8 + $0xe0] sm:$0xff] %v63
      %109 = vst [vmem:[#allocation8 + $0xe8] sm:$0xff] %v67
      %110 = vst [vmem:[#allocation8 + $0xf0] sm:$0xff] %v71
      %111 = vst [vmem:[#allocation8 + $0xf8] sm:$0xff] %v75
      %112 = vst [vmem:[#allocation8 + $0x100] sm:$0xff] %v63
      %113 = vst [vmem:[#allocation8 + $0x108] sm:$0xff] %v67
      %114 = vst [vmem:[#allocation8 + $0x110] sm:$0xff] %v71
      %115 = vst [vmem:[#allocation8 + $0x118] sm:$0xff] %v75
      %116 = vst [vmem:[#allocation8 + $0x120] sm:$0xff] %v63
      %117 = vst [vmem:[#allocation8 + $0x128] sm:$0xff] %v67
      %118 = vst [vmem:[#allocation8 + $0x130] sm:$0xff] %v71
      %119 = vst [vmem:[#allocation8 + $0x138] sm:$0xff] %v75
      %120 = vst [vmem:[#allocation8 + $0x140] sm:$0xff] %v63
      %121 = vst [vmem:[#allocation8 + $0x148] sm:$0xff] %v67
      %122 = vst [vmem:[#allocation8 + $0x150] sm:$0xff] %v71
      %123 = vst [vmem:[#allocation8 + $0x158] sm:$0xff] %v75
      %124 = vst [vmem:[#allocation8 + $0x160] sm:$0xff] %v63
      %125 = vst [vmem:[#allocation8 + $0x168] sm:$0xff] %v67
      %126 = vst [vmem:[#allocation8 + $0x170] sm:$0xff] %v71
      %127 = vst [vmem:[#allocation8 + $0x178] sm:$0xff] %v75
      %128 = vst [vmem:[#allocation8 + $0x180] sm:$0xff] %v63
      %129 = vst [vmem:[#allocation8 + $0x188] sm:$0xff] %v67
      %130 = vst [vmem:[#allocation8 + $0x190] sm:$0xff] %v71
      %131 = vst [vmem:[#allocation8 + $0x198] sm:$0xff] %v75
      %132 = vst [vmem:[#allocation8 + $0x1a0] sm:$0xff] %v63
      %133 = vst [vmem:[#allocation8 + $0x1a8] sm:$0xff] %v67
      %134 = vst [vmem:[#allocation8 + $0x1b0] sm:$0xff] %v71
      %135 = vst [vmem:[#allocation8 + $0x1b8] sm:$0xff] %v75
      %136 = vst [vmem:[#allocation8 + $0x1c0] sm:$0xff] %v63
      %137 = vst [vmem:[#allocation8 + $0x1c8] sm:$0xff] %v67
      %138 = vst [vmem:[#allocation8 + $0x1d0] sm:$0xff] %v71
      %139 = vst [vmem:[#allocation8 + $0x1d8] sm:$0xff] %v75
      %140 = vst [vmem:[#allocation8 + $0x1e0] sm:$0xff] %v63
      %141 = vst [vmem:[#allocation8 + $0x1e8] sm:$0xff] %v67
      %142 = vst [vmem:[#allocation8 + $0x1f0] sm:$0xff] %v71
      %143 = vst [vmem:[#allocation8 + $0x1f8] sm:$0xff] %v75
      %144 = vst [vmem:[#allocation8 + $0x200] sm:$0xff] %v63
      %145 = vst [vmem:[#allocation8 + $0x208] sm:$0xff] %v67
      %146 = vst [vmem:[#allocation8 + $0x210] sm:$0xff] %v71
      %147 = vst [vmem:[#allocation8 + $0x218] sm:$0xff] %v75
      %148 = vst [vmem:[#allocation8 + $0x220] sm:$0xff] %v63
      %149 = vst [vmem:[#allocation8 + $0x228] sm:$0xff] %v67
      %150 = vst [vmem:[#allocation8 + $0x230] sm:$0xff] %v71
      %151 = vst [vmem:[#allocation8 + $0x238] sm:$0xff] %v75
      %152 = vst [vmem:[#allocation8 + $0x240] sm:$0xff] %v63
      %153 = vst [vmem:[#allocation8 + $0x248] sm:$0xff] %v67
      %154 = vst [vmem:[#allocation8 + $0x250] sm:$0xff] %v71
      %155 = vst [vmem:[#allocation8 + $0x258] sm:$0xff] %v75
      %156 = vst [vmem:[#allocation8 + $0x260] sm:$0xff] %v63
      %157 = vst [vmem:[#allocation8 + $0x268] sm:$0xff] %v67
      %158 = vst [vmem:[#allocation8 + $0x270] sm:$0xff] %v71
      %159 = vst [vmem:[#allocation8 + $0x278] sm:$0xff] %v75
      %160 = vst [vmem:[#allocation8 + $0x280] sm:$0xff] %v63
      %161 = vst [vmem:[#allocation8 + $0x288] sm:$0xff] %v67
      %162 = vst [vmem:[#allocation8 + $0x290] sm:$0xff] %v71
      %163 = vst [vmem:[#allocation8 + $0x298] sm:$0xff] %v75
      %164 = vst [vmem:[#allocation8 + $0x2a0] sm:$0xff] %v63
      %165 = vst [vmem:[#allocation8 + $0x2a8] sm:$0xff] %v67
      %166 = vst [vmem:[#allocation8 + $0x2b0] sm:$0xff] %v71
      %167 = vst [vmem:[#allocation8 + $0x2b8] sm:$0xff] %v75
      %168 = vst [vmem:[#allocation8 + $0x2c0] sm:$0xff] %v63
      %169 = vst [vmem:[#allocation8 + $0x2c8] sm:$0xff] %v67
      %170 = vst [vmem:[#allocation8 + $0x2d0] sm:$0xff] %v71
      %171 = vst [vmem:[#allocation8 + $0x2d8] sm:$0xff] %v75
      %172 = vst [vmem:[#allocation8 + $0x2e0] sm:$0xff] %v63
      %173 = vst [vmem:[#allocation8 + $0x2e8] sm:$0xff] %v67
      %174 = vst [vmem:[#allocation8 + $0x2f0] sm:$0xff] %v71
      %175 = vst [vmem:[#allocation8 + $0x2f8] sm:$0xff] %v75
      %176 = vst [vmem:[#allocation8 + $0x300] sm:$0xff] %v63
      %177 = vst [vmem:[#allocation8 + $0x308] sm:$0xff] %v67
      %178 = vst [vmem:[#allocation8 + $0x310] sm:$0xff] %v71
      %179 = vst [vmem:[#allocation8 + $0x318] sm:$0xff] %v75
      %180 = vst [vmem:[#allocation8 + $0x320] sm:$0xff] %v63
      %181 = vst [vmem:[#allocation8 + $0x328] sm:$0xff] %v67
      %182 = vst [vmem:[#allocation8 + $0x330] sm:$0xff] %v71
      %183 = vst [vmem:[#allocation8 + $0x338] sm:$0xff] %v75
      %184 = vst [vmem:[#allocation8 + $0x340] sm:$0xff] %v63
      %185 = vst [vmem:[#allocation8 + $0x348] sm:$0xff] %v67
      %186 = vst [vmem:[#allocation8 + $0x350] sm:$0xff] %v71
      %187 = vst [vmem:[#allocation8 + $0x358] sm:$0xff] %v75
      %188 = vst [vmem:[#allocation8 + $0x360] sm:$0xff] %v63
      %189 = vst [vmem:[#allocation8 + $0x368] sm:$0xff] %v67
      %190 = vst [vmem:[#allocation8 + $0x370] sm:$0xff] %v71
      %191 = vst [vmem:[#allocation8 + $0x378] sm:$0xff] %v75
      %192 = vst [vmem:[#allocation8 + $0x380] sm:$0xff] %v63
      %193 = vst [vmem:[#allocation8 + $0x388] sm:$0xff] %v67
      %194 = vst [vmem:[#allocation8 + $0x390] sm:$0xff] %v71
      %195 = vst [vmem:[#allocation8 + $0x398] sm:$0xff] %v75
      %196 = vst [vmem:[#allocation8 + $0x3a0] sm:$0xff] %v63
      %197 = vst [vmem:[#allocation8 + $0x3a8] sm:$0xff] %v67
      %198 = vst [vmem:[#allocation8 + $0x3b0] sm:$0xff] %v71
      %199 = vst [vmem:[#allocation8 + $0x3b8] sm:$0xff] %v75
      %200 = vst [vmem:[#allocation8 + $0x3c0] sm:$0xff] %v63
      %201 = vst [vmem:[#allocation8 + $0x3c8] sm:$0xff] %v67
      %202 = vst [vmem:[#allocation8 + $0x3d0] sm:$0xff] %v71
      %203 = vst [vmem:[#allocation8 + $0x3d8] sm:$0xff] %v75
      %204 = vst [vmem:[#allocation8 + $0x3e0] sm:$0xff] %v63
      %205 = vst [vmem:[#allocation8 + $0x3e8] sm:$0xff] %v67
      %206 = vst [vmem:[#allocation8 + $0x3f0] sm:$0xff] %v71
      %207 = vst [vmem:[#allocation8 + $0x3f8] sm:$0xff] %v75
    $region29: #{tpu_custom_call.1} parent=1 // pred_fallthru
      _
    %v208 = vld [vmem:[#allocation2] sm:$0xff]
    %v209 = vld [vmem:[#allocation2 + $0x8] sm:$0xff]
    %v210 = vld [vmem:[#allocation2 + $0x10] sm:$0xff]
    %v211 = vld [vmem:[#allocation2 + $0x18] sm:$0xff]
    %v212 = vld [vmem:[#allocation2 + $0x20] sm:$0xff]
    %v213 = vld [vmem:[#allocation2 + $0x28] sm:$0xff]
    %v214 = vld [vmem:[#allocation2 + $0x30] sm:$0xff]
    %v215 = vld [vmem:[#allocation2 + $0x38] sm:$0xff]
    %v216 = vld [vmem:[#allocation2 + $0x40] sm:$0xff]
    %v217 = vld [vmem:[#allocation2 + $0x48] sm:$0xff]
    %v218 = vld [vmem:[#allocation2 + $0x50] sm:$0xff]
    %v219 = vld [vmem:[#allocation2 + $0x58] sm:$0xff]
    %v220 = vld [vmem:[#allocation2 + $0x60] sm:$0xff]
    %v221 = vld [vmem:[#allocation2 + $0x68] sm:$0xff]
    %v222 = vld [vmem:[#allocation2 + $0x70] sm:$0xff]
    %v223 = vld [vmem:[#allocation2 + $0x78] sm:$0xff]
    %v224 = vld [vmem:[#allocation2 + $0x80] sm:$0xff]
    %v225 = vld [vmem:[#allocation2 + $0x88] sm:$0xff]
    %v226 = vld [vmem:[#allocation2 + $0x90] sm:$0xff]
    %v227 = vld [vmem:[#allocation2 + $0x98] sm:$0xff]
    %v228 = vld [vmem:[#allocation2 + $0xa0] sm:$0xff]
    %v229 = vld [vmem:[#allocation2 + $0xa8] sm:$0xff]
    %v230 = vld [vmem:[#allocation2 + $0xb0] sm:$0xff]
    %v231 = vld [vmem:[#allocation2 + $0xb8] sm:$0xff]
    %v232 = vld [vmem:[#allocation2 + $0xc0] sm:$0xff]
    %v233 = vld [vmem:[#allocation2 + $0xc8] sm:$0xff]
    %v234 = vld [vmem:[#allocation2 + $0xd0] sm:$0xff]
    %v235 = vld [vmem:[#allocation2 + $0xd8] sm:$0xff]
    %v236 = vld [vmem:[#allocation2 + $0xe0] sm:$0xff]
    %v237 = vld [vmem:[#allocation2 + $0xe8] sm:$0xff]
    %v238 = vld [vmem:[#allocation2 + $0xf0] sm:$0xff]
    %v239 = vld [vmem:[#allocation2 + $0xf8] sm:$0xff]
    %v240 = vld [vmem:[#allocation2 + $0x100] sm:$0xff]
    %v241 = vld [vmem:[#allocation2 + $0x108] sm:$0xff]
    %v242 = vld [vmem:[#allocation2 + $0x110] sm:$0xff]
    %v243 = vld [vmem:[#allocation2 + $0x118] sm:$0xff]
    %v244 = vld [vmem:[#allocation2 + $0x120] sm:$0xff]
    %v245 = vld [vmem:[#allocation2 + $0x128] sm:$0xff]
    %v246 = vld [vmem:[#allocation2 + $0x130] sm:$0xff]
    %v247 = vld [vmem:[#allocation2 + $0x138] sm:$0xff]
    %v248 = vld [vmem:[#allocation2 + $0x140] sm:$0xff]
    %v249 = vld [vmem:[#allocation2 + $0x148] sm:$0xff]
    %v250 = vld [vmem:[#allocation2 + $0x150] sm:$0xff]
    %v251 = vld [vmem:[#allocation2 + $0x158] sm:$0xff]
    %v252 = vld [vmem:[#allocation2 + $0x160] sm:$0xff]
    %v253 = vld [vmem:[#allocation2 + $0x168] sm:$0xff]
    %v254 = vld [vmem:[#allocation2 + $0x170] sm:$0xff]
    %v255 = vld [vmem:[#allocation2 + $0x178] sm:$0xff]
    %v256 = vld [vmem:[#allocation2 + $0x180] sm:$0xff]
    %v257 = vld [vmem:[#allocation2 + $0x188] sm:$0xff]
    %v258 = vld [vmem:[#allocation2 + $0x190] sm:$0xff]
    %v259 = vld [vmem:[#allocation2 + $0x198] sm:$0xff]
    %v260 = vld [vmem:[#allocation2 + $0x1a0] sm:$0xff]
    %v261 = vld [vmem:[#allocation2 + $0x1a8] sm:$0xff]
    %v262 = vld [vmem:[#allocation2 + $0x1b0] sm:$0xff]
    %v263 = vld [vmem:[#allocation2 + $0x1b8] sm:$0xff]
    %v264 = vld [vmem:[#allocation2 + $0x1c0] sm:$0xff]
    %v265 = vld [vmem:[#allocation2 + $0x1c8] sm:$0xff]
    %v266 = vld [vmem:[#allocation2 + $0x1d0] sm:$0xff]
    %v267 = vld [vmem:[#allocation2 + $0x1d8] sm:$0xff]
    %v268 = vld [vmem:[#allocation2 + $0x1e0] sm:$0xff]
    %v269 = vld [vmem:[#allocation2 + $0x1e8] sm:$0xff]
    %v270 = vld [vmem:[#allocation2 + $0x1f0] sm:$0xff]
    %v271 = vld [vmem:[#allocation2 + $0x1f8] sm:$0xff]
    %v272 = vld [vmem:[#allocation2 + $0x200] sm:$0xff]
    %v273 = vld [vmem:[#allocation2 + $0x208] sm:$0xff]
    %v274 = vld [vmem:[#allocation2 + $0x210] sm:$0xff]
    %v275 = vld [vmem:[#allocation2 + $0x218] sm:$0xff]
    %v276 = vld [vmem:[#allocation2 + $0x220] sm:$0xff]
    %v277 = vld [vmem:[#allocation2 + $0x228] sm:$0xff]
    %v278 = vld [vmem:[#allocation2 + $0x230] sm:$0xff]
    %v279 = vld [vmem:[#allocation2 + $0x238] sm:$0xff]
    %v280 = vld [vmem:[#allocation2 + $0x240] sm:$0xff]
    %v281 = vld [vmem:[#allocation2 + $0x248] sm:$0xff]
    %v282 = vld [vmem:[#allocation2 + $0x250] sm:$0xff]
    %v283 = vld [vmem:[#allocation2 + $0x258] sm:$0xff]
    %v284 = vld [vmem:[#allocation2 + $0x260] sm:$0xff]
    %v285 = vld [vmem:[#allocation2 + $0x268] sm:$0xff]
    %v286 = vld [vmem:[#allocation2 + $0x270] sm:$0xff]
    %v287 = vld [vmem:[#allocation2 + $0x278] sm:$0xff]
    %v288 = vld [vmem:[#allocation2 + $0x280] sm:$0xff]
    %v289 = vld [vmem:[#allocation2 + $0x288] sm:$0xff]
    %v290 = vld [vmem:[#allocation2 + $0x290] sm:$0xff]
    %v291 = vld [vmem:[#allocation2 + $0x298] sm:$0xff]
    %v292 = vld [vmem:[#allocation2 + $0x2a0] sm:$0xff]
    %v293 = vld [vmem:[#allocation2 + $0x2a8] sm:$0xff]
    %v294 = vld [vmem:[#allocation2 + $0x2b0] sm:$0xff]
    %v295 = vld [vmem:[#allocation2 + $0x2b8] sm:$0xff]
    %v296 = vld [vmem:[#allocation2 + $0x2c0] sm:$0xff]
    %v297 = vld [vmem:[#allocation2 + $0x2c8] sm:$0xff]
    %v298 = vld [vmem:[#allocation2 + $0x2d0] sm:$0xff]
    %v299 = vld [vmem:[#allocation2 + $0x2d8] sm:$0xff]
    %v300 = vld [vmem:[#allocation2 + $0x2e0] sm:$0xff]
    %v301 = vld [vmem:[#allocation2 + $0x2e8] sm:$0xff]
    %v302 = vld [vmem:[#allocation2 + $0x2f0] sm:$0xff]
    %v303 = vld [vmem:[#allocation2 + $0x2f8] sm:$0xff]
    %v304 = vld [vmem:[#allocation2 + $0x300] sm:$0xff]
    %v305 = vld [vmem:[#allocation2 + $0x308] sm:$0xff]
    %v306 = vld [vmem:[#allocation2 + $0x310] sm:$0xff]
    %v307 = vld [vmem:[#allocation2 + $0x318] sm:$0xff]
    %v308 = vld [vmem:[#allocation2 + $0x320] sm:$0xff]
    %v309 = vld [vmem:[#allocation2 + $0x328] sm:$0xff]
    %v310 = vld [vmem:[#allocation2 + $0x330] sm:$0xff]
    %v311 = vld [vmem:[#allocation2 + $0x338] sm:$0xff]
    %v312 = vld [vmem:[#allocation2 + $0x340] sm:$0xff]
    %v313 = vld [vmem:[#allocation2 + $0x348] sm:$0xff]
    %v314 = vld [vmem:[#allocation2 + $0x350] sm:$0xff]
    %v315 = vld [vmem:[#allocation2 + $0x358] sm:$0xff]
    %v316 = vld [vmem:[#allocation2 + $0x360] sm:$0xff]
    %v317 = vld [vmem:[#allocation2 + $0x368] sm:$0xff]
    %v318 = vld [vmem:[#allocation2 + $0x370] sm:$0xff]
    %v319 = vld [vmem:[#allocation2 + $0x378] sm:$0xff]
    %v320 = vld [vmem:[#allocation2 + $0x380] sm:$0xff]
    %v321 = vld [vmem:[#allocation2 + $0x388] sm:$0xff]
    %v322 = vld [vmem:[#allocation2 + $0x390] sm:$0xff]
    %v323 = vld [vmem:[#allocation2 + $0x398] sm:$0xff]
    %v324 = vld [vmem:[#allocation2 + $0x3a0] sm:$0xff]
    %v325 = vld [vmem:[#allocation2 + $0x3a8] sm:$0xff]
    %v326 = vld [vmem:[#allocation2 + $0x3b0] sm:$0xff]
    %v327 = vld [vmem:[#allocation2 + $0x3b8] sm:$0xff]
    %v328 = vld [vmem:[#allocation2 + $0x3c0] sm:$0xff]
    %v329 = vld [vmem:[#allocation2 + $0x3c8] sm:$0xff]
    %v330 = vld [vmem:[#allocation2 + $0x3d0] sm:$0xff]
    %v331 = vld [vmem:[#allocation2 + $0x3d8] sm:$0xff]
    %v332 = vld [vmem:[#allocation2 + $0x3e0] sm:$0xff]
    %v333 = vld [vmem:[#allocation2 + $0x3e8] sm:$0xff]
    %v334 = vld [vmem:[#allocation2 + $0x3f0] sm:$0xff]
    %v335 = vld [vmem:[#allocation2 + $0x3f8] sm:$0xff]
    %v336 = vld [vmem:[#allocation2 + $0x400] sm:$0xff]
    %v337 = vld [vmem:[#allocation2 + $0x408] sm:$0xff]
    %v338 = vld [vmem:[#allocation2 + $0x410] sm:$0xff]
    %v339 = vld [vmem:[#allocation2 + $0x418] sm:$0xff]
    %v340 = vld [vmem:[#allocation2 + $0x420] sm:$0xff]
    %v341 = vld [vmem:[#allocation2 + $0x428] sm:$0xff]
    %v342 = vld [vmem:[#allocation2 + $0x430] sm:$0xff]
    %v343 = vld [vmem:[#allocation2 + $0x438] sm:$0xff]
    %v344 = vld [vmem:[#allocation2 + $0x440] sm:$0xff]
    %v345 = vld [vmem:[#allocation2 + $0x448] sm:$0xff]
    %v346 = vld [vmem:[#allocation2 + $0x450] sm:$0xff]
    %v347 = vld [vmem:[#allocation2 + $0x458] sm:$0xff]
    %v348 = vld [vmem:[#allocation2 + $0x460] sm:$0xff]
    %v349 = vld [vmem:[#allocation2 + $0x468] sm:$0xff]
    %v350 = vld [vmem:[#allocation2 + $0x470] sm:$0xff]
    %v351 = vld [vmem:[#allocation2 + $0x478] sm:$0xff]
    %v352 = vld [vmem:[#allocation2 + $0x480] sm:$0xff]
    %v353 = vld [vmem:[#allocation2 + $0x488] sm:$0xff]
    %v354 = vld [vmem:[#allocation2 + $0x490] sm:$0xff]
    %v355 = vld [vmem:[#allocation2 + $0x498] sm:$0xff]
    %v356 = vld [vmem:[#allocation2 + $0x4a0] sm:$0xff]
    %v357 = vld [vmem:[#allocation2 + $0x4a8] sm:$0xff]
    %v358 = vld [vmem:[#allocation2 + $0x4b0] sm:$0xff]
    %v359 = vld [vmem:[#allocation2 + $0x4b8] sm:$0xff]
    %v360 = vld [vmem:[#allocation2 + $0x4c0] sm:$0xff]
    %v361 = vld [vmem:[#allocation2 + $0x4c8] sm:$0xff]
    %v362 = vld [vmem:[#allocation2 + $0x4d0] sm:$0xff]
    %v363 = vld [vmem:[#allocation2 + $0x4d8] sm:$0xff]
    %v364 = vld [vmem:[#allocation2 + $0x4e0] sm:$0xff]
    %v365 = vld [vmem:[#allocation2 + $0x4e8] sm:$0xff]
    %v366 = vld [vmem:[#allocation2 + $0x4f0] sm:$0xff]
    %v367 = vld [vmem:[#allocation2 + $0x4f8] sm:$0xff]
    %v368 = vld [vmem:[#allocation2 + $0x500] sm:$0xff]
    %v369 = vld [vmem:[#allocation2 + $0x508] sm:$0xff]
    %v370 = vld [vmem:[#allocation2 + $0x510] sm:$0xff]
    %v371 = vld [vmem:[#allocation2 + $0x518] sm:$0xff]
    %v372 = vld [vmem:[#allocation2 + $0x520] sm:$0xff]
    %v373 = vld [vmem:[#allocation2 + $0x528] sm:$0xff]
    %v374 = vld [vmem:[#allocation2 + $0x530] sm:$0xff]
    %v375 = vld [vmem:[#allocation2 + $0x538] sm:$0xff]
    %v376 = vld [vmem:[#allocation2 + $0x540] sm:$0xff]
    %v377 = vld [vmem:[#allocation2 + $0x548] sm:$0xff]
    %v378 = vld [vmem:[#allocation2 + $0x550] sm:$0xff]
    %v379 = vld [vmem:[#allocation2 + $0x558] sm:$0xff]
    %v380 = vld [vmem:[#allocation2 + $0x560] sm:$0xff]
    %v381 = vld [vmem:[#allocation2 + $0x568] sm:$0xff]
    %v382 = vld [vmem:[#allocation2 + $0x570] sm:$0xff]
    %v383 = vld [vmem:[#allocation2 + $0x578] sm:$0xff]
    %v384 = vld [vmem:[#allocation2 + $0x580] sm:$0xff]
    %v385 = vld [vmem:[#allocation2 + $0x588] sm:$0xff]
    %v386 = vld [vmem:[#allocation2 + $0x590] sm:$0xff]
    %v387 = vld [vmem:[#allocation2 + $0x598] sm:$0xff]
    %v388 = vld [vmem:[#allocation2 + $0x5a0] sm:$0xff]
    %v389 = vld [vmem:[#allocation2 + $0x5a8] sm:$0xff]
    %v390 = vld [vmem:[#allocation2 + $0x5b0] sm:$0xff]
    %v391 = vld [vmem:[#allocation2 + $0x5b8] sm:$0xff]
    %v392 = vld [vmem:[#allocation2 + $0x5c0] sm:$0xff]
    %v393 = vld [vmem:[#allocation2 + $0x5c8] sm:$0xff]
    %v394 = vld [vmem:[#allocation2 + $0x5d0] sm:$0xff]
    %v395 = vld [vmem:[#allocation2 + $0x5d8] sm:$0xff]
    %v396 = vld [vmem:[#allocation2 + $0x5e0] sm:$0xff]
    %v397 = vld [vmem:[#allocation2 + $0x5e8] sm:$0xff]
    %v398 = vld [vmem:[#allocation2 + $0x5f0] sm:$0xff]
    %v399 = vld [vmem:[#allocation2 + $0x5f8] sm:$0xff]
    %v400 = vld [vmem:[#allocation2 + $0x600] sm:$0xff]
    %v401 = vld [vmem:[#allocation2 + $0x608] sm:$0xff]
    %v402 = vld [vmem:[#allocation2 + $0x610] sm:$0xff]
    %v403 = vld [vmem:[#allocation2 + $0x618] sm:$0xff]
    %v404 = vld [vmem:[#allocation2 + $0x620] sm:$0xff]
    %v405 = vld [vmem:[#allocation2 + $0x628] sm:$0xff]
    %v406 = vld [vmem:[#allocation2 + $0x630] sm:$0xff]
    %v407 = vld [vmem:[#allocation2 + $0x638] sm:$0xff]
    %v408 = vld [vmem:[#allocation2 + $0x640] sm:$0xff]
    %v409 = vld [vmem:[#allocation2 + $0x648] sm:$0xff]
    %v410 = vld [vmem:[#allocation2 + $0x650] sm:$0xff]
    %v411 = vld [vmem:[#allocation2 + $0x658] sm:$0xff]
    %v412 = vld [vmem:[#allocation2 + $0x660] sm:$0xff]
    %v413 = vld [vmem:[#allocation2 + $0x668] sm:$0xff]
    %v414 = vld [vmem:[#allocation2 + $0x670] sm:$0xff]
    %v415 = vld [vmem:[#allocation2 + $0x678] sm:$0xff]
    %v416 = vld [vmem:[#allocation2 + $0x680] sm:$0xff]
    %v417 = vld [vmem:[#allocation2 + $0x688] sm:$0xff]
    %v418 = vld [vmem:[#allocation2 + $0x690] sm:$0xff]
    %v419 = vld [vmem:[#allocation2 + $0x698] sm:$0xff]
    %v420 = vld [vmem:[#allocation2 + $0x6a0] sm:$0xff]
    %v421 = vld [vmem:[#allocation2 + $0x6a8] sm:$0xff]
    %v422 = vld [vmem:[#allocation2 + $0x6b0] sm:$0xff]
    %v423 = vld [vmem:[#allocation2 + $0x6b8] sm:$0xff]
    %v424 = vld [vmem:[#allocation2 + $0x6c0] sm:$0xff]
    %v425 = vld [vmem:[#allocation2 + $0x6c8] sm:$0xff]
    %v426 = vld [vmem:[#allocation2 + $0x6d0] sm:$0xff]
    %v427 = vld [vmem:[#allocation2 + $0x6d8] sm:$0xff]
    %v428 = vld [vmem:[#allocation2 + $0x6e0] sm:$0xff]
    %v429 = vld [vmem:[#allocation2 + $0x6e8] sm:$0xff]
    %v430 = vld [vmem:[#allocation2 + $0x6f0] sm:$0xff]
    %v431 = vld [vmem:[#allocation2 + $0x6f8] sm:$0xff]
    %v432 = vld [vmem:[#allocation2 + $0x700] sm:$0xff]
    %v433 = vld [vmem:[#allocation2 + $0x708] sm:$0xff]
    %v434 = vld [vmem:[#allocation2 + $0x710] sm:$0xff]
    %v435 = vld [vmem:[#allocation2 + $0x718] sm:$0xff]
    %v436 = vld [vmem:[#allocation2 + $0x720] sm:$0xff]
    %v437 = vld [vmem:[#allocation2 + $0x728] sm:$0xff]
    %v438 = vld [vmem:[#allocation2 + $0x730] sm:$0xff]
    %v439 = vld [vmem:[#allocation2 + $0x738] sm:$0xff]
    %v440 = vld [vmem:[#allocation2 + $0x740] sm:$0xff]
    %v441 = vld [vmem:[#allocation2 + $0x748] sm:$0xff]
    %v442 = vld [vmem:[#allocation2 + $0x750] sm:$0xff]
    %v443 = vld [vmem:[#allocation2 + $0x758] sm:$0xff]
    %v444 = vld [vmem:[#allocation2 + $0x760] sm:$0xff]
    %v445 = vld [vmem:[#allocation2 + $0x768] sm:$0xff]
    %v446 = vld [vmem:[#allocation2 + $0x770] sm:$0xff]
    %v447 = vld [vmem:[#allocation2 + $0x778] sm:$0xff]
    %v448 = vld [vmem:[#allocation2 + $0x780] sm:$0xff]
    %v449 = vld [vmem:[#allocation2 + $0x788] sm:$0xff]
    %v450 = vld [vmem:[#allocation2 + $0x790] sm:$0xff]
    %v451 = vld [vmem:[#allocation2 + $0x798] sm:$0xff]
    %v452 = vld [vmem:[#allocation2 + $0x7a0] sm:$0xff]
    %v453 = vld [vmem:[#allocation2 + $0x7a8] sm:$0xff]
    %v454 = vld [vmem:[#allocation2 + $0x7b0] sm:$0xff]
    %v455 = vld [vmem:[#allocation2 + $0x7b8] sm:$0xff]
    %v456 = vld [vmem:[#allocation2 + $0x7c0] sm:$0xff]
    %v457 = vld [vmem:[#allocation2 + $0x7c8] sm:$0xff]
    %v458 = vld [vmem:[#allocation2 + $0x7d0] sm:$0xff]
    %v459 = vld [vmem:[#allocation2 + $0x7d8] sm:$0xff]
    %v460 = vld [vmem:[#allocation2 + $0x7e0] sm:$0xff]
    %v461 = vld [vmem:[#allocation2 + $0x7e8] sm:$0xff]
    %v462 = vld [vmem:[#allocation2 + $0x7f0] sm:$0xff]
    %v463 = vld [vmem:[#allocation2 + $0x7f8] sm:$0xff]
    %v464 = vld [vmem:[#allocation8] sm:$0xff]
    %v465 = vld [vmem:[#allocation8 + $0x8] sm:$0xff]
    %v466 = vld [vmem:[#allocation8 + $0x10] sm:$0xff]
    %v467 = vld [vmem:[#allocation8 + $0x18] sm:$0xff]
    %v468 = vld [vmem:[#allocation8 + $0x20] sm:$0xff]
    %v469 = vld [vmem:[#allocation8 + $0x28] sm:$0xff]
    %v470 = vld [vmem:[#allocation8 + $0x30] sm:$0xff]
    %v471 = vld [vmem:[#allocation8 + $0x38] sm:$0xff]
    %v472 = vld [vmem:[#allocation8 + $0x40] sm:$0xff]
    %v473 = vld [vmem:[#allocation8 + $0x48] sm:$0xff]
    %v474 = vld [vmem:[#allocation8 + $0x50] sm:$0xff]
    %v475 = vld [vmem:[#allocation8 + $0x58] sm:$0xff]
    %v476 = vld [vmem:[#allocation8 + $0x60] sm:$0xff]
    %v477 = vld [vmem:[#allocation8 + $0x68] sm:$0xff]
    %v478 = vld [vmem:[#allocation8 + $0x70] sm:$0xff]
    %v479 = vld [vmem:[#allocation8 + $0x78] sm:$0xff]
    %v480 = vld [vmem:[#allocation8 + $0x80] sm:$0xff]
    %v481 = vld [vmem:[#allocation8 + $0x88] sm:$0xff]
    %v482 = vld [vmem:[#allocation8 + $0x90] sm:$0xff]
    %v483 = vld [vmem:[#allocation8 + $0x98] sm:$0xff]
    %v484 = vld [vmem:[#allocation8 + $0xa0] sm:$0xff]
    %v485 = vld [vmem:[#allocation8 + $0xa8] sm:$0xff]
    %v486 = vld [vmem:[#allocation8 + $0xb0] sm:$0xff]
    %v487 = vld [vmem:[#allocation8 + $0xb8] sm:$0xff]
    %v488 = vld [vmem:[#allocation8 + $0xc0] sm:$0xff]
    %v489 = vld [vmem:[#allocation8 + $0xc8] sm:$0xff]
    %v490 = vld [vmem:[#allocation8 + $0xd0] sm:$0xff]
    %v491 = vld [vmem:[#allocation8 + $0xd8] sm:$0xff]
    %v492 = vld [vmem:[#allocation8 + $0xe0] sm:$0xff]
    %v493 = vld [vmem:[#allocation8 + $0xe8] sm:$0xff]
    %v494 = vld [vmem:[#allocation8 + $0xf0] sm:$0xff]
    %v495 = vld [vmem:[#allocation8 + $0xf8] sm:$0xff]
    %v496 = vld [vmem:[#allocation8 + $0x100] sm:$0xff]
    %v497 = vld [vmem:[#allocation8 + $0x108] sm:$0xff]
    %v498 = vld [vmem:[#allocation8 + $0x110] sm:$0xff]
    %v499 = vld [vmem:[#allocation8 + $0x118] sm:$0xff]
    %v500 = vld [vmem:[#allocation8 + $0x120] sm:$0xff]
    %v501 = vld [vmem:[#allocation8 + $0x128] sm:$0xff]
    %v502 = vld [vmem:[#allocation8 + $0x130] sm:$0xff]
    %v503 = vld [vmem:[#allocation8 + $0x138] sm:$0xff]
    %v504 = vld [vmem:[#allocation8 + $0x140] sm:$0xff]
    %v505 = vld [vmem:[#allocation8 + $0x148] sm:$0xff]
    %v506 = vld [vmem:[#allocation8 + $0x150] sm:$0xff]
    %v507 = vld [vmem:[#allocation8 + $0x158] sm:$0xff]
    %v508 = vld [vmem:[#allocation8 + $0x160] sm:$0xff]
    %v509 = vld [vmem:[#allocation8 + $0x168] sm:$0xff]
    %v510 = vld [vmem:[#allocation8 + $0x170] sm:$0xff]
    %v511 = vld [vmem:[#allocation8 + $0x178] sm:$0xff]
    %v512 = vld [vmem:[#allocation8 + $0x180] sm:$0xff]
    %v513 = vld [vmem:[#allocation8 + $0x188] sm:$0xff]
    %v514 = vld [vmem:[#allocation8 + $0x190] sm:$0xff]
    %v515 = vld [vmem:[#allocation8 + $0x198] sm:$0xff]
    %v516 = vld [vmem:[#allocation8 + $0x1a0] sm:$0xff]
    %v517 = vld [vmem:[#allocation8 + $0x1a8] sm:$0xff]
    %v518 = vld [vmem:[#allocation8 + $0x1b0] sm:$0xff]
    %v519 = vld [vmem:[#allocation8 + $0x1b8] sm:$0xff]
    %v520 = vld [vmem:[#allocation8 + $0x1c0] sm:$0xff]
    %v521 = vld [vmem:[#allocation8 + $0x1c8] sm:$0xff]
    %v522 = vld [vmem:[#allocation8 + $0x1d0] sm:$0xff]
    %v523 = vld [vmem:[#allocation8 + $0x1d8] sm:$0xff]
    %v524 = vld [vmem:[#allocation8 + $0x1e0] sm:$0xff]
    %v525 = vld [vmem:[#allocation8 + $0x1e8] sm:$0xff]
    %v526 = vld [vmem:[#allocation8 + $0x1f0] sm:$0xff]
    %v527 = vld [vmem:[#allocation8 + $0x1f8] sm:$0xff]
    %v528 = vld [vmem:[#allocation8 + $0x200] sm:$0xff]
    %v529 = vld [vmem:[#allocation8 + $0x208] sm:$0xff]
    %v530 = vld [vmem:[#allocation8 + $0x210] sm:$0xff]
    %v531 = vld [vmem:[#allocation8 + $0x218] sm:$0xff]
    %v532 = vld [vmem:[#allocation8 + $0x220] sm:$0xff]
    %v533 = vld [vmem:[#allocation8 + $0x228] sm:$0xff]
    %v534 = vld [vmem:[#allocation8 + $0x230] sm:$0xff]
    %v535 = vld [vmem:[#allocation8 + $0x238] sm:$0xff]
    %v536 = vld [vmem:[#allocation8 + $0x240] sm:$0xff]
    %v537 = vld [vmem:[#allocation8 + $0x248] sm:$0xff]
    %v538 = vld [vmem:[#allocation8 + $0x250] sm:$0xff]
    %v539 = vld [vmem:[#allocation8 + $0x258] sm:$0xff]
    %v540 = vld [vmem:[#allocation8 + $0x260] sm:$0xff]
    %v541 = vld [vmem:[#allocation8 + $0x268] sm:$0xff]
    %v542 = vld [vmem:[#allocation8 + $0x270] sm:$0xff]
    %v543 = vld [vmem:[#allocation8 + $0x278] sm:$0xff]
    %v544 = vld [vmem:[#allocation8 + $0x280] sm:$0xff]
    %v545 = vld [vmem:[#allocation8 + $0x288] sm:$0xff]
    %v546 = vld [vmem:[#allocation8 + $0x290] sm:$0xff]
    %v547 = vld [vmem:[#allocation8 + $0x298] sm:$0xff]
    %v548 = vld [vmem:[#allocation8 + $0x2a0] sm:$0xff]
    %v549 = vld [vmem:[#allocation8 + $0x2a8] sm:$0xff]
    %v550 = vld [vmem:[#allocation8 + $0x2b0] sm:$0xff]
    %v551 = vld [vmem:[#allocation8 + $0x2b8] sm:$0xff]
    %v552 = vld [vmem:[#allocation8 + $0x2c0] sm:$0xff]
    %v553 = vld [vmem:[#allocation8 + $0x2c8] sm:$0xff]
    %v554 = vld [vmem:[#allocation8 + $0x2d0] sm:$0xff]
    %v555 = vld [vmem:[#allocation8 + $0x2d8] sm:$0xff]
    %v556 = vld [vmem:[#allocation8 + $0x2e0] sm:$0xff]
    %v557 = vld [vmem:[#allocation8 + $0x2e8] sm:$0xff]
    %v558 = vld [vmem:[#allocation8 + $0x2f0] sm:$0xff]
    %v559 = vld [vmem:[#allocation8 + $0x2f8] sm:$0xff]
    %v560 = vld [vmem:[#allocation8 + $0x300] sm:$0xff]
    %v561 = vld [vmem:[#allocation8 + $0x308] sm:$0xff]
    %v562 = vld [vmem:[#allocation8 + $0x310] sm:$0xff]
    %v563 = vld [vmem:[#allocation8 + $0x318] sm:$0xff]
    %v564 = vld [vmem:[#allocation8 + $0x320] sm:$0xff]
    %v565 = vld [vmem:[#allocation8 + $0x328] sm:$0xff]
    %v566 = vld [vmem:[#allocation8 + $0x330] sm:$0xff]
    %v567 = vld [vmem:[#allocation8 + $0x338] sm:$0xff]
    %v568 = vld [vmem:[#allocation8 + $0x340] sm:$0xff]
    %v569 = vld [vmem:[#allocation8 + $0x348] sm:$0xff]
    %v570 = vld [vmem:[#allocation8 + $0x350] sm:$0xff]
    %v571 = vld [vmem:[#allocation8 + $0x358] sm:$0xff]
    %v572 = vld [vmem:[#allocation8 + $0x360] sm:$0xff]
    %v573 = vld [vmem:[#allocation8 + $0x368] sm:$0xff]
    %v574 = vld [vmem:[#allocation8 + $0x370] sm:$0xff]
    %v575 = vld [vmem:[#allocation8 + $0x378] sm:$0xff]
    %v576 = vld [vmem:[#allocation8 + $0x380] sm:$0xff]
    %v577 = vld [vmem:[#allocation8 + $0x388] sm:$0xff]
    %v578 = vld [vmem:[#allocation8 + $0x390] sm:$0xff]
    %v579 = vld [vmem:[#allocation8 + $0x398] sm:$0xff]
    %v580 = vld [vmem:[#allocation8 + $0x3a0] sm:$0xff]
    %v581 = vld [vmem:[#allocation8 + $0x3a8] sm:$0xff]
    %v582 = vld [vmem:[#allocation8 + $0x3b0] sm:$0xff]
    %v583 = vld [vmem:[#allocation8 + $0x3b8] sm:$0xff]
    %v584 = vld [vmem:[#allocation8 + $0x3c0] sm:$0xff]
    %v585 = vld [vmem:[#allocation8 + $0x3c8] sm:$0xff]
    %v586 = vld [vmem:[#allocation8 + $0x3d0] sm:$0xff]
    %v587 = vld [vmem:[#allocation8 + $0x3d8] sm:$0xff]
    %v588 = vld [vmem:[#allocation8 + $0x3e0] sm:$0xff]
    %v589 = vld [vmem:[#allocation8 + $0x3e8] sm:$0xff]
    %v590 = vld [vmem:[#allocation8 + $0x3f0] sm:$0xff]
    %v591 = vld [vmem:[#allocation8 + $0x3f8] sm:$0xff]
    %v592 = vld [vmem:[#allocation5] sm:$0xff]
    %v593 = vld [vmem:[#allocation5 + $0x8] sm:$0xff]
    %v594 = vld [vmem:[#allocation5 + $0x10] sm:$0xff]
    %v595 = vld [vmem:[#allocation5 + $0x18] sm:$0xff]
    %v596 = vld [vmem:[#allocation5 + $0x20] sm:$0xff]
    %v597 = vld [vmem:[#allocation5 + $0x28] sm:$0xff]
    %v598 = vld [vmem:[#allocation5 + $0x30] sm:$0xff]
    %v599 = vld [vmem:[#allocation5 + $0x38] sm:$0xff]
    %v600 = vld [vmem:[#allocation5 + $0x40] sm:$0xff]
    %v601 = vld [vmem:[#allocation5 + $0x48] sm:$0xff]
    %v602 = vld [vmem:[#allocation5 + $0x50] sm:$0xff]
    %v603 = vld [vmem:[#allocation5 + $0x58] sm:$0xff]
    %v604 = vld [vmem:[#allocation5 + $0x60] sm:$0xff]
    %v605 = vld [vmem:[#allocation5 + $0x68] sm:$0xff]
    %v606 = vld [vmem:[#allocation5 + $0x70] sm:$0xff]
    %v607 = vld [vmem:[#allocation5 + $0x78] sm:$0xff]
    %v608 = vld [vmem:[#allocation5 + $0x80] sm:$0xff]
    %v609 = vld [vmem:[#allocation5 + $0x88] sm:$0xff]
    %v610 = vld [vmem:[#allocation5 + $0x90] sm:$0xff]
    %v611 = vld [vmem:[#allocation5 + $0x98] sm:$0xff]
    %v612 = vld [vmem:[#allocation5 + $0xa0] sm:$0xff]
    %v613 = vld [vmem:[#allocation5 + $0xa8] sm:$0xff]
    %v614 = vld [vmem:[#allocation5 + $0xb0] sm:$0xff]
    %v615 = vld [vmem:[#allocation5 + $0xb8] sm:$0xff]
    %v616 = vld [vmem:[#allocation5 + $0xc0] sm:$0xff]
    %v617 = vld [vmem:[#allocation5 + $0xc8] sm:$0xff]
    %v618 = vld [vmem:[#allocation5 + $0xd0] sm:$0xff]
    %v619 = vld [vmem:[#allocation5 + $0xd8] sm:$0xff]
    %v620 = vld [vmem:[#allocation5 + $0xe0] sm:$0xff]
    %v621 = vld [vmem:[#allocation5 + $0xe8] sm:$0xff]
    %v622 = vld [vmem:[#allocation5 + $0xf0] sm:$0xff]
    %v623 = vld [vmem:[#allocation5 + $0xf8] sm:$0xff]
    %v624 = vld [vmem:[#allocation5 + $0x100] sm:$0xff]
    %v625 = vld [vmem:[#allocation5 + $0x108] sm:$0xff]
    %v626 = vld [vmem:[#allocation5 + $0x110] sm:$0xff]
    %v627 = vld [vmem:[#allocation5 + $0x118] sm:$0xff]
    %v628 = vld [vmem:[#allocation5 + $0x120] sm:$0xff]
    %v629 = vld [vmem:[#allocation5 + $0x128] sm:$0xff]
    %v630 = vld [vmem:[#allocation5 + $0x130] sm:$0xff]
    %v631 = vld [vmem:[#allocation5 + $0x138] sm:$0xff]
    %v632 = vld [vmem:[#allocation5 + $0x140] sm:$0xff]
    %v633 = vld [vmem:[#allocation5 + $0x148] sm:$0xff]
    %v634 = vld [vmem:[#allocation5 + $0x150] sm:$0xff]
    %v635 = vld [vmem:[#allocation5 + $0x158] sm:$0xff]
    %v636 = vld [vmem:[#allocation5 + $0x160] sm:$0xff]
    %v637 = vld [vmem:[#allocation5 + $0x168] sm:$0xff]
    %v638 = vld [vmem:[#allocation5 + $0x170] sm:$0xff]
    %v639 = vld [vmem:[#allocation5 + $0x178] sm:$0xff]
    %v640 = vld [vmem:[#allocation5 + $0x180] sm:$0xff]
    %v641 = vld [vmem:[#allocation5 + $0x188] sm:$0xff]
    %v642 = vld [vmem:[#allocation5 + $0x190] sm:$0xff]
    %v643 = vld [vmem:[#allocation5 + $0x198] sm:$0xff]
    %v644 = vld [vmem:[#allocation5 + $0x1a0] sm:$0xff]
    %v645 = vld [vmem:[#allocation5 + $0x1a8] sm:$0xff]
    %v646 = vld [vmem:[#allocation5 + $0x1b0] sm:$0xff]
    %v647 = vld [vmem:[#allocation5 + $0x1b8] sm:$0xff]
    %v648 = vld [vmem:[#allocation5 + $0x1c0] sm:$0xff]
    %v649 = vld [vmem:[#allocation5 + $0x1c8] sm:$0xff]
    %v650 = vld [vmem:[#allocation5 + $0x1d0] sm:$0xff]
    %v651 = vld [vmem:[#allocation5 + $0x1d8] sm:$0xff]
    %v652 = vld [vmem:[#allocation5 + $0x1e0] sm:$0xff]
    %v653 = vld [vmem:[#allocation5 + $0x1e8] sm:$0xff]
    %v654 = vld [vmem:[#allocation5 + $0x1f0] sm:$0xff]
    %v655 = vld [vmem:[#allocation5 + $0x1f8] sm:$0xff]
    %v656 = vld [vmem:[#allocation5 + $0x200] sm:$0xff]
    %v657 = vld [vmem:[#allocation5 + $0x208] sm:$0xff]
    %v658 = vld [vmem:[#allocation5 + $0x210] sm:$0xff]
    %v659 = vld [vmem:[#allocation5 + $0x218] sm:$0xff]
    %v660 = vld [vmem:[#allocation5 + $0x220] sm:$0xff]
    %v661 = vld [vmem:[#allocation5 + $0x228] sm:$0xff]
    %v662 = vld [vmem:[#allocation5 + $0x230] sm:$0xff]
    %v663 = vld [vmem:[#allocation5 + $0x238] sm:$0xff]
    %v664 = vld [vmem:[#allocation5 + $0x240] sm:$0xff]
    %v665 = vld [vmem:[#allocation5 + $0x248] sm:$0xff]
    %v666 = vld [vmem:[#allocation5 + $0x250] sm:$0xff]
    %v667 = vld [vmem:[#allocation5 + $0x258] sm:$0xff]
    %v668 = vld [vmem:[#allocation5 + $0x260] sm:$0xff]
    %v669 = vld [vmem:[#allocation5 + $0x268] sm:$0xff]
    %v670 = vld [vmem:[#allocation5 + $0x270] sm:$0xff]
    %v671 = vld [vmem:[#allocation5 + $0x278] sm:$0xff]
    %v672 = vld [vmem:[#allocation5 + $0x280] sm:$0xff]
    %v673 = vld [vmem:[#allocation5 + $0x288] sm:$0xff]
    %v674 = vld [vmem:[#allocation5 + $0x290] sm:$0xff]
    %v675 = vld [vmem:[#allocation5 + $0x298] sm:$0xff]
    %v676 = vld [vmem:[#allocation5 + $0x2a0] sm:$0xff]
    %v677 = vld [vmem:[#allocation5 + $0x2a8] sm:$0xff]
    %v678 = vld [vmem:[#allocation5 + $0x2b0] sm:$0xff]
    %v679 = vld [vmem:[#allocation5 + $0x2b8] sm:$0xff]
    %v680 = vld [vmem:[#allocation5 + $0x2c0] sm:$0xff]
    %v681 = vld [vmem:[#allocation5 + $0x2c8] sm:$0xff]
    %v682 = vld [vmem:[#allocation5 + $0x2d0] sm:$0xff]
    %v683 = vld [vmem:[#allocation5 + $0x2d8] sm:$0xff]
    %v684 = vld [vmem:[#allocation5 + $0x2e0] sm:$0xff]
    %v685 = vld [vmem:[#allocation5 + $0x2e8] sm:$0xff]
    %v686 = vld [vmem:[#allocation5 + $0x2f0] sm:$0xff]
    %v687 = vld [vmem:[#allocation5 + $0x2f8] sm:$0xff]
    %v688 = vld [vmem:[#allocation5 + $0x300] sm:$0xff]
    %v689 = vld [vmem:[#allocation5 + $0x308] sm:$0xff]
    %v690 = vld [vmem:[#allocation5 + $0x310] sm:$0xff]
    %v691 = vld [vmem:[#allocation5 + $0x318] sm:$0xff]
    %v692 = vld [vmem:[#allocation5 + $0x320] sm:$0xff]
    %v693 = vld [vmem:[#allocation5 + $0x328] sm:$0xff]
    %v694 = vld [vmem:[#allocation5 + $0x330] sm:$0xff]
    %v695 = vld [vmem:[#allocation5 + $0x338] sm:$0xff]
    %v696 = vld [vmem:[#allocation5 + $0x340] sm:$0xff]
    %v697 = vld [vmem:[#allocation5 + $0x348] sm:$0xff]
    %v698 = vld [vmem:[#allocation5 + $0x350] sm:$0xff]
    %v699 = vld [vmem:[#allocation5 + $0x358] sm:$0xff]
    %v700 = vld [vmem:[#allocation5 + $0x360] sm:$0xff]
    %v701 = vld [vmem:[#allocation5 + $0x368] sm:$0xff]
    %v702 = vld [vmem:[#allocation5 + $0x370] sm:$0xff]
    %v703 = vld [vmem:[#allocation5 + $0x378] sm:$0xff]
    %v704 = vld [vmem:[#allocation5 + $0x380] sm:$0xff]
    %v705 = vld [vmem:[#allocation5 + $0x388] sm:$0xff]
    %v706 = vld [vmem:[#allocation5 + $0x390] sm:$0xff]
    %v707 = vld [vmem:[#allocation5 + $0x398] sm:$0xff]
    %v708 = vld [vmem:[#allocation5 + $0x3a0] sm:$0xff]
    %v709 = vld [vmem:[#allocation5 + $0x3a8] sm:$0xff]
    %v710 = vld [vmem:[#allocation5 + $0x3b0] sm:$0xff]
    %v711 = vld [vmem:[#allocation5 + $0x3b8] sm:$0xff]
    %v712 = vld [vmem:[#allocation5 + $0x3c0] sm:$0xff]
    %v713 = vld [vmem:[#allocation5 + $0x3c8] sm:$0xff]
    %v714 = vld [vmem:[#allocation5 + $0x3d0] sm:$0xff]
    %v715 = vld [vmem:[#allocation5 + $0x3d8] sm:$0xff]
    %v716 = vld [vmem:[#allocation5 + $0x3e0] sm:$0xff]
    %v717 = vld [vmem:[#allocation5 + $0x3e8] sm:$0xff]
    %v718 = vld [vmem:[#allocation5 + $0x3f0] sm:$0xff]
    %v719 = vld [vmem:[#allocation5 + $0x3f8] sm:$0xff]
    %v720 = vld [vmem:[#allocation5 + $0x400] sm:$0xff]
    %v721 = vld [vmem:[#allocation5 + $0x408] sm:$0xff]
    %v722 = vld [vmem:[#allocation5 + $0x410] sm:$0xff]
    %v723 = vld [vmem:[#allocation5 + $0x418] sm:$0xff]
    %v724 = vld [vmem:[#allocation5 + $0x420] sm:$0xff]
    %v725 = vld [vmem:[#allocation5 + $0x428] sm:$0xff]
    %v726 = vld [vmem:[#allocation5 + $0x430] sm:$0xff]
    %v727 = vld [vmem:[#allocation5 + $0x438] sm:$0xff]
    %v728 = vld [vmem:[#allocation5 + $0x440] sm:$0xff]
    %v729 = vld [vmem:[#allocation5 + $0x448] sm:$0xff]
    %v730 = vld [vmem:[#allocation5 + $0x450] sm:$0xff]
    %v731 = vld [vmem:[#allocation5 + $0x458] sm:$0xff]
    %v732 = vld [vmem:[#allocation5 + $0x460] sm:$0xff]
    %v733 = vld [vmem:[#allocation5 + $0x468] sm:$0xff]
    %v734 = vld [vmem:[#allocation5 + $0x470] sm:$0xff]
    %v735 = vld [vmem:[#allocation5 + $0x478] sm:$0xff]
    %v736 = vld [vmem:[#allocation5 + $0x480] sm:$0xff]
    %v737 = vld [vmem:[#allocation5 + $0x488] sm:$0xff]
    %v738 = vld [vmem:[#allocation5 + $0x490] sm:$0xff]
    %v739 = vld [vmem:[#allocation5 + $0x498] sm:$0xff]
    %v740 = vld [vmem:[#allocation5 + $0x4a0] sm:$0xff]
    %v741 = vld [vmem:[#allocation5 + $0x4a8] sm:$0xff]
    %v742 = vld [vmem:[#allocation5 + $0x4b0] sm:$0xff]
    %v743 = vld [vmem:[#allocation5 + $0x4b8] sm:$0xff]
    %v744 = vld [vmem:[#allocation5 + $0x4c0] sm:$0xff]
    %v745 = vld [vmem:[#allocation5 + $0x4c8] sm:$0xff]
    %v746 = vld [vmem:[#allocation5 + $0x4d0] sm:$0xff]
    %v747 = vld [vmem:[#allocation5 + $0x4d8] sm:$0xff]
    %v748 = vld [vmem:[#allocation5 + $0x4e0] sm:$0xff]
    %v749 = vld [vmem:[#allocation5 + $0x4e8] sm:$0xff]
    %v750 = vld [vmem:[#allocation5 + $0x4f0] sm:$0xff]
    %v751 = vld [vmem:[#allocation5 + $0x4f8] sm:$0xff]
    %v752 = vld [vmem:[#allocation5 + $0x500] sm:$0xff]
    %v753 = vld [vmem:[#allocation5 + $0x508] sm:$0xff]
    %v754 = vld [vmem:[#allocation5 + $0x510] sm:$0xff]
    %v755 = vld [vmem:[#allocation5 + $0x518] sm:$0xff]
    %v756 = vld [vmem:[#allocation5 + $0x520] sm:$0xff]
    %v757 = vld [vmem:[#allocation5 + $0x528] sm:$0xff]
    %v758 = vld [vmem:[#allocation5 + $0x530] sm:$0xff]
    %v759 = vld [vmem:[#allocation5 + $0x538] sm:$0xff]
    %v760 = vld [vmem:[#allocation5 + $0x540] sm:$0xff]
    %v761 = vld [vmem:[#allocation5 + $0x548] sm:$0xff]
    %v762 = vld [vmem:[#allocation5 + $0x550] sm:$0xff]
    %v763 = vld [vmem:[#allocation5 + $0x558] sm:$0xff]
    %v764 = vld [vmem:[#allocation5 + $0x560] sm:$0xff]
    %v765 = vld [vmem:[#allocation5 + $0x568] sm:$0xff]
    %v766 = vld [vmem:[#allocation5 + $0x570] sm:$0xff]
    %v767 = vld [vmem:[#allocation5 + $0x578] sm:$0xff]
    %v768 = vld [vmem:[#allocation5 + $0x580] sm:$0xff]
    %v769 = vld [vmem:[#allocation5 + $0x588] sm:$0xff]
    %v770 = vld [vmem:[#allocation5 + $0x590] sm:$0xff]
    %v771 = vld [vmem:[#allocation5 + $0x598] sm:$0xff]
    %v772 = vld [vmem:[#allocation5 + $0x5a0] sm:$0xff]
    %v773 = vld [vmem:[#allocation5 + $0x5a8] sm:$0xff]
    %v774 = vld [vmem:[#allocation5 + $0x5b0] sm:$0xff]
    %v775 = vld [vmem:[#allocation5 + $0x5b8] sm:$0xff]
    %v776 = vld [vmem:[#allocation5 + $0x5c0] sm:$0xff]
    %v777 = vld [vmem:[#allocation5 + $0x5c8] sm:$0xff]
    %v778 = vld [vmem:[#allocation5 + $0x5d0] sm:$0xff]
    %v779 = vld [vmem:[#allocation5 + $0x5d8] sm:$0xff]
    %v780 = vld [vmem:[#allocation5 + $0x5e0] sm:$0xff]
    %v781 = vld [vmem:[#allocation5 + $0x5e8] sm:$0xff]
    %v782 = vld [vmem:[#allocation5 + $0x5f0] sm:$0xff]
    %v783 = vld [vmem:[#allocation5 + $0x5f8] sm:$0xff]
    %v784 = vld [vmem:[#allocation5 + $0x600] sm:$0xff]
    %v785 = vld [vmem:[#allocation5 + $0x608] sm:$0xff]
    %v786 = vld [vmem:[#allocation5 + $0x610] sm:$0xff]
    %v787 = vld [vmem:[#allocation5 + $0x618] sm:$0xff]
    %v788 = vld [vmem:[#allocation5 + $0x620] sm:$0xff]
    %v789 = vld [vmem:[#allocation5 + $0x628] sm:$0xff]
    %v790 = vld [vmem:[#allocation5 + $0x630] sm:$0xff]
    %v791 = vld [vmem:[#allocation5 + $0x638] sm:$0xff]
    %v792 = vld [vmem:[#allocation5 + $0x640] sm:$0xff]
    %v793 = vld [vmem:[#allocation5 + $0x648] sm:$0xff]
    %v794 = vld [vmem:[#allocation5 + $0x650] sm:$0xff]
    %v795 = vld [vmem:[#allocation5 + $0x658] sm:$0xff]
    %v796 = vld [vmem:[#allocation5 + $0x660] sm:$0xff]
    %v797 = vld [vmem:[#allocation5 + $0x668] sm:$0xff]
    %v798 = vld [vmem:[#allocation5 + $0x670] sm:$0xff]
    %v799 = vld [vmem:[#allocation5 + $0x678] sm:$0xff]
    %v800 = vld [vmem:[#allocation5 + $0x680] sm:$0xff]
    %v801 = vld [vmem:[#allocation5 + $0x688] sm:$0xff]
    %v802 = vld [vmem:[#allocation5 + $0x690] sm:$0xff]
    %v803 = vld [vmem:[#allocation5 + $0x698] sm:$0xff]
    %v804 = vld [vmem:[#allocation5 + $0x6a0] sm:$0xff]
    %v805 = vld [vmem:[#allocation5 + $0x6a8] sm:$0xff]
    %v806 = vld [vmem:[#allocation5 + $0x6b0] sm:$0xff]
    %v807 = vld [vmem:[#allocation5 + $0x6b8] sm:$0xff]
    %v808 = vld [vmem:[#allocation5 + $0x6c0] sm:$0xff]
    %v809 = vld [vmem:[#allocation5 + $0x6c8] sm:$0xff]
    %v810 = vld [vmem:[#allocation5 + $0x6d0] sm:$0xff]
    %v811 = vld [vmem:[#allocation5 + $0x6d8] sm:$0xff]
    %v812 = vld [vmem:[#allocation5 + $0x6e0] sm:$0xff]
    %v813 = vld [vmem:[#allocation5 + $0x6e8] sm:$0xff]
    %v814 = vld [vmem:[#allocation5 + $0x6f0] sm:$0xff]
    %v815 = vld [vmem:[#allocation5 + $0x6f8] sm:$0xff]
    %v816 = vld [vmem:[#allocation5 + $0x700] sm:$0xff]
    %v817 = vld [vmem:[#allocation5 + $0x708] sm:$0xff]
    %v818 = vld [vmem:[#allocation5 + $0x710] sm:$0xff]
    %v819 = vld [vmem:[#allocation5 + $0x718] sm:$0xff]
    %v820 = vld [vmem:[#allocation5 + $0x720] sm:$0xff]
    %v821 = vld [vmem:[#allocation5 + $0x728] sm:$0xff]
    %v822 = vld [vmem:[#allocation5 + $0x730] sm:$0xff]
    %v823 = vld [vmem:[#allocation5 + $0x738] sm:$0xff]
    %v824 = vld [vmem:[#allocation5 + $0x740] sm:$0xff]
    %v825 = vld [vmem:[#allocation5 + $0x748] sm:$0xff]
    %v826 = vld [vmem:[#allocation5 + $0x750] sm:$0xff]
    %v827 = vld [vmem:[#allocation5 + $0x758] sm:$0xff]
    %v828 = vld [vmem:[#allocation5 + $0x760] sm:$0xff]
    %v829 = vld [vmem:[#allocation5 + $0x768] sm:$0xff]
    %v830 = vld [vmem:[#allocation5 + $0x770] sm:$0xff]
    %v831 = vld [vmem:[#allocation5 + $0x778] sm:$0xff]
    %v832 = vld [vmem:[#allocation5 + $0x780] sm:$0xff]
    %v833 = vld [vmem:[#allocation5 + $0x788] sm:$0xff]
    %v834 = vld [vmem:[#allocation5 + $0x790] sm:$0xff]
    %v835 = vld [vmem:[#allocation5 + $0x798] sm:$0xff]
    %v836 = vld [vmem:[#allocation5 + $0x7a0] sm:$0xff]
    %v837 = vld [vmem:[#allocation5 + $0x7a8] sm:$0xff]
    %v838 = vld [vmem:[#allocation5 + $0x7b0] sm:$0xff]
    %v839 = vld [vmem:[#allocation5 + $0x7b8] sm:$0xff]
    %v840 = vld [vmem:[#allocation5 + $0x7c0] sm:$0xff]
    %v841 = vld [vmem:[#allocation5 + $0x7c8] sm:$0xff]
    %v842 = vld [vmem:[#allocation5 + $0x7d0] sm:$0xff]
    %v843 = vld [vmem:[#allocation5 + $0x7d8] sm:$0xff]
    %v844 = vld [vmem:[#allocation5 + $0x7e0] sm:$0xff]
    %v845 = vld [vmem:[#allocation5 + $0x7e8] sm:$0xff]
    %v846 = vld [vmem:[#allocation5 + $0x7f0] sm:$0xff]
    %v847 = vld [vmem:[#allocation5 + $0x7f8] sm:$0xff]
    %v848 = vld [vmem:[#allocation5 + $0x800] sm:$0xff]
    %v849 = vld [vmem:[#allocation5 + $0x808] sm:$0xff]
    %v850 = vld [vmem:[#allocation5 + $0x810] sm:$0xff]
    %v851 = vld [vmem:[#allocation5 + $0x818] sm:$0xff]
    %v852 = vld [vmem:[#allocation5 + $0x820] sm:$0xff]
    %v853 = vld [vmem:[#allocation5 + $0x828] sm:$0xff]
    %v854 = vld [vmem:[#allocation5 + $0x830] sm:$0xff]
    %v855 = vld [vmem:[#allocation5 + $0x838] sm:$0xff]
    %v856 = vld [vmem:[#allocation5 + $0x840] sm:$0xff]
    %v857 = vld [vmem:[#allocation5 + $0x848] sm:$0xff]
    %v858 = vld [vmem:[#allocation5 + $0x850] sm:$0xff]
    %v859 = vld [vmem:[#allocation5 + $0x858] sm:$0xff]
    %v860 = vld [vmem:[#allocation5 + $0x860] sm:$0xff]
    %v861 = vld [vmem:[#allocation5 + $0x868] sm:$0xff]
    %v862 = vld [vmem:[#allocation5 + $0x870] sm:$0xff]
    %v863 = vld [vmem:[#allocation5 + $0x878] sm:$0xff]
    %v864 = vld [vmem:[#allocation5 + $0x880] sm:$0xff]
    %v865 = vld [vmem:[#allocation5 + $0x888] sm:$0xff]
    %v866 = vld [vmem:[#allocation5 + $0x890] sm:$0xff]
    %v867 = vld [vmem:[#allocation5 + $0x898] sm:$0xff]
    %v868 = vld [vmem:[#allocation5 + $0x8a0] sm:$0xff]
    %v869 = vld [vmem:[#allocation5 + $0x8a8] sm:$0xff]
    %v870 = vld [vmem:[#allocation5 + $0x8b0] sm:$0xff]
    %v871 = vld [vmem:[#allocation5 + $0x8b8] sm:$0xff]
    %v872 = vld [vmem:[#allocation5 + $0x8c0] sm:$0xff]
    %v873 = vld [vmem:[#allocation5 + $0x8c8] sm:$0xff]
    %v874 = vld [vmem:[#allocation5 + $0x8d0] sm:$0xff]
    %v875 = vld [vmem:[#allocation5 + $0x8d8] sm:$0xff]
    %v876 = vld [vmem:[#allocation5 + $0x8e0] sm:$0xff]
    %v877 = vld [vmem:[#allocation5 + $0x8e8] sm:$0xff]
    %v878 = vld [vmem:[#allocation5 + $0x8f0] sm:$0xff]
    %v879 = vld [vmem:[#allocation5 + $0x8f8] sm:$0xff]
    %v880 = vld [vmem:[#allocation5 + $0x900] sm:$0xff]
    %v881 = vld [vmem:[#allocation5 + $0x908] sm:$0xff]
    %v882 = vld [vmem:[#allocation5 + $0x910] sm:$0xff]
    %v883 = vld [vmem:[#allocation5 + $0x918] sm:$0xff]
    %v884 = vld [vmem:[#allocation5 + $0x920] sm:$0xff]
    %v885 = vld [vmem:[#allocation5 + $0x928] sm:$0xff]
    %v886 = vld [vmem:[#allocation5 + $0x930] sm:$0xff]
    %v887 = vld [vmem:[#allocation5 + $0x938] sm:$0xff]
    %v888 = vld [vmem:[#allocation5 + $0x940] sm:$0xff]
    %v889 = vld [vmem:[#allocation5 + $0x948] sm:$0xff]
    %v890 = vld [vmem:[#allocation5 + $0x950] sm:$0xff]
    %v891 = vld [vmem:[#allocation5 + $0x958] sm:$0xff]
    %v892 = vld [vmem:[#allocation5 + $0x960] sm:$0xff]
    %v893 = vld [vmem:[#allocation5 + $0x968] sm:$0xff]
    %v894 = vld [vmem:[#allocation5 + $0x970] sm:$0xff]
    %v895 = vld [vmem:[#allocation5 + $0x978] sm:$0xff]
    %v896 = vld [vmem:[#allocation5 + $0x980] sm:$0xff]
    %v897 = vld [vmem:[#allocation5 + $0x988] sm:$0xff]
    %v898 = vld [vmem:[#allocation5 + $0x990] sm:$0xff]
    %v899 = vld [vmem:[#allocation5 + $0x998] sm:$0xff]
    %v900 = vld [vmem:[#allocation5 + $0x9a0] sm:$0xff]
    %v901 = vld [vmem:[#allocation5 + $0x9a8] sm:$0xff]
    %v902 = vld [vmem:[#allocation5 + $0x9b0] sm:$0xff]
    %v903 = vld [vmem:[#allocation5 + $0x9b8] sm:$0xff]
    %v904 = vld [vmem:[#allocation5 + $0x9c0] sm:$0xff]
    %v905 = vld [vmem:[#allocation5 + $0x9c8] sm:$0xff]
    %v906 = vld [vmem:[#allocation5 + $0x9d0] sm:$0xff]
    %v907 = vld [vmem:[#allocation5 + $0x9d8] sm:$0xff]
    %v908 = vld [vmem:[#allocation5 + $0x9e0] sm:$0xff]
    %v909 = vld [vmem:[#allocation5 + $0x9e8] sm:$0xff]
    %v910 = vld [vmem:[#allocation5 + $0x9f0] sm:$0xff]
    %v911 = vld [vmem:[#allocation5 + $0x9f8] sm:$0xff]
    %v912 = vld [vmem:[#allocation5 + $0xa00] sm:$0xff]
    %v913 = vld [vmem:[#allocation5 + $0xa08] sm:$0xff]
    %v914 = vld [vmem:[#allocation5 + $0xa10] sm:$0xff]
    %v915 = vld [vmem:[#allocation5 + $0xa18] sm:$0xff]
    %v916 = vld [vmem:[#allocation5 + $0xa20] sm:$0xff]
    %v917 = vld [vmem:[#allocation5 + $0xa28] sm:$0xff]
    %v918 = vld [vmem:[#allocation5 + $0xa30] sm:$0xff]
    %v919 = vld [vmem:[#allocation5 + $0xa38] sm:$0xff]
    %v920 = vld [vmem:[#allocation5 + $0xa40] sm:$0xff]
    %v921 = vld [vmem:[#allocation5 + $0xa48] sm:$0xff]
    %v922 = vld [vmem:[#allocation5 + $0xa50] sm:$0xff]
    %v923 = vld [vmem:[#allocation5 + $0xa58] sm:$0xff]
    %v924 = vld [vmem:[#allocation5 + $0xa60] sm:$0xff]
    %v925 = vld [vmem:[#allocation5 + $0xa68] sm:$0xff]
    %v926 = vld [vmem:[#allocation5 + $0xa70] sm:$0xff]
    %v927 = vld [vmem:[#allocation5 + $0xa78] sm:$0xff]
    %v928 = vld [vmem:[#allocation5 + $0xa80] sm:$0xff]
    %v929 = vld [vmem:[#allocation5 + $0xa88] sm:$0xff]
    %v930 = vld [vmem:[#allocation5 + $0xa90] sm:$0xff]
    %v931 = vld [vmem:[#allocation5 + $0xa98] sm:$0xff]
    %v932 = vld [vmem:[#allocation5 + $0xaa0] sm:$0xff]
    %v933 = vld [vmem:[#allocation5 + $0xaa8] sm:$0xff]
    %v934 = vld [vmem:[#allocation5 + $0xab0] sm:$0xff]
    %v935 = vld [vmem:[#allocation5 + $0xab8] sm:$0xff]
    %v936 = vld [vmem:[#allocation5 + $0xac0] sm:$0xff]
    %v937 = vld [vmem:[#allocation5 + $0xac8] sm:$0xff]
    %v938 = vld [vmem:[#allocation5 + $0xad0] sm:$0xff]
    %v939 = vld [vmem:[#allocation5 + $0xad8] sm:$0xff]
    %v940 = vld [vmem:[#allocation5 + $0xae0] sm:$0xff]
    %v941 = vld [vmem:[#allocation5 + $0xae8] sm:$0xff]
    %v942 = vld [vmem:[#allocation5 + $0xaf0] sm:$0xff]
    %v943 = vld [vmem:[#allocation5 + $0xaf8] sm:$0xff]
    %v944 = vld [vmem:[#allocation5 + $0xb00] sm:$0xff]
    %v945 = vld [vmem:[#allocation5 + $0xb08] sm:$0xff]
    %v946 = vld [vmem:[#allocation5 + $0xb10] sm:$0xff]
    %v947 = vld [vmem:[#allocation5 + $0xb18] sm:$0xff]
    %v948 = vld [vmem:[#allocation5 + $0xb20] sm:$0xff]
    %v949 = vld [vmem:[#allocation5 + $0xb28] sm:$0xff]
    %v950 = vld [vmem:[#allocation5 + $0xb30] sm:$0xff]
    %v951 = vld [vmem:[#allocation5 + $0xb38] sm:$0xff]
    %v952 = vld [vmem:[#allocation5 + $0xb40] sm:$0xff]
    %v953 = vld [vmem:[#allocation5 + $0xb48] sm:$0xff]
    %v954 = vld [vmem:[#allocation5 + $0xb50] sm:$0xff]
    %v955 = vld [vmem:[#allocation5 + $0xb58] sm:$0xff]
    %v956 = vld [vmem:[#allocation5 + $0xb60] sm:$0xff]
    %v957 = vld [vmem:[#allocation5 + $0xb68] sm:$0xff]
    %v958 = vld [vmem:[#allocation5 + $0xb70] sm:$0xff]
    %v959 = vld [vmem:[#allocation5 + $0xb78] sm:$0xff]
    %v960 = vld [vmem:[#allocation5 + $0xb80] sm:$0xff]
    %v961 = vld [vmem:[#allocation5 + $0xb88] sm:$0xff]
    %v962 = vld [vmem:[#allocation5 + $0xb90] sm:$0xff]
    %v963 = vld [vmem:[#allocation5 + $0xb98] sm:$0xff]
    %v964 = vld [vmem:[#allocation5 + $0xba0] sm:$0xff]
    %v965 = vld [vmem:[#allocation5 + $0xba8] sm:$0xff]
    %v966 = vld [vmem:[#allocation5 + $0xbb0] sm:$0xff]
    %v967 = vld [vmem:[#allocation5 + $0xbb8] sm:$0xff]
    %v968 = vld [vmem:[#allocation5 + $0xbc0] sm:$0xff]
    %v969 = vld [vmem:[#allocation5 + $0xbc8] sm:$0xff]
    %v970 = vld [vmem:[#allocation5 + $0xbd0] sm:$0xff]
    %v971 = vld [vmem:[#allocation5 + $0xbd8] sm:$0xff]
    %v972 = vld [vmem:[#allocation5 + $0xbe0] sm:$0xff]
    %v973 = vld [vmem:[#allocation5 + $0xbe8] sm:$0xff]
    %v974 = vld [vmem:[#allocation5 + $0xbf0] sm:$0xff]
    %v975 = vld [vmem:[#allocation5 + $0xbf8] sm:$0xff]
    %v976 = vld [vmem:[#allocation5 + $0xc00] sm:$0xff]
    %v977 = vld [vmem:[#allocation5 + $0xc08] sm:$0xff]
    %v978 = vld [vmem:[#allocation5 + $0xc10] sm:$0xff]
    %v979 = vld [vmem:[#allocation5 + $0xc18] sm:$0xff]
    %v980 = vld [vmem:[#allocation5 + $0xc20] sm:$0xff]
    %v981 = vld [vmem:[#allocation5 + $0xc28] sm:$0xff]
    %v982 = vld [vmem:[#allocation5 + $0xc30] sm:$0xff]
    %v983 = vld [vmem:[#allocation5 + $0xc38] sm:$0xff]
    %v984 = vld [vmem:[#allocation5 + $0xc40] sm:$0xff]
    %v985 = vld [vmem:[#allocation5 + $0xc48] sm:$0xff]
    %v986 = vld [vmem:[#allocation5 + $0xc50] sm:$0xff]
    %v987 = vld [vmem:[#allocation5 + $0xc58] sm:$0xff]
    %v988 = vld [vmem:[#allocation5 + $0xc60] sm:$0xff]
    %v989 = vld [vmem:[#allocation5 + $0xc68] sm:$0xff]
    %v990 = vld [vmem:[#allocation5 + $0xc70] sm:$0xff]
    %v991 = vld [vmem:[#allocation5 + $0xc78] sm:$0xff]
    %v992 = vld [vmem:[#allocation5 + $0xc80] sm:$0xff]
    %v993 = vld [vmem:[#allocation5 + $0xc88] sm:$0xff]
    %v994 = vld [vmem:[#allocation5 + $0xc90] sm:$0xff]
    %v995 = vld [vmem:[#allocation5 + $0xc98] sm:$0xff]
    %v996 = vld [vmem:[#allocation5 + $0xca0] sm:$0xff]
    %v997 = vld [vmem:[#allocation5 + $0xca8] sm:$0xff]
    %v998 = vld [vmem:[#allocation5 + $0xcb0] sm:$0xff]
    %v999 = vld [vmem:[#allocation5 + $0xcb8] sm:$0xff]
    %v1000 = vld [vmem:[#allocation5 + $0xcc0] sm:$0xff]
    %v1001 = vld [vmem:[#allocation5 + $0xcc8] sm:$0xff]
    %v1002 = vld [vmem:[#allocation5 + $0xcd0] sm:$0xff]
    %v1003 = vld [vmem:[#allocation5 + $0xcd8] sm:$0xff]
    %v1004 = vld [vmem:[#allocation5 + $0xce0] sm:$0xff]
    %v1005 = vld [vmem:[#allocation5 + $0xce8] sm:$0xff]
    %v1006 = vld [vmem:[#allocation5 + $0xcf0] sm:$0xff]
    %v1007 = vld [vmem:[#allocation5 + $0xcf8] sm:$0xff]
    %v1008 = vld [vmem:[#allocation5 + $0xd00] sm:$0xff]
    %v1009 = vld [vmem:[#allocation5 + $0xd08] sm:$0xff]
    %v1010 = vld [vmem:[#allocation5 + $0xd10] sm:$0xff]
    %v1011 = vld [vmem:[#allocation5 + $0xd18] sm:$0xff]
    %v1012 = vld [vmem:[#allocation5 + $0xd20] sm:$0xff]
    %v1013 = vld [vmem:[#allocation5 + $0xd28] sm:$0xff]
    %v1014 = vld [vmem:[#allocation5 + $0xd30] sm:$0xff]
    %v1015 = vld [vmem:[#allocation5 + $0xd38] sm:$0xff]
    %v1016 = vld [vmem:[#allocation5 + $0xd40] sm:$0xff]
    %v1017 = vld [vmem:[#allocation5 + $0xd48] sm:$0xff]
    %v1018 = vld [vmem:[#allocation5 + $0xd50] sm:$0xff]
    %v1019 = vld [vmem:[#allocation5 + $0xd58] sm:$0xff]
    %v1020 = vld [vmem:[#allocation5 + $0xd60] sm:$0xff]
    %v1021 = vld [vmem:[#allocation5 + $0xd68] sm:$0xff]
    %v1022 = vld [vmem:[#allocation5 + $0xd70] sm:$0xff]
    %v1023 = vld [vmem:[#allocation5 + $0xd78] sm:$0xff]
    %v1024 = vld [vmem:[#allocation5 + $0xd80] sm:$0xff]
    %v1025 = vld [vmem:[#allocation5 + $0xd88] sm:$0xff]
    %v1026 = vld [vmem:[#allocation5 + $0xd90] sm:$0xff]
    %v1027 = vld [vmem:[#allocation5 + $0xd98] sm:$0xff]
    %v1028 = vld [vmem:[#allocation5 + $0xda0] sm:$0xff]
    %v1029 = vld [vmem:[#allocation5 + $0xda8] sm:$0xff]
    %v1030 = vld [vmem:[#allocation5 + $0xdb0] sm:$0xff]
    %v1031 = vld [vmem:[#allocation5 + $0xdb8] sm:$0xff]
    %v1032 = vld [vmem:[#allocation5 + $0xdc0] sm:$0xff]
    %v1033 = vld [vmem:[#allocation5 + $0xdc8] sm:$0xff]
    %v1034 = vld [vmem:[#allocation5 + $0xdd0] sm:$0xff]
    %v1035 = vld [vmem:[#allocation5 + $0xdd8] sm:$0xff]
    %v1036 = vld [vmem:[#allocation5 + $0xde0] sm:$0xff]
    %v1037 = vld [vmem:[#allocation5 + $0xde8] sm:$0xff]
    %v1038 = vld [vmem:[#allocation5 + $0xdf0] sm:$0xff]
    %v1039 = vld [vmem:[#allocation5 + $0xdf8] sm:$0xff]
    %v1040 = vld [vmem:[#allocation5 + $0xe00] sm:$0xff]
    %v1041 = vld [vmem:[#allocation5 + $0xe08] sm:$0xff]
    %v1042 = vld [vmem:[#allocation5 + $0xe10] sm:$0xff]
    %v1043 = vld [vmem:[#allocation5 + $0xe18] sm:$0xff]
    %v1044 = vld [vmem:[#allocation5 + $0xe20] sm:$0xff]
    %v1045 = vld [vmem:[#allocation5 + $0xe28] sm:$0xff]
    %v1046 = vld [vmem:[#allocation5 + $0xe30] sm:$0xff]
    %v1047 = vld [vmem:[#allocation5 + $0xe38] sm:$0xff]
    %v1048 = vld [vmem:[#allocation5 + $0xe40] sm:$0xff]
    %v1049 = vld [vmem:[#allocation5 + $0xe48] sm:$0xff]
    %v1050 = vld [vmem:[#allocation5 + $0xe50] sm:$0xff]
    %v1051 = vld [vmem:[#allocation5 + $0xe58] sm:$0xff]
    %v1052 = vld [vmem:[#allocation5 + $0xe60] sm:$0xff]
    %v1053 = vld [vmem:[#allocation5 + $0xe68] sm:$0xff]
    %v1054 = vld [vmem:[#allocation5 + $0xe70] sm:$0xff]
    %v1055 = vld [vmem:[#allocation5 + $0xe78] sm:$0xff]
    %v1056 = vld [vmem:[#allocation5 + $0xe80] sm:$0xff]
    %v1057 = vld [vmem:[#allocation5 + $0xe88] sm:$0xff]
    %v1058 = vld [vmem:[#allocation5 + $0xe90] sm:$0xff]
    %v1059 = vld [vmem:[#allocation5 + $0xe98] sm:$0xff]
    %v1060 = vld [vmem:[#allocation5 + $0xea0] sm:$0xff]
    %v1061 = vld [vmem:[#allocation5 + $0xea8] sm:$0xff]
    %v1062 = vld [vmem:[#allocation5 + $0xeb0] sm:$0xff]
    %v1063 = vld [vmem:[#allocation5 + $0xeb8] sm:$0xff]
    %v1064 = vld [vmem:[#allocation5 + $0xec0] sm:$0xff]
    %v1065 = vld [vmem:[#allocation5 + $0xec8] sm:$0xff]
    %v1066 = vld [vmem:[#allocation5 + $0xed0] sm:$0xff]
    %v1067 = vld [vmem:[#allocation5 + $0xed8] sm:$0xff]
    %v1068 = vld [vmem:[#allocation5 + $0xee0] sm:$0xff]
    %v1069 = vld [vmem:[#allocation5 + $0xee8] sm:$0xff]
    %v1070 = vld [vmem:[#allocation5 + $0xef0] sm:$0xff]
    %v1071 = vld [vmem:[#allocation5 + $0xef8] sm:$0xff]
    %v1072 = vld [vmem:[#allocation5 + $0xf00] sm:$0xff]
    %v1073 = vld [vmem:[#allocation5 + $0xf08] sm:$0xff]
    %v1074 = vld [vmem:[#allocation5 + $0xf10] sm:$0xff]
    %v1075 = vld [vmem:[#allocation5 + $0xf18] sm:$0xff]
    %v1076 = vld [vmem:[#allocation5 + $0xf20] sm:$0xff]
    %v1077 = vld [vmem:[#allocation5 + $0xf28] sm:$0xff]
    %v1078 = vld [vmem:[#allocation5 + $0xf30] sm:$0xff]
    %v1079 = vld [vmem:[#allocation5 + $0xf38] sm:$0xff]
    %v1080 = vld [vmem:[#allocation5 + $0xf40] sm:$0xff]
    %v1081 = vld [vmem:[#allocation5 + $0xf48] sm:$0xff]
    %v1082 = vld [vmem:[#allocation5 + $0xf50] sm:$0xff]
    %v1083 = vld [vmem:[#allocation5 + $0xf58] sm:$0xff]
    %v1084 = vld [vmem:[#allocation5 + $0xf60] sm:$0xff]
    %v1085 = vld [vmem:[#allocation5 + $0xf68] sm:$0xff]
    %v1086 = vld [vmem:[#allocation5 + $0xf70] sm:$0xff]
    %v1087 = vld [vmem:[#allocation5 + $0xf78] sm:$0xff]
    %v1088 = vld [vmem:[#allocation5 + $0xf80] sm:$0xff]
    %v1089 = vld [vmem:[#allocation5 + $0xf88] sm:$0xff]
    %v1090 = vld [vmem:[#allocation5 + $0xf90] sm:$0xff]
    %v1091 = vld [vmem:[#allocation5 + $0xf98] sm:$0xff]
    %v1092 = vld [vmem:[#allocation5 + $0xfa0] sm:$0xff]
    %v1093 = vld [vmem:[#allocation5 + $0xfa8] sm:$0xff]
    %v1094 = vld [vmem:[#allocation5 + $0xfb0] sm:$0xff]
    %v1095 = vld [vmem:[#allocation5 + $0xfb8] sm:$0xff]
    %v1096 = vld [vmem:[#allocation5 + $0xfc0] sm:$0xff]
    %v1097 = vld [vmem:[#allocation5 + $0xfc8] sm:$0xff]
    %v1098 = vld [vmem:[#allocation5 + $0xfd0] sm:$0xff]
    %v1099 = vld [vmem:[#allocation5 + $0xfd8] sm:$0xff]
    %v1100 = vld [vmem:[#allocation5 + $0xfe0] sm:$0xff]
    %v1101 = vld [vmem:[#allocation5 + $0xfe8] sm:$0xff]
    %v1102 = vld [vmem:[#allocation5 + $0xff0] sm:$0xff]
    %v1103 = vld [vmem:[#allocation5 + $0xff8] sm:$0xff]
    %1104 = vmatprep.subr.mxu0 %v593
    %1105 = vmatpush1.msra.mxu0 %v592
    %1106 = vmatprep.subr.mxu0 %v597
    %1107 = vmatpush1.msra.mxu0 %v596
    %1108 = vmatprep.subr.mxu0 %v601
    %1109 = vmatpush1.msra.mxu0 %v600
    %1110 = vmatprep.subr.mxu0 %v605
    %1111 = vmatpush1.msra.mxu0 %v604
    %1112 = vmatprep.subr.mxu0 %v609
    %1113 = vmatpush1.msra.mxu0 %v608
    %1114 = vmatprep.subr.mxu0 %v613
    %1115 = vmatpush1.msra.mxu0 %v612
    %1116 = vmatprep.subr.mxu0 %v617
    %1117 = vmatpush1.msra.mxu0 %v616
    %1118 = vmatprep.subr.mxu0 %v621
    %1119 = vmatpush1.msra.mxu0 %v620
    %1120 = vmatprep.subr.mxu0 %v625
    %1121 = vmatpush1.msra.mxu0 %v624
    %1122 = vmatprep.subr.mxu0 %v629
    %1123 = vmatpush1.msra.mxu0 %v628
    %1124 = vmatprep.subr.mxu0 %v633
    %1125 = vmatpush1.msra.mxu0 %v632
    %1126 = vmatprep.subr.mxu0 %v637
    %1127 = vmatpush1.msra.mxu0 %v636
    %1128 = vmatprep.subr.mxu0 %v641
    %1129 = vmatpush1.msra.mxu0 %v640
    %1130 = vmatprep.subr.mxu0 %v645
    %1131 = vmatpush1.msra.mxu0 %v644
    %1132 = vmatprep.subr.mxu0 %v649
    %1133 = vmatpush1.msra.mxu0 %v648
    %1134 = vmatprep.subr.mxu0 %v653
    %1135 = vmatpush1.msra.mxu0 %v652
    %1136 = vmatprep.subr.mxu0 %v657
    %1137 = vmatpush1.msra.mxu0 %v656
    %1138 = vmatprep.subr.mxu0 %v661
    %1139 = vmatpush1.msra.mxu0 %v660
    %1140 = vmatprep.subr.mxu0 %v665
    %1141 = vmatpush1.msra.mxu0 %v664
    %1142 = vmatprep.subr.mxu0 %v669
    %1143 = vmatpush1.msra.mxu0 %v668
    %1144 = vmatprep.subr.mxu0 %v673
    %1145 = vmatpush1.msra.mxu0 %v672
    %1146 = vmatprep.subr.mxu0 %v677
    %1147 = vmatpush1.msra.mxu0 %v676
    %1148 = vmatprep.subr.mxu0 %v681
    %1149 = vmatpush1.msra.mxu0 %v680
    %1150 = vmatprep.subr.mxu0 %v685
    %1151 = vmatpush1.msra.mxu0 %v684
    %1152 = vmatprep.subr.mxu0 %v689
    %1153 = vmatpush1.msra.mxu0 %v688
    %1154 = vmatprep.subr.mxu0 %v693
    %1155 = vmatpush1.msra.mxu0 %v692
    %1156 = vmatprep.subr.mxu0 %v697
    %1157 = vmatpush1.msra.mxu0 %v696
    %1158 = vmatprep.subr.mxu0 %v701
    %1159 = vmatpush1.msra.mxu0 %v700
    %1160 = vmatprep.subr.mxu0 %v705
    %1161 = vmatpush1.msra.mxu0 %v704
    %1162 = vmatprep.subr.mxu0 %v709
    %1163 = vmatpush1.msra.mxu0 %v708
    %1164 = vmatprep.subr.mxu0 %v713
    %1165 = vmatpush1.msra.mxu0 %v712
    %1166 = vmatprep.subr.mxu0 %v717
    %1167 = vmatpush1.msra.mxu0 %v716
    %1168 = vmatprep.mubr.f32.mxu0 %v209
    %1169 = vmatmul.mubr.f32.gmra.mrb[0].mxu0 %v208
    %v1170 = vpop.f32.mrb[0].mxu0
    %v1171 = vadd.f32 0.0, %v1170
    %v1172 = vpop.f32.mrb[0].mxu0
    %v1173 = vadd.f32 0.0, %v1172
    %1174 = vmatprep.mubr.f32.mxu0 %v217
    %1175 = vmatmul.mubr.f32.gmra.mrb[0].mxu0 %v216
    %v1176 = vpop.f32.mrb[0].mxu0
    %v1177 = vadd.f32 0.0, %v1176
    %v1178 = vpop.f32.mrb[0].mxu0
    %v1179 = vadd.f32 0.0, %v1178
    %1180 = vmatprep.mubr.f32.mxu0 %v225
    %1181 = vmatmul.mubr.f32.gmra.mrb[0].mxu0 %v224
    %v1182 = vpop.f32.mrb[0].mxu0
    %v1183 = vadd.f32 0.0, %v1182
    %v1184 = vpop.f32.mrb[0].mxu0
    %v1185 = vadd.f32 0.0, %v1184
    %1186 = vmatprep.mubr.f32.mxu0 %v233
    %1187 = vmatmul.mubr.f32.gmra.mrb[0].mxu0 %v232
    %v1188 = vpop.f32.mrb[0].mxu0
    %v1189 = vadd.f32 0.0, %v1188
    %v1190 = vpop.f32.mrb[0].mxu0
    %v1191 = vadd.f32 0.0, %v1190
    %1192 = vmatprep.mubr.f32.mxu0 %v241
    %1193 = vmatmul.mubr.f32.gmra.mrb[0].mxu0 %v240
    %v1194 = vpop.f32.mrb[0].mxu0
    %v1195 = vadd.f32 0.0, %v1194
    %v1196 = vpop.f32.mrb[0].mxu0
    %v1197 = vadd.f32 0.0, %v1196
    %1198 = vmatprep.mubr.f32.mxu0 %v249
    %1199 = vmatmul.mubr.f32.gmra.mrb[0].mxu0 %v248
    %v1200 = vpop.f32.mrb[0].mxu0
    %v1201 = vadd.f32 0.0, %v1200
    %v1202 = vpop.f32.mrb[0].mxu0
    %v1203 = vadd.f32 0.0, %v1202
    %1204 = vmatprep.mubr.f32.mxu0 %v257
    %1205 = vmatmul.mubr.f32.gmra.mrb[0].mxu0 %v256
    %v1206 = vpop.f32.mrb[0].mxu0
    %v1207 = vadd.f32 0.0, %v1206
    %v1208 = vpop.f32.mrb[0].mxu0
    %v1209 = vadd.f32 0.0, %v1208
    %1210 = vmatprep.mubr.f32.mxu0 %v265
    %1211 = vmatmul.mubr.f32.gmra.mrb[0].mxu0 %v264
    %v1212 = vpop.f32.mrb[0].mxu0
    %v1213 = vadd.f32 0.0, %v1212
    %v1214 = vpop.f32.mrb[0].mxu0
    %v1215 = vadd.f32 0.0, %v1214
    %1216 = vmatprep.mubr.f32.mxu0 %v273
    %1217 = vmatmul.mubr.f32.gmra.mrb[0].mxu0 %v272
    %v1218 = vpop.f32.mrb[0].mxu0
    %v1219 = vadd.f32 0.0, %v1218
    %v1220 = vpop.f32.mrb[0].mxu0
    %v1221 = vadd.f32 0.0, %v1220
    %1222 = vmatprep.mubr.f32.mxu0 %v281
    %1223 = vmatmul.mubr.f32.gmra.mrb[0].mxu0 %v280
    %v1224 = vpop.f32.mrb[0].mxu0
    %v1225 = vadd.f32 0.0, %v1224
    %v1226 = vpop.f32.mrb[0].mxu0
    %v1227 = vadd.f32 0.0, %v1226
    %1228 = vmatprep.mubr.f32.mxu0 %v289
    %1229 = vmatmul.mubr.f32.gmra.mrb[0].mxu0 %v288
    %v1230 = vpop.f32.mrb[0].mxu0
    %v1231 = vadd.f32 0.0, %v1230
    %v1232 = vpop.f32.mrb[0].mxu0
    %v1233 = vadd.f32 0.0, %v1232
    %1234 = vmatprep.mubr.f32.mxu0 %v297
    %1235 = vmatmul.mubr.f32.gmra.mrb[0].mxu0 %v296
    %v1236 = vpop.f32.mrb[0].mxu0
    %v1237 = vadd.f32 0.0, %v1236
    %v1238 = vpop.f32.mrb[0].mxu0
    %v1239 = vadd.f32 0.0, %v1238
    %1240 = vmatprep.mubr.f32.mxu0 %v305
    %1241 = vmatmul.mubr.f32.gmra.mrb[0].mxu0 %v304
    %v1242 = vpop.f32.mrb[0].mxu0
    %v1243 = vadd.f32 0.0, %v1242
    %v1244 = vpop.f32.mrb[0].mxu0
    %v1245 = vadd.f32 0.0, %v1244
    %1246 = vmatprep.mubr.f32.mxu0 %v313
    %1247 = vmatmul.mubr.f32.gmra.mrb[0].mxu0 %v312
    %v1248 = vpop.f32.mrb[0].mxu0
    %v1249 = vadd.f32 0.0, %v1248
    %v1250 = vpop.f32.mrb[0].mxu0
    %v1251 = vadd.f32 0.0, %v1250
    %1252 = vmatprep.mubr.f32.mxu0 %v321
    %1253 = vmatmul.mubr.f32.gmra.mrb[0].mxu0 %v320
    %v1254 = vpop.f32.mrb[0].mxu0
    %v1255 = vadd.f32 0.0, %v1254
    %v1256 = vpop.f32.mrb[0].mxu0
    %v1257 = vadd.f32 0.0, %v1256
    %1258 = vmatprep.mubr.f32.mxu0 %v329
    %1259 = vmatmul.mubr.f32.gmra.mrb[0].mxu0 %v328
    %v1260 = vpop.f32.mrb[0].mxu0
    %v1261 = vadd.f32 0.0, %v1260
    %v1262 = vpop.f32.mrb[0].mxu0
    %v1263 = vadd.f32 0.0, %v1262
    %1264 = vmatprep.mubr.f32.mxu0 %v337
    %1265 = vmatmul.mubr.f32.gmra.mrb[0].mxu0 %v336
    %v1266 = vpop.f32.mrb[0].mxu0
    %v1267 = vadd.f32 0.0, %v1266
    %v1268 = vpop.f32.mrb[0].mxu0
    %v1269 = vadd.f32 0.0, %v1268
    %1270 = vmatprep.mubr.f32.mxu0 %v345
    %1271 = vmatmul.mubr.f32.gmra.mrb[0].mxu0 %v344
    %v1272 = vpop.f32.mrb[0].mxu0
    %v1273 = vadd.f32 0.0, %v1272
    %v1274 = vpop.f32.mrb[0].mxu0
    %v1275 = vadd.f32 0.0, %v1274
    %1276 = vmatprep.mubr.f32.mxu0 %v353
    %1277 = vmatmul.mubr.f32.gmra.mrb[0].mxu0 %v352
    %v1278 = vpop.f32.mrb[0].mxu0
    %v1279 = vadd.f32 0.0, %v1278
    %v1280 = vpop.f32.mrb[0].mxu0
    %v1281 = vadd.f32 0.0, %v1280
    %1282 = vmatprep.mubr.f32.mxu0 %v361
    %1283 = vmatmul.mubr.f32.gmra.mrb[0].mxu0 %v360
    %v1284 = vpop.f32.mrb[0].mxu0
    %v1285 = vadd.f32 0.0, %v1284
    %v1286 = vpop.f32.mrb[0].mxu0
    %v1287 = vadd.f32 0.0, %v1286
    %1288 = vmatprep.mubr.f32.mxu0 %v369
    %1289 = vmatmul.mubr.f32.gmra.mrb[0].mxu0 %v368
    %v1290 = vpop.f32.mrb[0].mxu0
    %v1291 = vadd.f32 0.0, %v1290
    %v1292 = vpop.f32.mrb[0].mxu0
    %v1293 = vadd.f32 0.0, %v1292
    %1294 = vmatprep.mubr.f32.mxu0 %v377
    %1295 = vmatmul.mubr.f32.gmra.mrb[0].mxu0 %v376
    %v1296 = vpop.f32.mrb[0].mxu0
    %v1297 = vadd.f32 0.0, %v1296
    %v1298 = vpop.f32.mrb[0].mxu0
    %v1299 = vadd.f32 0.0, %v1298
    %1300 = vmatprep.mubr.f32.mxu0 %v385
    %1301 = vmatmul.mubr.f32.gmra.mrb[0].mxu0 %v384
    %v1302 = vpop.f32.mrb[0].mxu0
    %v1303 = vadd.f32 0.0, %v1302
    %v1304 = vpop.f32.mrb[0].mxu0
    %v1305 = vadd.f32 0.0, %v1304
    %1306 = vmatprep.mubr.f32.mxu0 %v393
    %1307 = vmatmul.mubr.f32.gmra.mrb[0].mxu0 %v392
    %v1308 = vpop.f32.mrb[0].mxu0
    %v1309 = vadd.f32 0.0, %v1308
    %v1310 = vpop.f32.mrb[0].mxu0
    %v1311 = vadd.f32 0.0, %v1310
    %1312 = vmatprep.mubr.f32.mxu0 %v401
    %1313 = vmatmul.mubr.f32.gmra.mrb[0].mxu0 %v400
    %v1314 = vpop.f32.mrb[0].mxu0
    %v1315 = vadd.f32 0.0, %v1314
    %v1316 = vpop.f32.mrb[0].mxu0
    %v1317 = vadd.f32 0.0, %v1316
    %1318 = vmatprep.mubr.f32.mxu0 %v409
    %1319 = vmatmul.mubr.f32.gmra.mrb[0].mxu0 %v408
    %v1320 = vpop.f32.mrb[0].mxu0
    %v1321 = vadd.f32 0.0, %v1320
    %v1322 = vpop.f32.mrb[0].mxu0
    %v1323 = vadd.f32 0.0, %v1322
    %1324 = vmatprep.mubr.f32.mxu0 %v417
    %1325 = vmatmul.mubr.f32.gmra.mrb[0].mxu0 %v416
    %v1326 = vpop.f32.mrb[0].mxu0
    %v1327 = vadd.f32 0.0, %v1326
    %v1328 = vpop.f32.mrb[0].mxu0
    %v1329 = vadd.f32 0.0, %v1328
    %1330 = vmatprep.mubr.f32.mxu0 %v425
    %1331 = vmatmul.mubr.f32.gmra.mrb[0].mxu0 %v424
    %v1332 = vpop.f32.mrb[0].mxu0
    %v1333 = vadd.f32 0.0, %v1332
    %v1334 = vpop.f32.mrb[0].mxu0
    %v1335 = vadd.f32 0.0, %v1334
    %1336 = vmatprep.mubr.f32.mxu0 %v433
    %1337 = vmatmul.mubr.f32.gmra.mrb[0].mxu0 %v432
    %v1338 = vpop.f32.mrb[0].mxu0
    %v1339 = vadd.f32 0.0, %v1338
    %v1340 = vpop.f32.mrb[0].mxu0
    %v1341 = vadd.f32 0.0, %v1340
    %1342 = vmatprep.mubr.f32.mxu0 %v441
    %1343 = vmatmul.mubr.f32.gmra.mrb[0].mxu0 %v440
    %v1344 = vpop.f32.mrb[0].mxu0
    %v1345 = vadd.f32 0.0, %v1344
    %v1346 = vpop.f32.mrb[0].mxu0
    %v1347 = vadd.f32 0.0, %v1346
    %1348 = vmatprep.mubr.f32.mxu0 %v449
    %1349 = vmatmul.mubr.f32.gmra.mrb[0].mxu0 %v448
    %v1350 = vpop.f32.mrb[0].mxu0
    %v1351 = vadd.f32 0.0, %v1350
    %v1352 = vpop.f32.mrb[0].mxu0
    %v1353 = vadd.f32 0.0, %v1352
    %1354 = vmatprep.mubr.f32.mxu0 %v457
    %1355 = vmatmul.mubr.f32.gmra.mrb[0].mxu0 %v456
    %v1356 = vpop.f32.mrb[0].mxu0
    %v1357 = vadd.f32 0.0, %v1356
    %v1358 = vpop.f32.mrb[0].mxu0
    %v1359 = vadd.f32 0.0, %v1358
    %1360 = vdwg.mxu0
    %1361 = vmatprep.subr.mxu0 %v721
    %1362 = vmatpush1.msra.mxu0 %v720
    %1363 = vmatprep.subr.mxu0 %v725
    %1364 = vmatpush1.msra.mxu0 %v724
    %1365 = vmatprep.subr.mxu0 %v729
    %1366 = vmatpush1.msra.mxu0 %v728
    %1367 = vmatprep.subr.mxu0 %v733
    %1368 = vmatpush1.msra.mxu0 %v732
    %1369 = vmatprep.subr.mxu0 %v737
    %1370 = vmatpush1.msra.mxu0 %v736
    %1371 = vmatprep.subr.mxu0 %v741
    %1372 = vmatpush1.msra.mxu0 %v740
    %1373 = vmatprep.subr.mxu0 %v745
    %1374 = vmatpush1.msra.mxu0 %v744
    %1375 = vmatprep.subr.mxu0 %v749
    %1376 = vmatpush1.msra.mxu0 %v748
    %1377 = vmatprep.subr.mxu0 %v753
    %1378 = vmatpush1.msra.mxu0 %v752
    %1379 = vmatprep.subr.mxu0 %v757
    %1380 = vmatpush1.msra.mxu0 %v756
    %1381 = vmatprep.subr.mxu0 %v761
    %1382 = vmatpush1.msra.mxu0 %v760
    %1383 = vmatprep.subr.mxu0 %v765
    %1384 = vmatpush1.msra.mxu0 %v764
    %1385 = vmatprep.subr.mxu0 %v769
    %1386 = vmatpush1.msra.mxu0 %v768
    %1387 = vmatprep.subr.mxu0 %v773
    %1388 = vmatpush1.msra.mxu0 %v772
    %1389 = vmatprep.subr.mxu0 %v777
    %1390 = vmatpush1.msra.mxu0 %v776
    %1391 = vmatprep.subr.mxu0 %v781
    %1392 = vmatpush1.msra.mxu0 %v780
    %1393 = vmatprep.subr.mxu0 %v785
    %1394 = vmatpush1.msra.mxu0 %v784
    %1395 = vmatprep.subr.mxu0 %v789
    %1396 = vmatpush1.msra.mxu0 %v788
    %1397 = vmatprep.subr.mxu0 %v793
    %1398 = vmatpush1.msra.mxu0 %v792
    %1399 = vmatprep.subr.mxu0 %v797
    %1400 = vmatpush1.msra.mxu0 %v796
    %1401 = vmatprep.subr.mxu0 %v801
    %1402 = vmatpush1.msra.mxu0 %v800
    %1403 = vmatprep.subr.mxu0 %v805
    %1404 = vmatpush1.msra.mxu0 %v804
    %1405 = vmatprep.subr.mxu0 %v809
    %1406 = vmatpush1.msra.mxu0 %v808
    %1407 = vmatprep.subr.mxu0 %v813
    %1408 = vmatpush1.msra.mxu0 %v812
    %1409 = vmatprep.subr.mxu0 %v817
    %1410 = vmatpush1.msra.mxu0 %v816
    %1411 = vmatprep.subr.mxu0 %v821
    %1412 = vmatpush1.msra.mxu0 %v820
    %1413 = vmatprep.subr.mxu0 %v825
    %1414 = vmatpush1.msra.mxu0 %v824
    %1415 = vmatprep.subr.mxu0 %v829
    %1416 = vmatpush1.msra.mxu0 %v828
    %1417 = vmatprep.subr.mxu0 %v833
    %1418 = vmatpush1.msra.mxu0 %v832
    %1419 = vmatprep.subr.mxu0 %v837
    %1420 = vmatpush1.msra.mxu0 %v836
    %1421 = vmatprep.subr.mxu0 %v841
    %1422 = vmatpush1.msra.mxu0 %v840
    %1423 = vmatprep.subr.mxu0 %v845
    %1424 = vmatpush1.msra.mxu0 %v844
    %1425 = vmatprep.mubr.f32.mxu0 %v211
    %1426 = vmatmul.mubr.f32.gmra.mrb[0].mxu0 %v210
    %v1427 = vpop.f32.mrb[0].mxu0
    %v1428 = vadd.f32 %v1171, %v1427
    %v1429 = vpop.f32.mrb[0].mxu0
    %v1430 = vadd.f32 %v1173, %v1429
    %1431 = vmatprep.mubr.f32.mxu0 %v219
    %1432 = vmatmul.mubr.f32.gmra.mrb[0].mxu0 %v218
    %v1433 = vpop.f32.mrb[0].mxu0
    %v1434 = vadd.f32 %v1177, %v1433
    %v1435 = vpop.f32.mrb[0].mxu0
    %v1436 = vadd.f32 %v1179, %v1435
    %1437 = vmatprep.mubr.f32.mxu0 %v227
    %1438 = vmatmul.mubr.f32.gmra.mrb[0].mxu0 %v226
    %v1439 = vpop.f32.mrb[0].mxu0
    %v1440 = vadd.f32 %v1183, %v1439
    %v1441 = vpop.f32.mrb[0].mxu0
    %v1442 = vadd.f32 %v1185, %v1441
    %1443 = vmatprep.mubr.f32.mxu0 %v235
    %1444 = vmatmul.mubr.f32.gmra.mrb[0].mxu0 %v234
    %v1445 = vpop.f32.mrb[0].mxu0
    %v1446 = vadd.f32 %v1189, %v1445
    %v1447 = vpop.f32.mrb[0].mxu0
    %v1448 = vadd.f32 %v1191, %v1447
    %1449 = vmatprep.mubr.f32.mxu0 %v243
    %1450 = vmatmul.mubr.f32.gmra.mrb[0].mxu0 %v242
    %v1451 = vpop.f32.mrb[0].mxu0
    %v1452 = vadd.f32 %v1195, %v1451
    %v1453 = vpop.f32.mrb[0].mxu0
    %v1454 = vadd.f32 %v1197, %v1453
    %1455 = vmatprep.mubr.f32.mxu0 %v251
    %1456 = vmatmul.mubr.f32.gmra.mrb[0].mxu0 %v250
    %v1457 = vpop.f32.mrb[0].mxu0
    %v1458 = vadd.f32 %v1201, %v1457
    %v1459 = vpop.f32.mrb[0].mxu0
    %v1460 = vadd.f32 %v1203, %v1459
    %1461 = vmatprep.mubr.f32.mxu0 %v259
    %1462 = vmatmul.mubr.f32.gmra.mrb[0].mxu0 %v258
    %v1463 = vpop.f32.mrb[0].mxu0
    %v1464 = vadd.f32 %v1207, %v1463
    %v1465 = vpop.f32.mrb[0].mxu0
    %v1466 = vadd.f32 %v1209, %v1465
    %1467 = vmatprep.mubr.f32.mxu0 %v267
    %1468 = vmatmul.mubr.f32.gmra.mrb[0].mxu0 %v266
    %v1469 = vpop.f32.mrb[0].mxu0
    %v1470 = vadd.f32 %v1213, %v1469
    %v1471 = vpop.f32.mrb[0].mxu0
    %v1472 = vadd.f32 %v1215, %v1471
    %1473 = vmatprep.mubr.f32.mxu0 %v275
    %1474 = vmatmul.mubr.f32.gmra.mrb[0].mxu0 %v274
    %v1475 = vpop.f32.mrb[0].mxu0
    %v1476 = vadd.f32 %v1219, %v1475
    %v1477 = vpop.f32.mrb[0].mxu0
    %v1478 = vadd.f32 %v1221, %v1477
    %1479 = vmatprep.mubr.f32.mxu0 %v283
    %1480 = vmatmul.mubr.f32.gmra.mrb[0].mxu0 %v282
    %v1481 = vpop.f32.mrb[0].mxu0
    %v1482 = vadd.f32 %v1225, %v1481
    %v1483 = vpop.f32.mrb[0].mxu0
    %v1484 = vadd.f32 %v1227, %v1483
    %1485 = vmatprep.mubr.f32.mxu0 %v291
    %1486 = vmatmul.mubr.f32.gmra.mrb[0].mxu0 %v290
    %v1487 = vpop.f32.mrb[0].mxu0
    %v1488 = vadd.f32 %v1231, %v1487
    %v1489 = vpop.f32.mrb[0].mxu0
    %v1490 = vadd.f32 %v1233, %v1489
    %1491 = vmatprep.mubr.f32.mxu0 %v299
    %1492 = vmatmul.mubr.f32.gmra.mrb[0].mxu0 %v298
    %v1493 = vpop.f32.mrb[0].mxu0
    %v1494 = vadd.f32 %v1237, %v1493
    %v1495 = vpop.f32.mrb[0].mxu0
    %v1496 = vadd.f32 %v1239, %v1495
    %1497 = vmatprep.mubr.f32.mxu0 %v307
    %1498 = vmatmul.mubr.f32.gmra.mrb[0].mxu0 %v306
    %v1499 = vpop.f32.mrb[0].mxu0
    %v1500 = vadd.f32 %v1243, %v1499
    %v1501 = vpop.f32.mrb[0].mxu0
    %v1502 = vadd.f32 %v1245, %v1501
    %1503 = vmatprep.mubr.f32.mxu0 %v315
    %1504 = vmatmul.mubr.f32.gmra.mrb[0].mxu0 %v314
    %v1505 = vpop.f32.mrb[0].mxu0
    %v1506 = vadd.f32 %v1249, %v1505
    %v1507 = vpop.f32.mrb[0].mxu0
    %v1508 = vadd.f32 %v1251, %v1507
    %1509 = vmatprep.mubr.f32.mxu0 %v323
    %1510 = vmatmul.mubr.f32.gmra.mrb[0].mxu0 %v322
    %v1511 = vpop.f32.mrb[0].mxu0
    %v1512 = vadd.f32 %v1255, %v1511
    %v1513 = vpop.f32.mrb[0].mxu0
    %v1514 = vadd.f32 %v1257, %v1513
    %1515 = vmatprep.mubr.f32.mxu0 %v331
    %1516 = vmatmul.mubr.f32.gmra.mrb[0].mxu0 %v330
    %v1517 = vpop.f32.mrb[0].mxu0
    %v1518 = vadd.f32 %v1261, %v1517
    %v1519 = vpop.f32.mrb[0].mxu0
    %v1520 = vadd.f32 %v1263, %v1519
    %1521 = vmatprep.mubr.f32.mxu0 %v339
    %1522 = vmatmul.mubr.f32.gmra.mrb[0].mxu0 %v338
    %v1523 = vpop.f32.mrb[0].mxu0
    %v1524 = vadd.f32 %v1267, %v1523
    %v1525 = vpop.f32.mrb[0].mxu0
    %v1526 = vadd.f32 %v1269, %v1525
    %1527 = vmatprep.mubr.f32.mxu0 %v347
    %1528 = vmatmul.mubr.f32.gmra.mrb[0].mxu0 %v346
    %v1529 = vpop.f32.mrb[0].mxu0
    %v1530 = vadd.f32 %v1273, %v1529
    %v1531 = vpop.f32.mrb[0].mxu0
    %v1532 = vadd.f32 %v1275, %v1531
    %1533 = vmatprep.mubr.f32.mxu0 %v355
    %1534 = vmatmul.mubr.f32.gmra.mrb[0].mxu0 %v354
    %v1535 = vpop.f32.mrb[0].mxu0
    %v1536 = vadd.f32 %v1279, %v1535
    %v1537 = vpop.f32.mrb[0].mxu0
    %v1538 = vadd.f32 %v1281, %v1537
    %1539 = vmatprep.mubr.f32.mxu0 %v363
    %1540 = vmatmul.mubr.f32.gmra.mrb[0].mxu0 %v362
    %v1541 = vpop.f32.mrb[0].mxu0
    %v1542 = vadd.f32 %v1285, %v1541
    %v1543 = vpop.f32.mrb[0].mxu0
    %v1544 = vadd.f32 %v1287, %v1543
    %1545 = vmatprep.mubr.f32.mxu0 %v371
    %1546 = vmatmul.mubr.f32.gmra.mrb[0].mxu0 %v370
    %v1547 = vpop.f32.mrb[0].mxu0
    %v1548 = vadd.f32 %v1291, %v1547
    %v1549 = vpop.f32.mrb[0].mxu0
    %v1550 = vadd.f32 %v1293, %v1549
    %1551 = vmatprep.mubr.f32.mxu0 %v379
    %1552 = vmatmul.mubr.f32.gmra.mrb[0].mxu0 %v378
    %v1553 = vpop.f32.mrb[0].mxu0
    %v1554 = vadd.f32 %v1297, %v1553
    %v1555 = vpop.f32.mrb[0].mxu0
    %v1556 = vadd.f32 %v1299, %v1555
    %1557 = vmatprep.mubr.f32.mxu0 %v387
    %1558 = vmatmul.mubr.f32.gmra.mrb[0].mxu0 %v386
    %v1559 = vpop.f32.mrb[0].mxu0
    %v1560 = vadd.f32 %v1303, %v1559
    %v1561 = vpop.f32.mrb[0].mxu0
    %v1562 = vadd.f32 %v1305, %v1561
    %1563 = vmatprep.mubr.f32.mxu0 %v395
    %1564 = vmatmul.mubr.f32.gmra.mrb[0].mxu0 %v394
    %v1565 = vpop.f32.mrb[0].mxu0
    %v1566 = vadd.f32 %v1309, %v1565
    %v1567 = vpop.f32.mrb[0].mxu0
    %v1568 = vadd.f32 %v1311, %v1567
    %1569 = vmatprep.mubr.f32.mxu0 %v403
    %1570 = vmatmul.mubr.f32.gmra.mrb[0].mxu0 %v402
    %v1571 = vpop.f32.mrb[0].mxu0
    %v1572 = vadd.f32 %v1315, %v1571
    %v1573 = vpop.f32.mrb[0].mxu0
    %v1574 = vadd.f32 %v1317, %v1573
    %1575 = vmatprep.mubr.f32.mxu0 %v411
    %1576 = vmatmul.mubr.f32.gmra.mrb[0].mxu0 %v410
    %v1577 = vpop.f32.mrb[0].mxu0
    %v1578 = vadd.f32 %v1321, %v1577
    %v1579 = vpop.f32.mrb[0].mxu0
    %v1580 = vadd.f32 %v1323, %v1579
    %1581 = vmatprep.mubr.f32.mxu0 %v419
    %1582 = vmatmul.mubr.f32.gmra.mrb[0].mxu0 %v418
    %v1583 = vpop.f32.mrb[0].mxu0
    %v1584 = vadd.f32 %v1327, %v1583
    %v1585 = vpop.f32.mrb[0].mxu0
    %v1586 = vadd.f32 %v1329, %v1585
    %1587 = vmatprep.mubr.f32.mxu0 %v427
    %1588 = vmatmul.mubr.f32.gmra.mrb[0].mxu0 %v426
    %v1589 = vpop.f32.mrb[0].mxu0
    %v1590 = vadd.f32 %v1333, %v1589
    %v1591 = vpop.f32.mrb[0].mxu0
    %v1592 = vadd.f32 %v1335, %v1591
    %1593 = vmatprep.mubr.f32.mxu0 %v435
    %1594 = vmatmul.mubr.f32.gmra.mrb[0].mxu0 %v434
    %v1595 = vpop.f32.mrb[0].mxu0
    %v1596 = vadd.f32 %v1339, %v1595
    %v1597 = vpop.f32.mrb[0].mxu0
    %v1598 = vadd.f32 %v1341, %v1597
    %1599 = vmatprep.mubr.f32.mxu0 %v443
    %1600 = vmatmul.mubr.f32.gmra.mrb[0].mxu0 %v442
    %v1601 = vpop.f32.mrb[0].mxu0
    %v1602 = vadd.f32 %v1345, %v1601
    %v1603 = vpop.f32.mrb[0].mxu0
    %v1604 = vadd.f32 %v1347, %v1603
    %1605 = vmatprep.mubr.f32.mxu0 %v451
    %1606 = vmatmul.mubr.f32.gmra.mrb[0].mxu0 %v450
    %v1607 = vpop.f32.mrb[0].mxu0
    %v1608 = vadd.f32 %v1351, %v1607
    %v1609 = vpop.f32.mrb[0].mxu0
    %v1610 = vadd.f32 %v1353, %v1609
    %1611 = vmatprep.mubr.f32.mxu0 %v459
    %1612 = vmatmul.mubr.f32.gmra.mrb[0].mxu0 %v458
    %v1613 = vpop.f32.mrb[0].mxu0
    %v1614 = vadd.f32 %v1357, %v1613
    %v1615 = vpop.f32.mrb[0].mxu0
    %v1616 = vadd.f32 %v1359, %v1615
    %1617 = vdwg.mxu0
    %1618 = vmatprep.subr.mxu0 %v849
    %1619 = vmatpush1.msra.mxu0 %v848
    %1620 = vmatprep.subr.mxu0 %v853
    %1621 = vmatpush1.msra.mxu0 %v852
    %1622 = vmatprep.subr.mxu0 %v857
    %1623 = vmatpush1.msra.mxu0 %v856
    %1624 = vmatprep.subr.mxu0 %v861
    %1625 = vmatpush1.msra.mxu0 %v860
    %1626 = vmatprep.subr.mxu0 %v865
    %1627 = vmatpush1.msra.mxu0 %v864
    %1628 = vmatprep.subr.mxu0 %v869
    %1629 = vmatpush1.msra.mxu0 %v868
    %1630 = vmatprep.subr.mxu0 %v873
    %1631 = vmatpush1.msra.mxu0 %v872
    %1632 = vmatprep.subr.mxu0 %v877
    %1633 = vmatpush1.msra.mxu0 %v876
    %1634 = vmatprep.subr.mxu0 %v881
    %1635 = vmatpush1.msra.mxu0 %v880
    %1636 = vmatprep.subr.mxu0 %v885
    %1637 = vmatpush1.msra.mxu0 %v884
    %1638 = vmatprep.subr.mxu0 %v889
    %1639 = vmatpush1.msra.mxu0 %v888
    %1640 = vmatprep.subr.mxu0 %v893
    %1641 = vmatpush1.msra.mxu0 %v892
    %1642 = vmatprep.subr.mxu0 %v897
    %1643 = vmatpush1.msra.mxu0 %v896
    %1644 = vmatprep.subr.mxu0 %v901
    %1645 = vmatpush1.msra.mxu0 %v900
    %1646 = vmatprep.subr.mxu0 %v905
    %1647 = vmatpush1.msra.mxu0 %v904
    %1648 = vmatprep.subr.mxu0 %v909
    %1649 = vmatpush1.msra.mxu0 %v908
    %1650 = vmatprep.subr.mxu0 %v913
    %1651 = vmatpush1.msra.mxu0 %v912
    %1652 = vmatprep.subr.mxu0 %v917
    %1653 = vmatpush1.msra.mxu0 %v916
    %1654 = vmatprep.subr.mxu0 %v921
    %1655 = vmatpush1.msra.mxu0 %v920
    %1656 = vmatprep.subr.mxu0 %v925
    %1657 = vmatpush1.msra.mxu0 %v924
    %1658 = vmatprep.subr.mxu0 %v929
    %1659 = vmatpush1.msra.mxu0 %v928
    %1660 = vmatprep.subr.mxu0 %v933
    %1661 = vmatpush1.msra.mxu0 %v932
    %1662 = vmatprep.subr.mxu0 %v937
    %1663 = vmatpush1.msra.mxu0 %v936
    %1664 = vmatprep.subr.mxu0 %v941
    %1665 = vmatpush1.msra.mxu0 %v940
    %1666 = vmatprep.subr.mxu0 %v945
    %1667 = vmatpush1.msra.mxu0 %v944
    %1668 = vmatprep.subr.mxu0 %v949
    %1669 = vmatpush1.msra.mxu0 %v948
    %1670 = vmatprep.subr.mxu0 %v953
    %1671 = vmatpush1.msra.mxu0 %v952
    %1672 = vmatprep.subr.mxu0 %v957
    %1673 = vmatpush1.msra.mxu0 %v956
    %1674 = vmatprep.subr.mxu0 %v961
    %1675 = vmatpush1.msra.mxu0 %v960
    %1676 = vmatprep.subr.mxu0 %v965
    %1677 = vmatpush1.msra.mxu0 %v964
    %1678 = vmatprep.subr.mxu0 %v969
    %1679 = vmatpush1.msra.mxu0 %v968
    %1680 = vmatprep.subr.mxu0 %v973
    %1681 = vmatpush1.msra.mxu0 %v972
    %1682 = vmatprep.mubr.f32.mxu0 %v213
    %1683 = vmatmul.mubr.f32.gmra.mrb[0].mxu0 %v212
    %v1684 = vpop.f32.mrb[0].mxu0
    %v1685 = vadd.f32 %v1428, %v1684
    %v1686 = vpop.f32.mrb[0].mxu0
    %v1687 = vadd.f32 %v1430, %v1686
    %1688 = vmatprep.mubr.f32.mxu0 %v221
    %1689 = vmatmul.mubr.f32.gmra.mrb[0].mxu0 %v220
    %v1690 = vpop.f32.mrb[0].mxu0
    %v1691 = vadd.f32 %v1434, %v1690
    %v1692 = vpop.f32.mrb[0].mxu0
    %v1693 = vadd.f32 %v1436, %v1692
    %1694 = vmatprep.mubr.f32.mxu0 %v229
    %1695 = vmatmul.mubr.f32.gmra.mrb[0].mxu0 %v228
    %v1696 = vpop.f32.mrb[0].mxu0
    %v1697 = vadd.f32 %v1440, %v1696
    %v1698 = vpop.f32.mrb[0].mxu0
    %v1699 = vadd.f32 %v1442, %v1698
    %1700 = vmatprep.mubr.f32.mxu0 %v237
    %1701 = vmatmul.mubr.f32.gmra.mrb[0].mxu0 %v236
    %v1702 = vpop.f32.mrb[0].mxu0
    %v1703 = vadd.f32 %v1446, %v1702
    %v1704 = vpop.f32.mrb[0].mxu0
    %v1705 = vadd.f32 %v1448, %v1704
    %1706 = vmatprep.mubr.f32.mxu0 %v245
    %1707 = vmatmul.mubr.f32.gmra.mrb[0].mxu0 %v244
    %v1708 = vpop.f32.mrb[0].mxu0
    %v1709 = vadd.f32 %v1452, %v1708
    %v1710 = vpop.f32.mrb[0].mxu0
    %v1711 = vadd.f32 %v1454, %v1710
    %1712 = vmatprep.mubr.f32.mxu0 %v253
    %1713 = vmatmul.mubr.f32.gmra.mrb[0].mxu0 %v252
    %v1714 = vpop.f32.mrb[0].mxu0
    %v1715 = vadd.f32 %v1458, %v1714
    %v1716 = vpop.f32.mrb[0].mxu0
    %v1717 = vadd.f32 %v1460, %v1716
    %1718 = vmatprep.mubr.f32.mxu0 %v261
    %1719 = vmatmul.mubr.f32.gmra.mrb[0].mxu0 %v260
    %v1720 = vpop.f32.mrb[0].mxu0
    %v1721 = vadd.f32 %v1464, %v1720
    %v1722 = vpop.f32.mrb[0].mxu0
    %v1723 = vadd.f32 %v1466, %v1722
    %1724 = vmatprep.mubr.f32.mxu0 %v269
    %1725 = vmatmul.mubr.f32.gmra.mrb[0].mxu0 %v268
    %v1726 = vpop.f32.mrb[0].mxu0
    %v1727 = vadd.f32 %v1470, %v1726
    %v1728 = vpop.f32.mrb[0].mxu0
    %v1729 = vadd.f32 %v1472, %v1728
    %1730 = vmatprep.mubr.f32.mxu0 %v277
    %1731 = vmatmul.mubr.f32.gmra.mrb[0].mxu0 %v276
    %v1732 = vpop.f32.mrb[0].mxu0
    %v1733 = vadd.f32 %v1476, %v1732
    %v1734 = vpop.f32.mrb[0].mxu0
    %v1735 = vadd.f32 %v1478, %v1734
    %1736 = vmatprep.mubr.f32.mxu0 %v285
    %1737 = vmatmul.mubr.f32.gmra.mrb[0].mxu0 %v284
    %v1738 = vpop.f32.mrb[0].mxu0
    %v1739 = vadd.f32 %v1482, %v1738
    %v1740 = vpop.f32.mrb[0].mxu0
    %v1741 = vadd.f32 %v1484, %v1740
    %1742 = vmatprep.mubr.f32.mxu0 %v293
    %1743 = vmatmul.mubr.f32.gmra.mrb[0].mxu0 %v292
    %v1744 = vpop.f32.mrb[0].mxu0
    %v1745 = vadd.f32 %v1488, %v1744
    %v1746 = vpop.f32.mrb[0].mxu0
    %v1747 = vadd.f32 %v1490, %v1746
    %1748 = vmatprep.mubr.f32.mxu0 %v301
    %1749 = vmatmul.mubr.f32.gmra.mrb[0].mxu0 %v300
    %v1750 = vpop.f32.mrb[0].mxu0
    %v1751 = vadd.f32 %v1494, %v1750
    %v1752 = vpop.f32.mrb[0].mxu0
    %v1753 = vadd.f32 %v1496, %v1752
    %1754 = vmatprep.mubr.f32.mxu0 %v309
    %1755 = vmatmul.mubr.f32.gmra.mrb[0].mxu0 %v308
    %v1756 = vpop.f32.mrb[0].mxu0
    %v1757 = vadd.f32 %v1500, %v1756
    %v1758 = vpop.f32.mrb[0].mxu0
    %v1759 = vadd.f32 %v1502, %v1758
    %1760 = vmatprep.mubr.f32.mxu0 %v317
    %1761 = vmatmul.mubr.f32.gmra.mrb[0].mxu0 %v316
    %v1762 = vpop.f32.mrb[0].mxu0
    %v1763 = vadd.f32 %v1506, %v1762
    %v1764 = vpop.f32.mrb[0].mxu0
    %v1765 = vadd.f32 %v1508, %v1764
    %1766 = vmatprep.mubr.f32.mxu0 %v325
    %1767 = vmatmul.mubr.f32.gmra.mrb[0].mxu0 %v324
    %v1768 = vpop.f32.mrb[0].mxu0
    %v1769 = vadd.f32 %v1512, %v1768
    %v1770 = vpop.f32.mrb[0].mxu0
    %v1771 = vadd.f32 %v1514, %v1770
    %1772 = vmatprep.mubr.f32.mxu0 %v333
    %1773 = vmatmul.mubr.f32.gmra.mrb[0].mxu0 %v332
    %v1774 = vpop.f32.mrb[0].mxu0
    %v1775 = vadd.f32 %v1518, %v1774
    %v1776 = vpop.f32.mrb[0].mxu0
    %v1777 = vadd.f32 %v1520, %v1776
    %1778 = vmatprep.mubr.f32.mxu0 %v341
    %1779 = vmatmul.mubr.f32.gmra.mrb[0].mxu0 %v340
    %v1780 = vpop.f32.mrb[0].mxu0
    %v1781 = vadd.f32 %v1524, %v1780
    %v1782 = vpop.f32.mrb[0].mxu0
    %v1783 = vadd.f32 %v1526, %v1782
    %1784 = vmatprep.mubr.f32.mxu0 %v349
    %1785 = vmatmul.mubr.f32.gmra.mrb[0].mxu0 %v348
    %v1786 = vpop.f32.mrb[0].mxu0
    %v1787 = vadd.f32 %v1530, %v1786
    %v1788 = vpop.f32.mrb[0].mxu0
    %v1789 = vadd.f32 %v1532, %v1788
    %1790 = vmatprep.mubr.f32.mxu0 %v357
    %1791 = vmatmul.mubr.f32.gmra.mrb[0].mxu0 %v356
    %v1792 = vpop.f32.mrb[0].mxu0
    %v1793 = vadd.f32 %v1536, %v1792
    %v1794 = vpop.f32.mrb[0].mxu0
    %v1795 = vadd.f32 %v1538, %v1794
    %1796 = vmatprep.mubr.f32.mxu0 %v365
    %1797 = vmatmul.mubr.f32.gmra.mrb[0].mxu0 %v364
    %v1798 = vpop.f32.mrb[0].mxu0
    %v1799 = vadd.f32 %v1542, %v1798
    %v1800 = vpop.f32.mrb[0].mxu0
    %v1801 = vadd.f32 %v1544, %v1800
    %1802 = vmatprep.mubr.f32.mxu0 %v373
    %1803 = vmatmul.mubr.f32.gmra.mrb[0].mxu0 %v372
    %v1804 = vpop.f32.mrb[0].mxu0
    %v1805 = vadd.f32 %v1548, %v1804
    %v1806 = vpop.f32.mrb[0].mxu0
    %v1807 = vadd.f32 %v1550, %v1806
    %1808 = vmatprep.mubr.f32.mxu0 %v381
    %1809 = vmatmul.mubr.f32.gmra.mrb[0].mxu0 %v380
    %v1810 = vpop.f32.mrb[0].mxu0
    %v1811 = vadd.f32 %v1554, %v1810
    %v1812 = vpop.f32.mrb[0].mxu0
    %v1813 = vadd.f32 %v1556, %v1812
    %1814 = vmatprep.mubr.f32.mxu0 %v389
    %1815 = vmatmul.mubr.f32.gmra.mrb[0].mxu0 %v388
    %v1816 = vpop.f32.mrb[0].mxu0
    %v1817 = vadd.f32 %v1560, %v1816
    %v1818 = vpop.f32.mrb[0].mxu0
    %v1819 = vadd.f32 %v1562, %v1818
    %1820 = vmatprep.mubr.f32.mxu0 %v397
    %1821 = vmatmul.mubr.f32.gmra.mrb[0].mxu0 %v396
    %v1822 = vpop.f32.mrb[0].mxu0
    %v1823 = vadd.f32 %v1566, %v1822
    %v1824 = vpop.f32.mrb[0].mxu0
    %v1825 = vadd.f32 %v1568, %v1824
    %1826 = vmatprep.mubr.f32.mxu0 %v405
    %1827 = vmatmul.mubr.f32.gmra.mrb[0].mxu0 %v404
    %v1828 = vpop.f32.mrb[0].mxu0
    %v1829 = vadd.f32 %v1572, %v1828
    %v1830 = vpop.f32.mrb[0].mxu0
    %v1831 = vadd.f32 %v1574, %v1830
    %1832 = vmatprep.mubr.f32.mxu0 %v413
    %1833 = vmatmul.mubr.f32.gmra.mrb[0].mxu0 %v412
    %v1834 = vpop.f32.mrb[0].mxu0
    %v1835 = vadd.f32 %v1578, %v1834
    %v1836 = vpop.f32.mrb[0].mxu0
    %v1837 = vadd.f32 %v1580, %v1836
    %1838 = vmatprep.mubr.f32.mxu0 %v421
    %1839 = vmatmul.mubr.f32.gmra.mrb[0].mxu0 %v420
    %v1840 = vpop.f32.mrb[0].mxu0
    %v1841 = vadd.f32 %v1584, %v1840
    %v1842 = vpop.f32.mrb[0].mxu0
    %v1843 = vadd.f32 %v1586, %v1842
    %1844 = vmatprep.mubr.f32.mxu0 %v429
    %1845 = vmatmul.mubr.f32.gmra.mrb[0].mxu0 %v428
    %v1846 = vpop.f32.mrb[0].mxu0
    %v1847 = vadd.f32 %v1590, %v1846
    %v1848 = vpop.f32.mrb[0].mxu0
    %v1849 = vadd.f32 %v1592, %v1848
    %1850 = vmatprep.mubr.f32.mxu0 %v437
    %1851 = vmatmul.mubr.f32.gmra.mrb[0].mxu0 %v436
    %v1852 = vpop.f32.mrb[0].mxu0
    %v1853 = vadd.f32 %v1596, %v1852
    %v1854 = vpop.f32.mrb[0].mxu0
    %v1855 = vadd.f32 %v1598, %v1854
    %1856 = vmatprep.mubr.f32.mxu0 %v445
    %1857 = vmatmul.mubr.f32.gmra.mrb[0].mxu0 %v444
    %v1858 = vpop.f32.mrb[0].mxu0
    %v1859 = vadd.f32 %v1602, %v1858
    %v1860 = vpop.f32.mrb[0].mxu0
    %v1861 = vadd.f32 %v1604, %v1860
    %1862 = vmatprep.mubr.f32.mxu0 %v453
    %1863 = vmatmul.mubr.f32.gmra.mrb[0].mxu0 %v452
    %v1864 = vpop.f32.mrb[0].mxu0
    %v1865 = vadd.f32 %v1608, %v1864
    %v1866 = vpop.f32.mrb[0].mxu0
    %v1867 = vadd.f32 %v1610, %v1866
    %1868 = vmatprep.mubr.f32.mxu0 %v461
    %1869 = vmatmul.mubr.f32.gmra.mrb[0].mxu0 %v460
    %v1870 = vpop.f32.mrb[0].mxu0
    %v1871 = vadd.f32 %v1614, %v1870
    %v1872 = vpop.f32.mrb[0].mxu0
    %v1873 = vadd.f32 %v1616, %v1872
    %1874 = vdwg.mxu0
    %1875 = vmatprep.subr.mxu0 %v977
    %1876 = vmatpush1.msra.mxu0 %v976
    %1877 = vmatprep.subr.mxu0 %v981
    %1878 = vmatpush1.msra.mxu0 %v980
    %1879 = vmatprep.subr.mxu0 %v985
    %1880 = vmatpush1.msra.mxu0 %v984
    %1881 = vmatprep.subr.mxu0 %v989
    %1882 = vmatpush1.msra.mxu0 %v988
    %1883 = vmatprep.subr.mxu0 %v993
    %1884 = vmatpush1.msra.mxu0 %v992
    %1885 = vmatprep.subr.mxu0 %v997
    %1886 = vmatpush1.msra.mxu0 %v996
    %1887 = vmatprep.subr.mxu0 %v1001
    %1888 = vmatpush1.msra.mxu0 %v1000
    %1889 = vmatprep.subr.mxu0 %v1005
    %1890 = vmatpush1.msra.mxu0 %v1004
    %1891 = vmatprep.subr.mxu0 %v1009
    %1892 = vmatpush1.msra.mxu0 %v1008
    %1893 = vmatprep.subr.mxu0 %v1013
    %1894 = vmatpush1.msra.mxu0 %v1012
    %1895 = vmatprep.subr.mxu0 %v1017
    %1896 = vmatpush1.msra.mxu0 %v1016
    %1897 = vmatprep.subr.mxu0 %v1021
    %1898 = vmatpush1.msra.mxu0 %v1020
    %1899 = vmatprep.subr.mxu0 %v1025
    %1900 = vmatpush1.msra.mxu0 %v1024
    %1901 = vmatprep.subr.mxu0 %v1029
    %1902 = vmatpush1.msra.mxu0 %v1028
    %1903 = vmatprep.subr.mxu0 %v1033
    %1904 = vmatpush1.msra.mxu0 %v1032
    %1905 = vmatprep.subr.mxu0 %v1037
    %1906 = vmatpush1.msra.mxu0 %v1036
    %1907 = vmatprep.subr.mxu0 %v1041
    %1908 = vmatpush1.msra.mxu0 %v1040
    %1909 = vmatprep.subr.mxu0 %v1045
    %1910 = vmatpush1.msra.mxu0 %v1044
    %1911 = vmatprep.subr.mxu0 %v1049
    %1912 = vmatpush1.msra.mxu0 %v1048
    %1913 = vmatprep.subr.mxu0 %v1053
    %1914 = vmatpush1.msra.mxu0 %v1052
    %1915 = vmatprep.subr.mxu0 %v1057
    %1916 = vmatpush1.msra.mxu0 %v1056
    %1917 = vmatprep.subr.mxu0 %v1061
    %1918 = vmatpush1.msra.mxu0 %v1060
    %1919 = vmatprep.subr.mxu0 %v1065
    %1920 = vmatpush1.msra.mxu0 %v1064
    %1921 = vmatprep.subr.mxu0 %v1069
    %1922 = vmatpush1.msra.mxu0 %v1068
    %1923 = vmatprep.subr.mxu0 %v1073
    %1924 = vmatpush1.msra.mxu0 %v1072
    %1925 = vmatprep.subr.mxu0 %v1077
    %1926 = vmatpush1.msra.mxu0 %v1076
    %1927 = vmatprep.subr.mxu0 %v1081
    %1928 = vmatpush1.msra.mxu0 %v1080
    %1929 = vmatprep.subr.mxu0 %v1085
    %1930 = vmatpush1.msra.mxu0 %v1084
    %1931 = vmatprep.subr.mxu0 %v1089
    %1932 = vmatpush1.msra.mxu0 %v1088
    %1933 = vmatprep.subr.mxu0 %v1093
    %1934 = vmatpush1.msra.mxu0 %v1092
    %1935 = vmatprep.subr.mxu0 %v1097
    %1936 = vmatpush1.msra.mxu0 %v1096
    %1937 = vmatprep.subr.mxu0 %v1101
    %1938 = vmatpush1.msra.mxu0 %v1100
    %1939 = vmatprep.mubr.f32.mxu0 %v215
    %1940 = vmatmul.mubr.f32.gmra.mrb[0].mxu0 %v214
    %v1941 = vpop.f32.mrb[0].mxu0
    %v1942 = vadd.f32 %v1685, %v1941
    %v1943 = vpop.f32.mrb[0].mxu0
    %v1944 = vadd.f32 %v1687, %v1943
    %1945 = vmatprep.mubr.f32.mxu0 %v223
    %1946 = vmatmul.mubr.f32.gmra.mrb[0].mxu0 %v222
    %v1947 = vpop.f32.mrb[0].mxu0
    %v1948 = vadd.f32 %v1691, %v1947
    %v1949 = vpop.f32.mrb[0].mxu0
    %v1950 = vadd.f32 %v1693, %v1949
    %1951 = vmatprep.mubr.f32.mxu0 %v231
    %1952 = vmatmul.mubr.f32.gmra.mrb[0].mxu0 %v230
    %v1953 = vpop.f32.mrb[0].mxu0
    %v1954 = vadd.f32 %v1697, %v1953
    %v1955 = vpop.f32.mrb[0].mxu0
    %v1956 = vadd.f32 %v1699, %v1955
    %1957 = vmatprep.mubr.f32.mxu0 %v239
    %1958 = vmatmul.mubr.f32.gmra.mrb[0].mxu0 %v238
    %v1959 = vpop.f32.mrb[0].mxu0
    %v1960 = vadd.f32 %v1703, %v1959
    %v1961 = vpop.f32.mrb[0].mxu0
    %v1962 = vadd.f32 %v1705, %v1961
    %1963 = vmatprep.mubr.f32.mxu0 %v247
    %1964 = vmatmul.mubr.f32.gmra.mrb[0].mxu0 %v246
    %v1965 = vpop.f32.mrb[0].mxu0
    %v1966 = vadd.f32 %v1709, %v1965
    %v1967 = vpop.f32.mrb[0].mxu0
    %v1968 = vadd.f32 %v1711, %v1967
    %1969 = vmatprep.mubr.f32.mxu0 %v255
    %1970 = vmatmul.mubr.f32.gmra.mrb[0].mxu0 %v254
    %v1971 = vpop.f32.mrb[0].mxu0
    %v1972 = vadd.f32 %v1715, %v1971
    %v1973 = vpop.f32.mrb[0].mxu0
    %v1974 = vadd.f32 %v1717, %v1973
    %1975 = vmatprep.mubr.f32.mxu0 %v263
    %1976 = vmatmul.mubr.f32.gmra.mrb[0].mxu0 %v262
    %v1977 = vpop.f32.mrb[0].mxu0
    %v1978 = vadd.f32 %v1721, %v1977
    %v1979 = vpop.f32.mrb[0].mxu0
    %v1980 = vadd.f32 %v1723, %v1979
    %1981 = vmatprep.mubr.f32.mxu0 %v271
    %1982 = vmatmul.mubr.f32.gmra.mrb[0].mxu0 %v270
    %v1983 = vpop.f32.mrb[0].mxu0
    %v1984 = vadd.f32 %v1727, %v1983
    %v1985 = vpop.f32.mrb[0].mxu0
    %v1986 = vadd.f32 %v1729, %v1985
    %1987 = vmatprep.mubr.f32.mxu0 %v279
    %1988 = vmatmul.mubr.f32.gmra.mrb[0].mxu0 %v278
    %v1989 = vpop.f32.mrb[0].mxu0
    %v1990 = vadd.f32 %v1733, %v1989
    %v1991 = vpop.f32.mrb[0].mxu0
    %v1992 = vadd.f32 %v1735, %v1991
    %1993 = vmatprep.mubr.f32.mxu0 %v287
    %1994 = vmatmul.mubr.f32.gmra.mrb[0].mxu0 %v286
    %v1995 = vpop.f32.mrb[0].mxu0
    %v1996 = vadd.f32 %v1739, %v1995
    %v1997 = vpop.f32.mrb[0].mxu0
    %v1998 = vadd.f32 %v1741, %v1997
    %1999 = vmatprep.mubr.f32.mxu0 %v295
    %2000 = vmatmul.mubr.f32.gmra.mrb[0].mxu0 %v294
    %v2001 = vpop.f32.mrb[0].mxu0
    %v2002 = vadd.f32 %v1745, %v2001
    %v2003 = vpop.f32.mrb[0].mxu0
    %v2004 = vadd.f32 %v1747, %v2003
    %2005 = vmatprep.mubr.f32.mxu0 %v303
    %2006 = vmatmul.mubr.f32.gmra.mrb[0].mxu0 %v302
    %v2007 = vpop.f32.mrb[0].mxu0
    %v2008 = vadd.f32 %v1751, %v2007
    %v2009 = vpop.f32.mrb[0].mxu0
    %v2010 = vadd.f32 %v1753, %v2009
    %2011 = vmatprep.mubr.f32.mxu0 %v311
    %2012 = vmatmul.mubr.f32.gmra.mrb[0].mxu0 %v310
    %v2013 = vpop.f32.mrb[0].mxu0
    %v2014 = vadd.f32 %v1757, %v2013
    %v2015 = vpop.f32.mrb[0].mxu0
    %v2016 = vadd.f32 %v1759, %v2015
    %2017 = vmatprep.mubr.f32.mxu0 %v319
    %2018 = vmatmul.mubr.f32.gmra.mrb[0].mxu0 %v318
    %v2019 = vpop.f32.mrb[0].mxu0
    %v2020 = vadd.f32 %v1763, %v2019
    %v2021 = vpop.f32.mrb[0].mxu0
    %v2022 = vadd.f32 %v1765, %v2021
    %2023 = vmatprep.mubr.f32.mxu0 %v327
    %2024 = vmatmul.mubr.f32.gmra.mrb[0].mxu0 %v326
    %v2025 = vpop.f32.mrb[0].mxu0
    %v2026 = vadd.f32 %v1769, %v2025
    %v2027 = vpop.f32.mrb[0].mxu0
    %v2028 = vadd.f32 %v1771, %v2027
    %2029 = vmatprep.mubr.f32.mxu0 %v335
    %2030 = vmatmul.mubr.f32.gmra.mrb[0].mxu0 %v334
    %v2031 = vpop.f32.mrb[0].mxu0
    %v2032 = vadd.f32 %v1775, %v2031
    %v2033 = vpop.f32.mrb[0].mxu0
    %v2034 = vadd.f32 %v1777, %v2033
    %2035 = vmatprep.mubr.f32.mxu0 %v343
    %2036 = vmatmul.mubr.f32.gmra.mrb[0].mxu0 %v342
    %v2037 = vpop.f32.mrb[0].mxu0
    %v2038 = vadd.f32 %v1781, %v2037
    %v2039 = vpop.f32.mrb[0].mxu0
    %v2040 = vadd.f32 %v1783, %v2039
    %2041 = vmatprep.mubr.f32.mxu0 %v351
    %2042 = vmatmul.mubr.f32.gmra.mrb[0].mxu0 %v350
    %v2043 = vpop.f32.mrb[0].mxu0
    %v2044 = vadd.f32 %v1787, %v2043
    %v2045 = vpop.f32.mrb[0].mxu0
    %v2046 = vadd.f32 %v1789, %v2045
    %2047 = vmatprep.mubr.f32.mxu0 %v359
    %2048 = vmatmul.mubr.f32.gmra.mrb[0].mxu0 %v358
    %v2049 = vpop.f32.mrb[0].mxu0
    %v2050 = vadd.f32 %v1793, %v2049
    %v2051 = vpop.f32.mrb[0].mxu0
    %v2052 = vadd.f32 %v1795, %v2051
    %2053 = vmatprep.mubr.f32.mxu0 %v367
    %2054 = vmatmul.mubr.f32.gmra.mrb[0].mxu0 %v366
    %v2055 = vpop.f32.mrb[0].mxu0
    %v2056 = vadd.f32 %v1799, %v2055
    %v2057 = vpop.f32.mrb[0].mxu0
    %v2058 = vadd.f32 %v1801, %v2057
    %2059 = vmatprep.mubr.f32.mxu0 %v375
    %2060 = vmatmul.mubr.f32.gmra.mrb[0].mxu0 %v374
    %v2061 = vpop.f32.mrb[0].mxu0
    %v2062 = vadd.f32 %v1805, %v2061
    %v2063 = vpop.f32.mrb[0].mxu0
    %v2064 = vadd.f32 %v1807, %v2063
    %2065 = vmatprep.mubr.f32.mxu0 %v383
    %2066 = vmatmul.mubr.f32.gmra.mrb[0].mxu0 %v382
    %v2067 = vpop.f32.mrb[0].mxu0
    %v2068 = vadd.f32 %v1811, %v2067
    %v2069 = vpop.f32.mrb[0].mxu0
    %v2070 = vadd.f32 %v1813, %v2069
    %2071 = vmatprep.mubr.f32.mxu0 %v391
    %2072 = vmatmul.mubr.f32.gmra.mrb[0].mxu0 %v390
    %v2073 = vpop.f32.mrb[0].mxu0
    %v2074 = vadd.f32 %v1817, %v2073
    %v2075 = vpop.f32.mrb[0].mxu0
    %v2076 = vadd.f32 %v1819, %v2075
    %2077 = vmatprep.mubr.f32.mxu0 %v399
    %2078 = vmatmul.mubr.f32.gmra.mrb[0].mxu0 %v398
    %v2079 = vpop.f32.mrb[0].mxu0
    %v2080 = vadd.f32 %v1823, %v2079
    %v2081 = vpop.f32.mrb[0].mxu0
    %v2082 = vadd.f32 %v1825, %v2081
    %2083 = vmatprep.mubr.f32.mxu0 %v407
    %2084 = vmatmul.mubr.f32.gmra.mrb[0].mxu0 %v406
    %v2085 = vpop.f32.mrb[0].mxu0
    %v2086 = vadd.f32 %v1829, %v2085
    %v2087 = vpop.f32.mrb[0].mxu0
    %v2088 = vadd.f32 %v1831, %v2087
    %2089 = vmatprep.mubr.f32.mxu0 %v415
    %2090 = vmatmul.mubr.f32.gmra.mrb[0].mxu0 %v414
    %v2091 = vpop.f32.mrb[0].mxu0
    %v2092 = vadd.f32 %v1835, %v2091
    %v2093 = vpop.f32.mrb[0].mxu0
    %v2094 = vadd.f32 %v1837, %v2093
    %2095 = vmatprep.mubr.f32.mxu0 %v423
    %2096 = vmatmul.mubr.f32.gmra.mrb[0].mxu0 %v422
    %v2097 = vpop.f32.mrb[0].mxu0
    %v2098 = vadd.f32 %v1841, %v2097
    %v2099 = vpop.f32.mrb[0].mxu0
    %v2100 = vadd.f32 %v1843, %v2099
    %2101 = vmatprep.mubr.f32.mxu0 %v431
    %2102 = vmatmul.mubr.f32.gmra.mrb[0].mxu0 %v430
    %v2103 = vpop.f32.mrb[0].mxu0
    %v2104 = vadd.f32 %v1847, %v2103
    %v2105 = vpop.f32.mrb[0].mxu0
    %v2106 = vadd.f32 %v1849, %v2105
    %2107 = vmatprep.mubr.f32.mxu0 %v439
    %2108 = vmatmul.mubr.f32.gmra.mrb[0].mxu0 %v438
    %v2109 = vpop.f32.mrb[0].mxu0
    %v2110 = vadd.f32 %v1853, %v2109
    %v2111 = vpop.f32.mrb[0].mxu0
    %v2112 = vadd.f32 %v1855, %v2111
    %2113 = vmatprep.mubr.f32.mxu0 %v447
    %2114 = vmatmul.mubr.f32.gmra.mrb[0].mxu0 %v446
    %v2115 = vpop.f32.mrb[0].mxu0
    %v2116 = vadd.f32 %v1859, %v2115
    %v2117 = vpop.f32.mrb[0].mxu0
    %v2118 = vadd.f32 %v1861, %v2117
    %2119 = vmatprep.mubr.f32.mxu0 %v455
    %2120 = vmatmul.mubr.f32.gmra.mrb[0].mxu0 %v454
    %v2121 = vpop.f32.mrb[0].mxu0
    %v2122 = vadd.f32 %v1865, %v2121
    %v2123 = vpop.f32.mrb[0].mxu0
    %v2124 = vadd.f32 %v1867, %v2123
    %2125 = vmatprep.mubr.f32.mxu0 %v463
    %2126 = vmatmul.mubr.f32.gmra.mrb[0].mxu0 %v462
    %v2127 = vpop.f32.mrb[0].mxu0
    %v2128 = vadd.f32 %v1871, %v2127
    %v2129 = vpop.f32.mrb[0].mxu0
    %v2130 = vadd.f32 %v1873, %v2129
    %2131 = vdwg.mxu0
    %2132 = vmatprep.subr.mxu0 %v595
    %2133 = vmatpush1.msra.mxu0 %v594
    %2134 = vmatprep.subr.mxu0 %v599
    %2135 = vmatpush1.msra.mxu0 %v598
    %2136 = vmatprep.subr.mxu0 %v603
    %2137 = vmatpush1.msra.mxu0 %v602
    %2138 = vmatprep.subr.mxu0 %v607
    %2139 = vmatpush1.msra.mxu0 %v606
    %2140 = vmatprep.subr.mxu0 %v611
    %2141 = vmatpush1.msra.mxu0 %v610
    %2142 = vmatprep.subr.mxu0 %v615
    %2143 = vmatpush1.msra.mxu0 %v614
    %2144 = vmatprep.subr.mxu0 %v619
    %2145 = vmatpush1.msra.mxu0 %v618
    %2146 = vmatprep.subr.mxu0 %v623
    %2147 = vmatpush1.msra.mxu0 %v622
    %2148 = vmatprep.subr.mxu0 %v627
    %2149 = vmatpush1.msra.mxu0 %v626
    %2150 = vmatprep.subr.mxu0 %v631
    %2151 = vmatpush1.msra.mxu0 %v630
    %2152 = vmatprep.subr.mxu0 %v635
    %2153 = vmatpush1.msra.mxu0 %v634
    %2154 = vmatprep.subr.mxu0 %v639
    %2155 = vmatpush1.msra.mxu0 %v638
    %2156 = vmatprep.subr.mxu0 %v643
    %2157 = vmatpush1.msra.mxu0 %v642
    %2158 = vmatprep.subr.mxu0 %v647
    %2159 = vmatpush1.msra.mxu0 %v646
    %2160 = vmatprep.subr.mxu0 %v651
    %2161 = vmatpush1.msra.mxu0 %v650
    %2162 = vmatprep.subr.mxu0 %v655
    %2163 = vmatpush1.msra.mxu0 %v654
    %2164 = vmatprep.subr.mxu0 %v659
    %2165 = vmatpush1.msra.mxu0 %v658
    %2166 = vmatprep.subr.mxu0 %v663
    %2167 = vmatpush1.msra.mxu0 %v662
    %2168 = vmatprep.subr.mxu0 %v667
    %2169 = vmatpush1.msra.mxu0 %v666
    %2170 = vmatprep.subr.mxu0 %v671
    %2171 = vmatpush1.msra.mxu0 %v670
    %2172 = vmatprep.subr.mxu0 %v675
    %2173 = vmatpush1.msra.mxu0 %v674
    %2174 = vmatprep.subr.mxu0 %v679
    %2175 = vmatpush1.msra.mxu0 %v678
    %2176 = vmatprep.subr.mxu0 %v683
    %2177 = vmatpush1.msra.mxu0 %v682
    %2178 = vmatprep.subr.mxu0 %v687
    %2179 = vmatpush1.msra.mxu0 %v686
    %2180 = vmatprep.subr.mxu0 %v691
    %2181 = vmatpush1.msra.mxu0 %v690
    %2182 = vmatprep.subr.mxu0 %v695
    %2183 = vmatpush1.msra.mxu0 %v694
    %2184 = vmatprep.subr.mxu0 %v699
    %2185 = vmatpush1.msra.mxu0 %v698
    %2186 = vmatprep.subr.mxu0 %v703
    %2187 = vmatpush1.msra.mxu0 %v702
    %2188 = vmatprep.subr.mxu0 %v707
    %2189 = vmatpush1.msra.mxu0 %v706
    %2190 = vmatprep.subr.mxu0 %v711
    %2191 = vmatpush1.msra.mxu0 %v710
    %2192 = vmatprep.subr.mxu0 %v715
    %2193 = vmatpush1.msra.mxu0 %v714
    %2194 = vmatprep.subr.mxu0 %v719
    %2195 = vmatpush1.msra.mxu0 %v718
    %2196 = vmatprep.mubr.f32.mxu0 %v209
    %2197 = vmatmul.mubr.f32.gmra.mrb[0].mxu0 %v208
    %v2198 = vpop.f32.mrb[0].mxu0
    %v2199 = vadd.f32 0.0, %v2198
    %v2200 = vpop.f32.mrb[0].mxu0
    %v2201 = vadd.f32 0.0, %v2200
    %2202 = vmatprep.mubr.f32.mxu0 %v217
    %2203 = vmatmul.mubr.f32.gmra.mrb[0].mxu0 %v216
    %v2204 = vpop.f32.mrb[0].mxu0
    %v2205 = vadd.f32 0.0, %v2204
    %v2206 = vpop.f32.mrb[0].mxu0
    %v2207 = vadd.f32 0.0, %v2206
    %2208 = vmatprep.mubr.f32.mxu0 %v225
    %2209 = vmatmul.mubr.f32.gmra.mrb[0].mxu0 %v224
    %v2210 = vpop.f32.mrb[0].mxu0
    %v2211 = vadd.f32 0.0, %v2210
    %v2212 = vpop.f32.mrb[0].mxu0
    %v2213 = vadd.f32 0.0, %v2212
    %2214 = vmatprep.mubr.f32.mxu0 %v233
    %2215 = vmatmul.mubr.f32.gmra.mrb[0].mxu0 %v232
    %v2216 = vpop.f32.mrb[0].mxu0
    %v2217 = vadd.f32 0.0, %v2216
    %v2218 = vpop.f32.mrb[0].mxu0
    %v2219 = vadd.f32 0.0, %v2218
    %2220 = vmatprep.mubr.f32.mxu0 %v241
    %2221 = vmatmul.mubr.f32.gmra.mrb[0].mxu0 %v240
    %v2222 = vpop.f32.mrb[0].mxu0
    %v2223 = vadd.f32 0.0, %v2222
    %v2224 = vpop.f32.mrb[0].mxu0
    %v2225 = vadd.f32 0.0, %v2224
    %2226 = vmatprep.mubr.f32.mxu0 %v249
    %2227 = vmatmul.mubr.f32.gmra.mrb[0].mxu0 %v248
    %v2228 = vpop.f32.mrb[0].mxu0
    %v2229 = vadd.f32 0.0, %v2228
    %v2230 = vpop.f32.mrb[0].mxu0
    %v2231 = vadd.f32 0.0, %v2230
    %2232 = vmatprep.mubr.f32.mxu0 %v257
    %2233 = vmatmul.mubr.f32.gmra.mrb[0].mxu0 %v256
    %v2234 = vpop.f32.mrb[0].mxu0
    %v2235 = vadd.f32 0.0, %v2234
    %v2236 = vpop.f32.mrb[0].mxu0
    %v2237 = vadd.f32 0.0, %v2236
    %2238 = vmatprep.mubr.f32.mxu0 %v265
    %2239 = vmatmul.mubr.f32.gmra.mrb[0].mxu0 %v264
    %v2240 = vpop.f32.mrb[0].mxu0
    %v2241 = vadd.f32 0.0, %v2240
    %v2242 = vpop.f32.mrb[0].mxu0
    %v2243 = vadd.f32 0.0, %v2242
    %2244 = vmatprep.mubr.f32.mxu0 %v273
    %2245 = vmatmul.mubr.f32.gmra.mrb[0].mxu0 %v272
    %v2246 = vpop.f32.mrb[0].mxu0
    %v2247 = vadd.f32 0.0, %v2246
    %v2248 = vpop.f32.mrb[0].mxu0
    %v2249 = vadd.f32 0.0, %v2248
    %2250 = vmatprep.mubr.f32.mxu0 %v281
    %2251 = vmatmul.mubr.f32.gmra.mrb[0].mxu0 %v280
    %v2252 = vpop.f32.mrb[0].mxu0
    %v2253 = vadd.f32 0.0, %v2252
    %v2254 = vpop.f32.mrb[0].mxu0
    %v2255 = vadd.f32 0.0, %v2254
    %2256 = vmatprep.mubr.f32.mxu0 %v289
    %2257 = vmatmul.mubr.f32.gmra.mrb[0].mxu0 %v288
    %v2258 = vpop.f32.mrb[0].mxu0
    %v2259 = vadd.f32 0.0, %v2258
    %v2260 = vpop.f32.mrb[0].mxu0
    %v2261 = vadd.f32 0.0, %v2260
    %2262 = vmatprep.mubr.f32.mxu0 %v297
    %2263 = vmatmul.mubr.f32.gmra.mrb[0].mxu0 %v296
    %v2264 = vpop.f32.mrb[0].mxu0
    %v2265 = vadd.f32 0.0, %v2264
    %v2266 = vpop.f32.mrb[0].mxu0
    %v2267 = vadd.f32 0.0, %v2266
    %2268 = vmatprep.mubr.f32.mxu0 %v305
    %2269 = vmatmul.mubr.f32.gmra.mrb[0].mxu0 %v304
    %v2270 = vpop.f32.mrb[0].mxu0
    %v2271 = vadd.f32 0.0, %v2270
    %v2272 = vpop.f32.mrb[0].mxu0
    %v2273 = vadd.f32 0.0, %v2272
    %2274 = vmatprep.mubr.f32.mxu0 %v313
    %2275 = vmatmul.mubr.f32.gmra.mrb[0].mxu0 %v312
    %v2276 = vpop.f32.mrb[0].mxu0
    %v2277 = vadd.f32 0.0, %v2276
    %v2278 = vpop.f32.mrb[0].mxu0
    %v2279 = vadd.f32 0.0, %v2278
    %2280 = vmatprep.mubr.f32.mxu0 %v321
    %2281 = vmatmul.mubr.f32.gmra.mrb[0].mxu0 %v320
    %v2282 = vpop.f32.mrb[0].mxu0
    %v2283 = vadd.f32 0.0, %v2282
    %v2284 = vpop.f32.mrb[0].mxu0
    %v2285 = vadd.f32 0.0, %v2284
    %2286 = vmatprep.mubr.f32.mxu0 %v329
    %2287 = vmatmul.mubr.f32.gmra.mrb[0].mxu0 %v328
    %v2288 = vpop.f32.mrb[0].mxu0
    %v2289 = vadd.f32 0.0, %v2288
    %v2290 = vpop.f32.mrb[0].mxu0
    %v2291 = vadd.f32 0.0, %v2290
    %2292 = vmatprep.mubr.f32.mxu0 %v337
    %2293 = vmatmul.mubr.f32.gmra.mrb[0].mxu0 %v336
    %v2294 = vpop.f32.mrb[0].mxu0
    %v2295 = vadd.f32 0.0, %v2294
    %v2296 = vpop.f32.mrb[0].mxu0
    %v2297 = vadd.f32 0.0, %v2296
    %2298 = vmatprep.mubr.f32.mxu0 %v345
    %2299 = vmatmul.mubr.f32.gmra.mrb[0].mxu0 %v344
    %v2300 = vpop.f32.mrb[0].mxu0
    %v2301 = vadd.f32 0.0, %v2300
    %v2302 = vpop.f32.mrb[0].mxu0
    %v2303 = vadd.f32 0.0, %v2302
    %2304 = vmatprep.mubr.f32.mxu0 %v353
    %2305 = vmatmul.mubr.f32.gmra.mrb[0].mxu0 %v352
    %v2306 = vpop.f32.mrb[0].mxu0
    %v2307 = vadd.f32 0.0, %v2306
    %v2308 = vpop.f32.mrb[0].mxu0
    %v2309 = vadd.f32 0.0, %v2308
    %2310 = vmatprep.mubr.f32.mxu0 %v361
    %2311 = vmatmul.mubr.f32.gmra.mrb[0].mxu0 %v360
    %v2312 = vpop.f32.mrb[0].mxu0
    %v2313 = vadd.f32 0.0, %v2312
    %v2314 = vpop.f32.mrb[0].mxu0
    %v2315 = vadd.f32 0.0, %v2314
    %2316 = vmatprep.mubr.f32.mxu0 %v369
    %2317 = vmatmul.mubr.f32.gmra.mrb[0].mxu0 %v368
    %v2318 = vpop.f32.mrb[0].mxu0
    %v2319 = vadd.f32 0.0, %v2318
    %v2320 = vpop.f32.mrb[0].mxu0
    %v2321 = vadd.f32 0.0, %v2320
    %2322 = vmatprep.mubr.f32.mxu0 %v377
    %2323 = vmatmul.mubr.f32.gmra.mrb[0].mxu0 %v376
    %v2324 = vpop.f32.mrb[0].mxu0
    %v2325 = vadd.f32 0.0, %v2324
    %v2326 = vpop.f32.mrb[0].mxu0
    %v2327 = vadd.f32 0.0, %v2326
    %2328 = vmatprep.mubr.f32.mxu0 %v385
    %2329 = vmatmul.mubr.f32.gmra.mrb[0].mxu0 %v384
    %v2330 = vpop.f32.mrb[0].mxu0
    %v2331 = vadd.f32 0.0, %v2330
    %v2332 = vpop.f32.mrb[0].mxu0
    %v2333 = vadd.f32 0.0, %v2332
    %2334 = vmatprep.mubr.f32.mxu0 %v393
    %2335 = vmatmul.mubr.f32.gmra.mrb[0].mxu0 %v392
    %v2336 = vpop.f32.mrb[0].mxu0
    %v2337 = vadd.f32 0.0, %v2336
    %v2338 = vpop.f32.mrb[0].mxu0
    %v2339 = vadd.f32 0.0, %v2338
    %2340 = vmatprep.mubr.f32.mxu0 %v401
    %2341 = vmatmul.mubr.f32.gmra.mrb[0].mxu0 %v400
    %v2342 = vpop.f32.mrb[0].mxu0
    %v2343 = vadd.f32 0.0, %v2342
    %v2344 = vpop.f32.mrb[0].mxu0
    %v2345 = vadd.f32 0.0, %v2344
    %2346 = vmatprep.mubr.f32.mxu0 %v409
    %2347 = vmatmul.mubr.f32.gmra.mrb[0].mxu0 %v408
    %v2348 = vpop.f32.mrb[0].mxu0
    %v2349 = vadd.f32 0.0, %v2348
    %v2350 = vpop.f32.mrb[0].mxu0
    %v2351 = vadd.f32 0.0, %v2350
    %2352 = vmatprep.mubr.f32.mxu0 %v417
    %2353 = vmatmul.mubr.f32.gmra.mrb[0].mxu0 %v416
    %v2354 = vpop.f32.mrb[0].mxu0
    %v2355 = vadd.f32 0.0, %v2354
    %v2356 = vpop.f32.mrb[0].mxu0
    %v2357 = vadd.f32 0.0, %v2356
    %2358 = vmatprep.mubr.f32.mxu0 %v425
    %2359 = vmatmul.mubr.f32.gmra.mrb[0].mxu0 %v424
    %v2360 = vpop.f32.mrb[0].mxu0
    %v2361 = vadd.f32 0.0, %v2360
    %v2362 = vpop.f32.mrb[0].mxu0
    %v2363 = vadd.f32 0.0, %v2362
    %2364 = vmatprep.mubr.f32.mxu0 %v433
    %2365 = vmatmul.mubr.f32.gmra.mrb[0].mxu0 %v432
    %v2366 = vpop.f32.mrb[0].mxu0
    %v2367 = vadd.f32 0.0, %v2366
    %v2368 = vpop.f32.mrb[0].mxu0
    %v2369 = vadd.f32 0.0, %v2368
    %2370 = vmatprep.mubr.f32.mxu0 %v441
    %2371 = vmatmul.mubr.f32.gmra.mrb[0].mxu0 %v440
    %v2372 = vpop.f32.mrb[0].mxu0
    %v2373 = vadd.f32 0.0, %v2372
    %v2374 = vpop.f32.mrb[0].mxu0
    %v2375 = vadd.f32 0.0, %v2374
    %2376 = vmatprep.mubr.f32.mxu0 %v449
    %2377 = vmatmul.mubr.f32.gmra.mrb[0].mxu0 %v448
    %v2378 = vpop.f32.mrb[0].mxu0
    %v2379 = vadd.f32 0.0, %v2378
    %v2380 = vpop.f32.mrb[0].mxu0
    %v2381 = vadd.f32 0.0, %v2380
    %2382 = vmatprep.mubr.f32.mxu0 %v457
    %2383 = vmatmul.mubr.f32.gmra.mrb[0].mxu0 %v456
    %v2384 = vpop.f32.mrb[0].mxu0
    %v2385 = vadd.f32 0.0, %v2384
    %v2386 = vpop.f32.mrb[0].mxu0
    %v2387 = vadd.f32 0.0, %v2386
    %2388 = vdwg.mxu0
    %2389 = vmatprep.subr.mxu0 %v723
    %2390 = vmatpush1.msra.mxu0 %v722
    %2391 = vmatprep.subr.mxu0 %v727
    %2392 = vmatpush1.msra.mxu0 %v726
    %2393 = vmatprep.subr.mxu0 %v731
    %2394 = vmatpush1.msra.mxu0 %v730
    %2395 = vmatprep.subr.mxu0 %v735
    %2396 = vmatpush1.msra.mxu0 %v734
    %2397 = vmatprep.subr.mxu0 %v739
    %2398 = vmatpush1.msra.mxu0 %v738
    %2399 = vmatprep.subr.mxu0 %v743
    %2400 = vmatpush1.msra.mxu0 %v742
    %2401 = vmatprep.subr.mxu0 %v747
    %2402 = vmatpush1.msra.mxu0 %v746
    %2403 = vmatprep.subr.mxu0 %v751
    %2404 = vmatpush1.msra.mxu0 %v750
    %2405 = vmatprep.subr.mxu0 %v755
    %2406 = vmatpush1.msra.mxu0 %v754
    %2407 = vmatprep.subr.mxu0 %v759
    %2408 = vmatpush1.msra.mxu0 %v758
    %2409 = vmatprep.subr.mxu0 %v763
    %2410 = vmatpush1.msra.mxu0 %v762
    %2411 = vmatprep.subr.mxu0 %v767
    %2412 = vmatpush1.msra.mxu0 %v766
    %2413 = vmatprep.subr.mxu0 %v771
    %2414 = vmatpush1.msra.mxu0 %v770
    %2415 = vmatprep.subr.mxu0 %v775
    %2416 = vmatpush1.msra.mxu0 %v774
    %2417 = vmatprep.subr.mxu0 %v779
    %2418 = vmatpush1.msra.mxu0 %v778
    %2419 = vmatprep.subr.mxu0 %v783
    %2420 = vmatpush1.msra.mxu0 %v782
    %2421 = vmatprep.subr.mxu0 %v787
    %2422 = vmatpush1.msra.mxu0 %v786
    %2423 = vmatprep.subr.mxu0 %v791
    %2424 = vmatpush1.msra.mxu0 %v790
    %2425 = vmatprep.subr.mxu0 %v795
    %2426 = vmatpush1.msra.mxu0 %v794
    %2427 = vmatprep.subr.mxu0 %v799
    %2428 = vmatpush1.msra.mxu0 %v798
    %2429 = vmatprep.subr.mxu0 %v803
    %2430 = vmatpush1.msra.mxu0 %v802
    %2431 = vmatprep.subr.mxu0 %v807
    %2432 = vmatpush1.msra.mxu0 %v806
    %2433 = vmatprep.subr.mxu0 %v811
    %2434 = vmatpush1.msra.mxu0 %v810
    %2435 = vmatprep.subr.mxu0 %v815
    %2436 = vmatpush1.msra.mxu0 %v814
    %2437 = vmatprep.subr.mxu0 %v819
    %2438 = vmatpush1.msra.mxu0 %v818
    %2439 = vmatprep.subr.mxu0 %v823
    %2440 = vmatpush1.msra.mxu0 %v822
    %2441 = vmatprep.subr.mxu0 %v827
    %2442 = vmatpush1.msra.mxu0 %v826
    %2443 = vmatprep.subr.mxu0 %v831
    %2444 = vmatpush1.msra.mxu0 %v830
    %2445 = vmatprep.subr.mxu0 %v835
    %2446 = vmatpush1.msra.mxu0 %v834
    %2447 = vmatprep.subr.mxu0 %v839
    %2448 = vmatpush1.msra.mxu0 %v838
    %2449 = vmatprep.subr.mxu0 %v843
    %2450 = vmatpush1.msra.mxu0 %v842
    %2451 = vmatprep.subr.mxu0 %v847
    %2452 = vmatpush1.msra.mxu0 %v846
    %2453 = vmatprep.mubr.f32.mxu0 %v211
    %2454 = vmatmul.mubr.f32.gmra.mrb[0].mxu0 %v210
    %v2455 = vpop.f32.mrb[0].mxu0
    %v2456 = vadd.f32 %v2199, %v2455
    %v2457 = vpop.f32.mrb[0].mxu0
    %v2458 = vadd.f32 %v2201, %v2457
    %2459 = vmatprep.mubr.f32.mxu0 %v219
    %2460 = vmatmul.mubr.f32.gmra.mrb[0].mxu0 %v218
    %v2461 = vpop.f32.mrb[0].mxu0
    %v2462 = vadd.f32 %v2205, %v2461
    %v2463 = vpop.f32.mrb[0].mxu0
    %v2464 = vadd.f32 %v2207, %v2463
    %2465 = vmatprep.mubr.f32.mxu0 %v227
    %2466 = vmatmul.mubr.f32.gmra.mrb[0].mxu0 %v226
    %v2467 = vpop.f32.mrb[0].mxu0
    %v2468 = vadd.f32 %v2211, %v2467
    %v2469 = vpop.f32.mrb[0].mxu0
    %v2470 = vadd.f32 %v2213, %v2469
    %2471 = vmatprep.mubr.f32.mxu0 %v235
    %2472 = vmatmul.mubr.f32.gmra.mrb[0].mxu0 %v234
    %v2473 = vpop.f32.mrb[0].mxu0
    %v2474 = vadd.f32 %v2217, %v2473
    %v2475 = vpop.f32.mrb[0].mxu0
    %v2476 = vadd.f32 %v2219, %v2475
    %2477 = vmatprep.mubr.f32.mxu0 %v243
    %2478 = vmatmul.mubr.f32.gmra.mrb[0].mxu0 %v242
    %v2479 = vpop.f32.mrb[0].mxu0
    %v2480 = vadd.f32 %v2223, %v2479
    %v2481 = vpop.f32.mrb[0].mxu0
    %v2482 = vadd.f32 %v2225, %v2481
    %2483 = vmatprep.mubr.f32.mxu0 %v251
    %2484 = vmatmul.mubr.f32.gmra.mrb[0].mxu0 %v250
    %v2485 = vpop.f32.mrb[0].mxu0
    %v2486 = vadd.f32 %v2229, %v2485
    %v2487 = vpop.f32.mrb[0].mxu0
    %v2488 = vadd.f32 %v2231, %v2487
    %2489 = vmatprep.mubr.f32.mxu0 %v259
    %2490 = vmatmul.mubr.f32.gmra.mrb[0].mxu0 %v258
    %v2491 = vpop.f32.mrb[0].mxu0
    %v2492 = vadd.f32 %v2235, %v2491
    %v2493 = vpop.f32.mrb[0].mxu0
    %v2494 = vadd.f32 %v2237, %v2493
    %2495 = vmatprep.mubr.f32.mxu0 %v267
    %2496 = vmatmul.mubr.f32.gmra.mrb[0].mxu0 %v266
    %v2497 = vpop.f32.mrb[0].mxu0
    %v2498 = vadd.f32 %v2241, %v2497
    %v2499 = vpop.f32.mrb[0].mxu0
    %v2500 = vadd.f32 %v2243, %v2499
    %2501 = vmatprep.mubr.f32.mxu0 %v275
    %2502 = vmatmul.mubr.f32.gmra.mrb[0].mxu0 %v274
    %v2503 = vpop.f32.mrb[0].mxu0
    %v2504 = vadd.f32 %v2247, %v2503
    %v2505 = vpop.f32.mrb[0].mxu0
    %v2506 = vadd.f32 %v2249, %v2505
    %2507 = vmatprep.mubr.f32.mxu0 %v283
    %2508 = vmatmul.mubr.f32.gmra.mrb[0].mxu0 %v282
    %v2509 = vpop.f32.mrb[0].mxu0
    %v2510 = vadd.f32 %v2253, %v2509
    %v2511 = vpop.f32.mrb[0].mxu0
    %v2512 = vadd.f32 %v2255, %v2511
    %2513 = vmatprep.mubr.f32.mxu0 %v291
    %2514 = vmatmul.mubr.f32.gmra.mrb[0].mxu0 %v290
    %v2515 = vpop.f32.mrb[0].mxu0
    %v2516 = vadd.f32 %v2259, %v2515
    %v2517 = vpop.f32.mrb[0].mxu0
    %v2518 = vadd.f32 %v2261, %v2517
    %2519 = vmatprep.mubr.f32.mxu0 %v299
    %2520 = vmatmul.mubr.f32.gmra.mrb[0].mxu0 %v298
    %v2521 = vpop.f32.mrb[0].mxu0
    %v2522 = vadd.f32 %v2265, %v2521
    %v2523 = vpop.f32.mrb[0].mxu0
    %v2524 = vadd.f32 %v2267, %v2523
    %2525 = vmatprep.mubr.f32.mxu0 %v307
    %2526 = vmatmul.mubr.f32.gmra.mrb[0].mxu0 %v306
    %v2527 = vpop.f32.mrb[0].mxu0
    %v2528 = vadd.f32 %v2271, %v2527
    %v2529 = vpop.f32.mrb[0].mxu0
    %v2530 = vadd.f32 %v2273, %v2529
    %2531 = vmatprep.mubr.f32.mxu0 %v315
    %2532 = vmatmul.mubr.f32.gmra.mrb[0].mxu0 %v314
    %v2533 = vpop.f32.mrb[0].mxu0
    %v2534 = vadd.f32 %v2277, %v2533
    %v2535 = vpop.f32.mrb[0].mxu0
    %v2536 = vadd.f32 %v2279, %v2535
    %2537 = vmatprep.mubr.f32.mxu0 %v323
    %2538 = vmatmul.mubr.f32.gmra.mrb[0].mxu0 %v322
    %v2539 = vpop.f32.mrb[0].mxu0
    %v2540 = vadd.f32 %v2283, %v2539
    %v2541 = vpop.f32.mrb[0].mxu0
    %v2542 = vadd.f32 %v2285, %v2541
    %2543 = vmatprep.mubr.f32.mxu0 %v331
    %2544 = vmatmul.mubr.f32.gmra.mrb[0].mxu0 %v330
    %v2545 = vpop.f32.mrb[0].mxu0
    %v2546 = vadd.f32 %v2289, %v2545
    %v2547 = vpop.f32.mrb[0].mxu0
    %v2548 = vadd.f32 %v2291, %v2547
    %2549 = vmatprep.mubr.f32.mxu0 %v339
    %2550 = vmatmul.mubr.f32.gmra.mrb[0].mxu0 %v338
    %v2551 = vpop.f32.mrb[0].mxu0
    %v2552 = vadd.f32 %v2295, %v2551
    %v2553 = vpop.f32.mrb[0].mxu0
    %v2554 = vadd.f32 %v2297, %v2553
    %2555 = vmatprep.mubr.f32.mxu0 %v347
    %2556 = vmatmul.mubr.f32.gmra.mrb[0].mxu0 %v346
    %v2557 = vpop.f32.mrb[0].mxu0
    %v2558 = vadd.f32 %v2301, %v2557
    %v2559 = vpop.f32.mrb[0].mxu0
    %v2560 = vadd.f32 %v2303, %v2559
    %2561 = vmatprep.mubr.f32.mxu0 %v355
    %2562 = vmatmul.mubr.f32.gmra.mrb[0].mxu0 %v354
    %v2563 = vpop.f32.mrb[0].mxu0
    %v2564 = vadd.f32 %v2307, %v2563
    %v2565 = vpop.f32.mrb[0].mxu0
    %v2566 = vadd.f32 %v2309, %v2565
    %2567 = vmatprep.mubr.f32.mxu0 %v363
    %2568 = vmatmul.mubr.f32.gmra.mrb[0].mxu0 %v362
    %v2569 = vpop.f32.mrb[0].mxu0
    %v2570 = vadd.f32 %v2313, %v2569
    %v2571 = vpop.f32.mrb[0].mxu0
    %v2572 = vadd.f32 %v2315, %v2571
    %2573 = vmatprep.mubr.f32.mxu0 %v371
    %2574 = vmatmul.mubr.f32.gmra.mrb[0].mxu0 %v370
    %v2575 = vpop.f32.mrb[0].mxu0
    %v2576 = vadd.f32 %v2319, %v2575
    %v2577 = vpop.f32.mrb[0].mxu0
    %v2578 = vadd.f32 %v2321, %v2577
    %2579 = vmatprep.mubr.f32.mxu0 %v379
    %2580 = vmatmul.mubr.f32.gmra.mrb[0].mxu0 %v378
    %v2581 = vpop.f32.mrb[0].mxu0
    %v2582 = vadd.f32 %v2325, %v2581
    %v2583 = vpop.f32.mrb[0].mxu0
    %v2584 = vadd.f32 %v2327, %v2583
    %2585 = vmatprep.mubr.f32.mxu0 %v387
    %2586 = vmatmul.mubr.f32.gmra.mrb[0].mxu0 %v386
    %v2587 = vpop.f32.mrb[0].mxu0
    %v2588 = vadd.f32 %v2331, %v2587
    %v2589 = vpop.f32.mrb[0].mxu0
    %v2590 = vadd.f32 %v2333, %v2589
    %2591 = vmatprep.mubr.f32.mxu0 %v395
    %2592 = vmatmul.mubr.f32.gmra.mrb[0].mxu0 %v394
    %v2593 = vpop.f32.mrb[0].mxu0
    %v2594 = vadd.f32 %v2337, %v2593
    %v2595 = vpop.f32.mrb[0].mxu0
    %v2596 = vadd.f32 %v2339, %v2595
    %2597 = vmatprep.mubr.f32.mxu0 %v403
    %2598 = vmatmul.mubr.f32.gmra.mrb[0].mxu0 %v402
    %v2599 = vpop.f32.mrb[0].mxu0
    %v2600 = vadd.f32 %v2343, %v2599
    %v2601 = vpop.f32.mrb[0].mxu0
    %v2602 = vadd.f32 %v2345, %v2601
    %2603 = vmatprep.mubr.f32.mxu0 %v411
    %2604 = vmatmul.mubr.f32.gmra.mrb[0].mxu0 %v410
    %v2605 = vpop.f32.mrb[0].mxu0
    %v2606 = vadd.f32 %v2349, %v2605
    %v2607 = vpop.f32.mrb[0].mxu0
    %v2608 = vadd.f32 %v2351, %v2607
    %2609 = vmatprep.mubr.f32.mxu0 %v419
    %2610 = vmatmul.mubr.f32.gmra.mrb[0].mxu0 %v418
    %v2611 = vpop.f32.mrb[0].mxu0
    %v2612 = vadd.f32 %v2355, %v2611
    %v2613 = vpop.f32.mrb[0].mxu0
    %v2614 = vadd.f32 %v2357, %v2613
    %2615 = vmatprep.mubr.f32.mxu0 %v427
    %2616 = vmatmul.mubr.f32.gmra.mrb[0].mxu0 %v426
    %v2617 = vpop.f32.mrb[0].mxu0
    %v2618 = vadd.f32 %v2361, %v2617
    %v2619 = vpop.f32.mrb[0].mxu0
    %v2620 = vadd.f32 %v2363, %v2619
    %2621 = vmatprep.mubr.f32.mxu0 %v435
    %2622 = vmatmul.mubr.f32.gmra.mrb[0].mxu0 %v434
    %v2623 = vpop.f32.mrb[0].mxu0
    %v2624 = vadd.f32 %v2367, %v2623
    %v2625 = vpop.f32.mrb[0].mxu0
    %v2626 = vadd.f32 %v2369, %v2625
    %2627 = vmatprep.mubr.f32.mxu0 %v443
    %2628 = vmatmul.mubr.f32.gmra.mrb[0].mxu0 %v442
    %v2629 = vpop.f32.mrb[0].mxu0
    %v2630 = vadd.f32 %v2373, %v2629
    %v2631 = vpop.f32.mrb[0].mxu0
    %v2632 = vadd.f32 %v2375, %v2631
    %2633 = vmatprep.mubr.f32.mxu0 %v451
    %2634 = vmatmul.mubr.f32.gmra.mrb[0].mxu0 %v450
    %v2635 = vpop.f32.mrb[0].mxu0
    %v2636 = vadd.f32 %v2379, %v2635
    %v2637 = vpop.f32.mrb[0].mxu0
    %v2638 = vadd.f32 %v2381, %v2637
    %2639 = vmatprep.mubr.f32.mxu0 %v459
    %2640 = vmatmul.mubr.f32.gmra.mrb[0].mxu0 %v458
    %v2641 = vpop.f32.mrb[0].mxu0
    %v2642 = vadd.f32 %v2385, %v2641
    %v2643 = vpop.f32.mrb[0].mxu0
    %v2644 = vadd.f32 %v2387, %v2643
    %2645 = vdwg.mxu0
    %2646 = vmatprep.subr.mxu0 %v851
    %2647 = vmatpush1.msra.mxu0 %v850
    %2648 = vmatprep.subr.mxu0 %v855
    %2649 = vmatpush1.msra.mxu0 %v854
    %2650 = vmatprep.subr.mxu0 %v859
    %2651 = vmatpush1.msra.mxu0 %v858
    %2652 = vmatprep.subr.mxu0 %v863
    %2653 = vmatpush1.msra.mxu0 %v862
    %2654 = vmatprep.subr.mxu0 %v867
    %2655 = vmatpush1.msra.mxu0 %v866
    %2656 = vmatprep.subr.mxu0 %v871
    %2657 = vmatpush1.msra.mxu0 %v870
    %2658 = vmatprep.subr.mxu0 %v875
    %2659 = vmatpush1.msra.mxu0 %v874
    %2660 = vmatprep.subr.mxu0 %v879
    %2661 = vmatpush1.msra.mxu0 %v878
    %2662 = vmatprep.subr.mxu0 %v883
    %2663 = vmatpush1.msra.mxu0 %v882
    %2664 = vmatprep.subr.mxu0 %v887
    %2665 = vmatpush1.msra.mxu0 %v886
    %2666 = vmatprep.subr.mxu0 %v891
    %2667 = vmatpush1.msra.mxu0 %v890
    %2668 = vmatprep.subr.mxu0 %v895
    %2669 = vmatpush1.msra.mxu0 %v894
    %2670 = vmatprep.subr.mxu0 %v899
    %2671 = vmatpush1.msra.mxu0 %v898
    %2672 = vmatprep.subr.mxu0 %v903
    %2673 = vmatpush1.msra.mxu0 %v902
    %2674 = vmatprep.subr.mxu0 %v907
    %2675 = vmatpush1.msra.mxu0 %v906
    %2676 = vmatprep.subr.mxu0 %v911
    %2677 = vmatpush1.msra.mxu0 %v910
    %2678 = vmatprep.subr.mxu0 %v915
    %2679 = vmatpush1.msra.mxu0 %v914
    %2680 = vmatprep.subr.mxu0 %v919
    %2681 = vmatpush1.msra.mxu0 %v918
    %2682 = vmatprep.subr.mxu0 %v923
    %2683 = vmatpush1.msra.mxu0 %v922
    %2684 = vmatprep.subr.mxu0 %v927
    %2685 = vmatpush1.msra.mxu0 %v926
    %2686 = vmatprep.subr.mxu0 %v931
    %2687 = vmatpush1.msra.mxu0 %v930
    %2688 = vmatprep.subr.mxu0 %v935
    %2689 = vmatpush1.msra.mxu0 %v934
    %2690 = vmatprep.subr.mxu0 %v939
    %2691 = vmatpush1.msra.mxu0 %v938
    %2692 = vmatprep.subr.mxu0 %v943
    %2693 = vmatpush1.msra.mxu0 %v942
    %2694 = vmatprep.subr.mxu0 %v947
    %2695 = vmatpush1.msra.mxu0 %v946
    %2696 = vmatprep.subr.mxu0 %v951
    %2697 = vmatpush1.msra.mxu0 %v950
    %2698 = vmatprep.subr.mxu0 %v955
    %2699 = vmatpush1.msra.mxu0 %v954
    %2700 = vmatprep.subr.mxu0 %v959
    %2701 = vmatpush1.msra.mxu0 %v958
    %2702 = vmatprep.subr.mxu0 %v963
    %2703 = vmatpush1.msra.mxu0 %v962
    %2704 = vmatprep.subr.mxu0 %v967
    %2705 = vmatpush1.msra.mxu0 %v966
    %2706 = vmatprep.subr.mxu0 %v971
    %2707 = vmatpush1.msra.mxu0 %v970
    %2708 = vmatprep.subr.mxu0 %v975
    %2709 = vmatpush1.msra.mxu0 %v974
    %2710 = vmatprep.mubr.f32.mxu0 %v213
    %2711 = vmatmul.mubr.f32.gmra.mrb[0].mxu0 %v212
    %v2712 = vpop.f32.mrb[0].mxu0
    %v2713 = vadd.f32 %v2456, %v2712
    %v2714 = vpop.f32.mrb[0].mxu0
    %v2715 = vadd.f32 %v2458, %v2714
    %2716 = vmatprep.mubr.f32.mxu0 %v221
    %2717 = vmatmul.mubr.f32.gmra.mrb[0].mxu0 %v220
    %v2718 = vpop.f32.mrb[0].mxu0
    %v2719 = vadd.f32 %v2462, %v2718
    %v2720 = vpop.f32.mrb[0].mxu0
    %v2721 = vadd.f32 %v2464, %v2720
    %2722 = vmatprep.mubr.f32.mxu0 %v229
    %2723 = vmatmul.mubr.f32.gmra.mrb[0].mxu0 %v228
    %v2724 = vpop.f32.mrb[0].mxu0
    %v2725 = vadd.f32 %v2468, %v2724
    %v2726 = vpop.f32.mrb[0].mxu0
    %v2727 = vadd.f32 %v2470, %v2726
    %2728 = vmatprep.mubr.f32.mxu0 %v237
    %2729 = vmatmul.mubr.f32.gmra.mrb[0].mxu0 %v236
    %v2730 = vpop.f32.mrb[0].mxu0
    %v2731 = vadd.f32 %v2474, %v2730
    %v2732 = vpop.f32.mrb[0].mxu0
    %v2733 = vadd.f32 %v2476, %v2732
    %2734 = vmatprep.mubr.f32.mxu0 %v245
    %2735 = vmatmul.mubr.f32.gmra.mrb[0].mxu0 %v244
    %v2736 = vpop.f32.mrb[0].mxu0
    %v2737 = vadd.f32 %v2480, %v2736
    %v2738 = vpop.f32.mrb[0].mxu0
    %v2739 = vadd.f32 %v2482, %v2738
    %2740 = vmatprep.mubr.f32.mxu0 %v253
    %2741 = vmatmul.mubr.f32.gmra.mrb[0].mxu0 %v252
    %v2742 = vpop.f32.mrb[0].mxu0
    %v2743 = vadd.f32 %v2486, %v2742
    %v2744 = vpop.f32.mrb[0].mxu0
    %v2745 = vadd.f32 %v2488, %v2744
    %2746 = vmatprep.mubr.f32.mxu0 %v261
    %2747 = vmatmul.mubr.f32.gmra.mrb[0].mxu0 %v260
    %v2748 = vpop.f32.mrb[0].mxu0
    %v2749 = vadd.f32 %v2492, %v2748
    %v2750 = vpop.f32.mrb[0].mxu0
    %v2751 = vadd.f32 %v2494, %v2750
    %2752 = vmatprep.mubr.f32.mxu0 %v269
    %2753 = vmatmul.mubr.f32.gmra.mrb[0].mxu0 %v268
    %v2754 = vpop.f32.mrb[0].mxu0
    %v2755 = vadd.f32 %v2498, %v2754
    %v2756 = vpop.f32.mrb[0].mxu0
    %v2757 = vadd.f32 %v2500, %v2756
    %2758 = vmatprep.mubr.f32.mxu0 %v277
    %2759 = vmatmul.mubr.f32.gmra.mrb[0].mxu0 %v276
    %v2760 = vpop.f32.mrb[0].mxu0
    %v2761 = vadd.f32 %v2504, %v2760
    %v2762 = vpop.f32.mrb[0].mxu0
    %v2763 = vadd.f32 %v2506, %v2762
    %2764 = vmatprep.mubr.f32.mxu0 %v285
    %2765 = vmatmul.mubr.f32.gmra.mrb[0].mxu0 %v284
    %v2766 = vpop.f32.mrb[0].mxu0
    %v2767 = vadd.f32 %v2510, %v2766
    %v2768 = vpop.f32.mrb[0].mxu0
    %v2769 = vadd.f32 %v2512, %v2768
    %2770 = vmatprep.mubr.f32.mxu0 %v293
    %2771 = vmatmul.mubr.f32.gmra.mrb[0].mxu0 %v292
    %v2772 = vpop.f32.mrb[0].mxu0
    %v2773 = vadd.f32 %v2516, %v2772
    %v2774 = vpop.f32.mrb[0].mxu0
    %v2775 = vadd.f32 %v2518, %v2774
    %2776 = vmatprep.mubr.f32.mxu0 %v301
    %2777 = vmatmul.mubr.f32.gmra.mrb[0].mxu0 %v300
    %v2778 = vpop.f32.mrb[0].mxu0
    %v2779 = vadd.f32 %v2522, %v2778
    %v2780 = vpop.f32.mrb[0].mxu0
    %v2781 = vadd.f32 %v2524, %v2780
    %2782 = vmatprep.mubr.f32.mxu0 %v309
    %2783 = vmatmul.mubr.f32.gmra.mrb[0].mxu0 %v308
    %v2784 = vpop.f32.mrb[0].mxu0
    %v2785 = vadd.f32 %v2528, %v2784
    %v2786 = vpop.f32.mrb[0].mxu0
    %v2787 = vadd.f32 %v2530, %v2786
    %2788 = vmatprep.mubr.f32.mxu0 %v317
    %2789 = vmatmul.mubr.f32.gmra.mrb[0].mxu0 %v316
    %v2790 = vpop.f32.mrb[0].mxu0
    %v2791 = vadd.f32 %v2534, %v2790
    %v2792 = vpop.f32.mrb[0].mxu0
    %v2793 = vadd.f32 %v2536, %v2792
    %2794 = vmatprep.mubr.f32.mxu0 %v325
    %2795 = vmatmul.mubr.f32.gmra.mrb[0].mxu0 %v324
    %v2796 = vpop.f32.mrb[0].mxu0
    %v2797 = vadd.f32 %v2540, %v2796
    %v2798 = vpop.f32.mrb[0].mxu0
    %v2799 = vadd.f32 %v2542, %v2798
    %2800 = vmatprep.mubr.f32.mxu0 %v333
    %2801 = vmatmul.mubr.f32.gmra.mrb[0].mxu0 %v332
    %v2802 = vpop.f32.mrb[0].mxu0
    %v2803 = vadd.f32 %v2546, %v2802
    %v2804 = vpop.f32.mrb[0].mxu0
    %v2805 = vadd.f32 %v2548, %v2804
    %2806 = vmatprep.mubr.f32.mxu0 %v341
    %2807 = vmatmul.mubr.f32.gmra.mrb[0].mxu0 %v340
    %v2808 = vpop.f32.mrb[0].mxu0
    %v2809 = vadd.f32 %v2552, %v2808
    %v2810 = vpop.f32.mrb[0].mxu0
    %v2811 = vadd.f32 %v2554, %v2810
    %2812 = vmatprep.mubr.f32.mxu0 %v349
    %2813 = vmatmul.mubr.f32.gmra.mrb[0].mxu0 %v348
    %v2814 = vpop.f32.mrb[0].mxu0
    %v2815 = vadd.f32 %v2558, %v2814
    %v2816 = vpop.f32.mrb[0].mxu0
    %v2817 = vadd.f32 %v2560, %v2816
    %2818 = vmatprep.mubr.f32.mxu0 %v357
    %2819 = vmatmul.mubr.f32.gmra.mrb[0].mxu0 %v356
    %v2820 = vpop.f32.mrb[0].mxu0
    %v2821 = vadd.f32 %v2564, %v2820
    %v2822 = vpop.f32.mrb[0].mxu0
    %v2823 = vadd.f32 %v2566, %v2822
    %2824 = vmatprep.mubr.f32.mxu0 %v365
    %2825 = vmatmul.mubr.f32.gmra.mrb[0].mxu0 %v364
    %v2826 = vpop.f32.mrb[0].mxu0
    %v2827 = vadd.f32 %v2570, %v2826
    %v2828 = vpop.f32.mrb[0].mxu0
    %v2829 = vadd.f32 %v2572, %v2828
    %2830 = vmatprep.mubr.f32.mxu0 %v373
    %2831 = vmatmul.mubr.f32.gmra.mrb[0].mxu0 %v372
    %v2832 = vpop.f32.mrb[0].mxu0
    %v2833 = vadd.f32 %v2576, %v2832
    %v2834 = vpop.f32.mrb[0].mxu0
    %v2835 = vadd.f32 %v2578, %v2834
    %2836 = vmatprep.mubr.f32.mxu0 %v381
    %2837 = vmatmul.mubr.f32.gmra.mrb[0].mxu0 %v380
    %v2838 = vpop.f32.mrb[0].mxu0
    %v2839 = vadd.f32 %v2582, %v2838
    %v2840 = vpop.f32.mrb[0].mxu0
    %v2841 = vadd.f32 %v2584, %v2840
    %2842 = vmatprep.mubr.f32.mxu0 %v389
    %2843 = vmatmul.mubr.f32.gmra.mrb[0].mxu0 %v388
    %v2844 = vpop.f32.mrb[0].mxu0
    %v2845 = vadd.f32 %v2588, %v2844
    %v2846 = vpop.f32.mrb[0].mxu0
    %v2847 = vadd.f32 %v2590, %v2846
    %2848 = vmatprep.mubr.f32.mxu0 %v397
    %2849 = vmatmul.mubr.f32.gmra.mrb[0].mxu0 %v396
    %v2850 = vpop.f32.mrb[0].mxu0
    %v2851 = vadd.f32 %v2594, %v2850
    %v2852 = vpop.f32.mrb[0].mxu0
    %v2853 = vadd.f32 %v2596, %v2852
    %2854 = vmatprep.mubr.f32.mxu0 %v405
    %2855 = vmatmul.mubr.f32.gmra.mrb[0].mxu0 %v404
    %v2856 = vpop.f32.mrb[0].mxu0
    %v2857 = vadd.f32 %v2600, %v2856
    %v2858 = vpop.f32.mrb[0].mxu0
    %v2859 = vadd.f32 %v2602, %v2858
    %2860 = vmatprep.mubr.f32.mxu0 %v413
    %2861 = vmatmul.mubr.f32.gmra.mrb[0].mxu0 %v412
    %v2862 = vpop.f32.mrb[0].mxu0
    %v2863 = vadd.f32 %v2606, %v2862
    %v2864 = vpop.f32.mrb[0].mxu0
    %v2865 = vadd.f32 %v2608, %v2864
    %2866 = vmatprep.mubr.f32.mxu0 %v421
    %2867 = vmatmul.mubr.f32.gmra.mrb[0].mxu0 %v420
    %v2868 = vpop.f32.mrb[0].mxu0
    %v2869 = vadd.f32 %v2612, %v2868
    %v2870 = vpop.f32.mrb[0].mxu0
    %v2871 = vadd.f32 %v2614, %v2870
    %2872 = vmatprep.mubr.f32.mxu0 %v429
    %2873 = vmatmul.mubr.f32.gmra.mrb[0].mxu0 %v428
    %v2874 = vpop.f32.mrb[0].mxu0
    %v2875 = vadd.f32 %v2618, %v2874
    %v2876 = vpop.f32.mrb[0].mxu0
    %v2877 = vadd.f32 %v2620, %v2876
    %2878 = vmatprep.mubr.f32.mxu0 %v437
    %2879 = vmatmul.mubr.f32.gmra.mrb[0].mxu0 %v436
    %v2880 = vpop.f32.mrb[0].mxu0
    %v2881 = vadd.f32 %v2624, %v2880
    %v2882 = vpop.f32.mrb[0].mxu0
    %v2883 = vadd.f32 %v2626, %v2882
    %2884 = vmatprep.mubr.f32.mxu0 %v445
    %2885 = vmatmul.mubr.f32.gmra.mrb[0].mxu0 %v444
    %v2886 = vpop.f32.mrb[0].mxu0
    %v2887 = vadd.f32 %v2630, %v2886
    %v2888 = vpop.f32.mrb[0].mxu0
    %v2889 = vadd.f32 %v2632, %v2888
    %2890 = vmatprep.mubr.f32.mxu0 %v453
    %2891 = vmatmul.mubr.f32.gmra.mrb[0].mxu0 %v452
    %v2892 = vpop.f32.mrb[0].mxu0
    %v2893 = vadd.f32 %v2636, %v2892
    %v2894 = vpop.f32.mrb[0].mxu0
    %v2895 = vadd.f32 %v2638, %v2894
    %2896 = vmatprep.mubr.f32.mxu0 %v461
    %2897 = vmatmul.mubr.f32.gmra.mrb[0].mxu0 %v460
    %v2898 = vpop.f32.mrb[0].mxu0
    %v2899 = vadd.f32 %v2642, %v2898
    %v2900 = vpop.f32.mrb[0].mxu0
    %v2901 = vadd.f32 %v2644, %v2900
    %2902 = vdwg.mxu0
    %2903 = vmatprep.subr.mxu0 %v979
    %2904 = vmatpush1.msra.mxu0 %v978
    %2905 = vmatprep.subr.mxu0 %v983
    %2906 = vmatpush1.msra.mxu0 %v982
    %2907 = vmatprep.subr.mxu0 %v987
    %2908 = vmatpush1.msra.mxu0 %v986
    %2909 = vmatprep.subr.mxu0 %v991
    %2910 = vmatpush1.msra.mxu0 %v990
    %2911 = vmatprep.subr.mxu0 %v995
    %2912 = vmatpush1.msra.mxu0 %v994
    %2913 = vmatprep.subr.mxu0 %v999
    %2914 = vmatpush1.msra.mxu0 %v998
    %2915 = vmatprep.subr.mxu0 %v1003
    %2916 = vmatpush1.msra.mxu0 %v1002
    %2917 = vmatprep.subr.mxu0 %v1007
    %2918 = vmatpush1.msra.mxu0 %v1006
    %2919 = vmatprep.subr.mxu0 %v1011
    %2920 = vmatpush1.msra.mxu0 %v1010
    %2921 = vmatprep.subr.mxu0 %v1015
    %2922 = vmatpush1.msra.mxu0 %v1014
    %2923 = vmatprep.subr.mxu0 %v1019
    %2924 = vmatpush1.msra.mxu0 %v1018
    %2925 = vmatprep.subr.mxu0 %v1023
    %2926 = vmatpush1.msra.mxu0 %v1022
    %2927 = vmatprep.subr.mxu0 %v1027
    %2928 = vmatpush1.msra.mxu0 %v1026
    %2929 = vmatprep.subr.mxu0 %v1031
    %2930 = vmatpush1.msra.mxu0 %v1030
    %2931 = vmatprep.subr.mxu0 %v1035
    %2932 = vmatpush1.msra.mxu0 %v1034
    %2933 = vmatprep.subr.mxu0 %v1039
    %2934 = vmatpush1.msra.mxu0 %v1038
    %2935 = vmatprep.subr.mxu0 %v1043
    %2936 = vmatpush1.msra.mxu0 %v1042
    %2937 = vmatprep.subr.mxu0 %v1047
    %2938 = vmatpush1.msra.mxu0 %v1046
    %2939 = vmatprep.subr.mxu0 %v1051
    %2940 = vmatpush1.msra.mxu0 %v1050
    %2941 = vmatprep.subr.mxu0 %v1055
    %2942 = vmatpush1.msra.mxu0 %v1054
    %2943 = vmatprep.subr.mxu0 %v1059
    %2944 = vmatpush1.msra.mxu0 %v1058
    %2945 = vmatprep.subr.mxu0 %v1063
    %2946 = vmatpush1.msra.mxu0 %v1062
    %2947 = vmatprep.subr.mxu0 %v1067
    %2948 = vmatpush1.msra.mxu0 %v1066
    %2949 = vmatprep.subr.mxu0 %v1071
    %2950 = vmatpush1.msra.mxu0 %v1070
    %2951 = vmatprep.subr.mxu0 %v1075
    %2952 = vmatpush1.msra.mxu0 %v1074
    %2953 = vmatprep.subr.mxu0 %v1079
    %2954 = vmatpush1.msra.mxu0 %v1078
    %2955 = vmatprep.subr.mxu0 %v1083
    %2956 = vmatpush1.msra.mxu0 %v1082
    %2957 = vmatprep.subr.mxu0 %v1087
    %2958 = vmatpush1.msra.mxu0 %v1086
    %2959 = vmatprep.subr.mxu0 %v1091
    %2960 = vmatpush1.msra.mxu0 %v1090
    %2961 = vmatprep.subr.mxu0 %v1095
    %2962 = vmatpush1.msra.mxu0 %v1094
    %2963 = vmatprep.subr.mxu0 %v1099
    %2964 = vmatpush1.msra.mxu0 %v1098
    %2965 = vmatprep.subr.mxu0 %v1103
    %2966 = vmatpush1.msra.mxu0 %v1102
    %2967 = vmatprep.mubr.f32.mxu0 %v215
    %2968 = vmatmul.mubr.f32.gmra.mrb[0].mxu0 %v214
    %v2969 = vpop.f32.mrb[0].mxu0
    %v2970 = vadd.f32 %v2713, %v2969
    %v2971 = vpop.f32.mrb[0].mxu0
    %v2972 = vadd.f32 %v2715, %v2971
    %2973 = vmatprep.mubr.f32.mxu0 %v223
    %2974 = vmatmul.mubr.f32.gmra.mrb[0].mxu0 %v222
    %v2975 = vpop.f32.mrb[0].mxu0
    %v2976 = vadd.f32 %v2719, %v2975
    %v2977 = vpop.f32.mrb[0].mxu0
    %v2978 = vadd.f32 %v2721, %v2977
    %2979 = vmatprep.mubr.f32.mxu0 %v231
    %2980 = vmatmul.mubr.f32.gmra.mrb[0].mxu0 %v230
    %v2981 = vpop.f32.mrb[0].mxu0
    %v2982 = vadd.f32 %v2725, %v2981
    %v2983 = vpop.f32.mrb[0].mxu0
    %v2984 = vadd.f32 %v2727, %v2983
    %2985 = vmatprep.mubr.f32.mxu0 %v239
    %2986 = vmatmul.mubr.f32.gmra.mrb[0].mxu0 %v238
    %v2987 = vpop.f32.mrb[0].mxu0
    %v2988 = vadd.f32 %v2731, %v2987
    %v2989 = vpop.f32.mrb[0].mxu0
    %v2990 = vadd.f32 %v2733, %v2989
    %2991 = vmatprep.mubr.f32.mxu0 %v247
    %2992 = vmatmul.mubr.f32.gmra.mrb[0].mxu0 %v246
    %v2993 = vpop.f32.mrb[0].mxu0
    %v2994 = vadd.f32 %v2737, %v2993
    %v2995 = vpop.f32.mrb[0].mxu0
    %v2996 = vadd.f32 %v2739, %v2995
    %2997 = vmatprep.mubr.f32.mxu0 %v255
    %2998 = vmatmul.mubr.f32.gmra.mrb[0].mxu0 %v254
    %v2999 = vpop.f32.mrb[0].mxu0
    %v3000 = vadd.f32 %v2743, %v2999
    %v3001 = vpop.f32.mrb[0].mxu0
    %v3002 = vadd.f32 %v2745, %v3001
    %3003 = vmatprep.mubr.f32.mxu0 %v263
    %3004 = vmatmul.mubr.f32.gmra.mrb[0].mxu0 %v262
    %v3005 = vpop.f32.mrb[0].mxu0
    %v3006 = vadd.f32 %v2749, %v3005
    %v3007 = vpop.f32.mrb[0].mxu0
    %v3008 = vadd.f32 %v2751, %v3007
    %3009 = vmatprep.mubr.f32.mxu0 %v271
    %3010 = vmatmul.mubr.f32.gmra.mrb[0].mxu0 %v270
    %v3011 = vpop.f32.mrb[0].mxu0
    %v3012 = vadd.f32 %v2755, %v3011
    %v3013 = vpop.f32.mrb[0].mxu0
    %v3014 = vadd.f32 %v2757, %v3013
    %3015 = vmatprep.mubr.f32.mxu0 %v279
    %3016 = vmatmul.mubr.f32.gmra.mrb[0].mxu0 %v278
    %v3017 = vpop.f32.mrb[0].mxu0
    %v3018 = vadd.f32 %v2761, %v3017
    %v3019 = vpop.f32.mrb[0].mxu0
    %v3020 = vadd.f32 %v2763, %v3019
    %3021 = vmatprep.mubr.f32.mxu0 %v287
    %3022 = vmatmul.mubr.f32.gmra.mrb[0].mxu0 %v286
    %v3023 = vpop.f32.mrb[0].mxu0
    %v3024 = vadd.f32 %v2767, %v3023
    %v3025 = vpop.f32.mrb[0].mxu0
    %v3026 = vadd.f32 %v2769, %v3025
    %3027 = vmatprep.mubr.f32.mxu0 %v295
    %3028 = vmatmul.mubr.f32.gmra.mrb[0].mxu0 %v294
    %v3029 = vpop.f32.mrb[0].mxu0
    %v3030 = vadd.f32 %v2773, %v3029
    %v3031 = vpop.f32.mrb[0].mxu0
    %v3032 = vadd.f32 %v2775, %v3031
    %3033 = vmatprep.mubr.f32.mxu0 %v303
    %3034 = vmatmul.mubr.f32.gmra.mrb[0].mxu0 %v302
    %v3035 = vpop.f32.mrb[0].mxu0
    %v3036 = vadd.f32 %v2779, %v3035
    %v3037 = vpop.f32.mrb[0].mxu0
    %v3038 = vadd.f32 %v2781, %v3037
    %3039 = vmatprep.mubr.f32.mxu0 %v311
    %3040 = vmatmul.mubr.f32.gmra.mrb[0].mxu0 %v310
    %v3041 = vpop.f32.mrb[0].mxu0
    %v3042 = vadd.f32 %v2785, %v3041
    %v3043 = vpop.f32.mrb[0].mxu0
    %v3044 = vadd.f32 %v2787, %v3043
    %3045 = vmatprep.mubr.f32.mxu0 %v319
    %3046 = vmatmul.mubr.f32.gmra.mrb[0].mxu0 %v318
    %v3047 = vpop.f32.mrb[0].mxu0
    %v3048 = vadd.f32 %v2791, %v3047
    %v3049 = vpop.f32.mrb[0].mxu0
    %v3050 = vadd.f32 %v2793, %v3049
    %3051 = vmatprep.mubr.f32.mxu0 %v327
    %3052 = vmatmul.mubr.f32.gmra.mrb[0].mxu0 %v326
    %v3053 = vpop.f32.mrb[0].mxu0
    %v3054 = vadd.f32 %v2797, %v3053
    %v3055 = vpop.f32.mrb[0].mxu0
    %v3056 = vadd.f32 %v2799, %v3055
    %3057 = vmatprep.mubr.f32.mxu0 %v335
    %3058 = vmatmul.mubr.f32.gmra.mrb[0].mxu0 %v334
    %v3059 = vpop.f32.mrb[0].mxu0
    %v3060 = vadd.f32 %v2803, %v3059
    %v3061 = vpop.f32.mrb[0].mxu0
    %v3062 = vadd.f32 %v2805, %v3061
    %3063 = vmatprep.mubr.f32.mxu0 %v343
    %3064 = vmatmul.mubr.f32.gmra.mrb[0].mxu0 %v342
    %v3065 = vpop.f32.mrb[0].mxu0
    %v3066 = vadd.f32 %v2809, %v3065
    %v3067 = vpop.f32.mrb[0].mxu0
    %v3068 = vadd.f32 %v2811, %v3067
    %3069 = vmatprep.mubr.f32.mxu0 %v351
    %3070 = vmatmul.mubr.f32.gmra.mrb[0].mxu0 %v350
    %v3071 = vpop.f32.mrb[0].mxu0
    %v3072 = vadd.f32 %v2815, %v3071
    %v3073 = vpop.f32.mrb[0].mxu0
    %v3074 = vadd.f32 %v2817, %v3073
    %3075 = vmatprep.mubr.f32.mxu0 %v359
    %3076 = vmatmul.mubr.f32.gmra.mrb[0].mxu0 %v358
    %v3077 = vpop.f32.mrb[0].mxu0
    %v3078 = vadd.f32 %v2821, %v3077
    %v3079 = vpop.f32.mrb[0].mxu0
    %v3080 = vadd.f32 %v2823, %v3079
    %3081 = vmatprep.mubr.f32.mxu0 %v367
    %3082 = vmatmul.mubr.f32.gmra.mrb[0].mxu0 %v366
    %v3083 = vpop.f32.mrb[0].mxu0
    %v3084 = vadd.f32 %v2827, %v3083
    %v3085 = vpop.f32.mrb[0].mxu0
    %v3086 = vadd.f32 %v2829, %v3085
    %3087 = vmatprep.mubr.f32.mxu0 %v375
    %3088 = vmatmul.mubr.f32.gmra.mrb[0].mxu0 %v374
    %v3089 = vpop.f32.mrb[0].mxu0
    %v3090 = vadd.f32 %v2833, %v3089
    %v3091 = vpop.f32.mrb[0].mxu0
    %v3092 = vadd.f32 %v2835, %v3091
    %3093 = vmatprep.mubr.f32.mxu0 %v383
    %3094 = vmatmul.mubr.f32.gmra.mrb[0].mxu0 %v382
    %v3095 = vpop.f32.mrb[0].mxu0
    %v3096 = vadd.f32 %v2839, %v3095
    %v3097 = vpop.f32.mrb[0].mxu0
    %v3098 = vadd.f32 %v2841, %v3097
    %3099 = vmatprep.mubr.f32.mxu0 %v391
    %3100 = vmatmul.mubr.f32.gmra.mrb[0].mxu0 %v390
    %v3101 = vpop.f32.mrb[0].mxu0
    %v3102 = vadd.f32 %v2845, %v3101
    %v3103 = vpop.f32.mrb[0].mxu0
    %v3104 = vadd.f32 %v2847, %v3103
    %3105 = vmatprep.mubr.f32.mxu0 %v399
    %3106 = vmatmul.mubr.f32.gmra.mrb[0].mxu0 %v398
    %v3107 = vpop.f32.mrb[0].mxu0
    %v3108 = vadd.f32 %v2851, %v3107
    %v3109 = vpop.f32.mrb[0].mxu0
    %v3110 = vadd.f32 %v2853, %v3109
    %3111 = vmatprep.mubr.f32.mxu0 %v407
    %3112 = vmatmul.mubr.f32.gmra.mrb[0].mxu0 %v406
    %v3113 = vpop.f32.mrb[0].mxu0
    %v3114 = vadd.f32 %v2857, %v3113
    %v3115 = vpop.f32.mrb[0].mxu0
    %v3116 = vadd.f32 %v2859, %v3115
    %3117 = vmatprep.mubr.f32.mxu0 %v415
    %3118 = vmatmul.mubr.f32.gmra.mrb[0].mxu0 %v414
    %v3119 = vpop.f32.mrb[0].mxu0
    %v3120 = vadd.f32 %v2863, %v3119
    %v3121 = vpop.f32.mrb[0].mxu0
    %v3122 = vadd.f32 %v2865, %v3121
    %3123 = vmatprep.mubr.f32.mxu0 %v423
    %3124 = vmatmul.mubr.f32.gmra.mrb[0].mxu0 %v422
    %v3125 = vpop.f32.mrb[0].mxu0
    %v3126 = vadd.f32 %v2869, %v3125
    %v3127 = vpop.f32.mrb[0].mxu0
    %v3128 = vadd.f32 %v2871, %v3127
    %3129 = vmatprep.mubr.f32.mxu0 %v431
    %3130 = vmatmul.mubr.f32.gmra.mrb[0].mxu0 %v430
    %v3131 = vpop.f32.mrb[0].mxu0
    %v3132 = vadd.f32 %v2875, %v3131
    %v3133 = vpop.f32.mrb[0].mxu0
    %v3134 = vadd.f32 %v2877, %v3133
    %3135 = vmatprep.mubr.f32.mxu0 %v439
    %3136 = vmatmul.mubr.f32.gmra.mrb[0].mxu0 %v438
    %v3137 = vpop.f32.mrb[0].mxu0
    %v3138 = vadd.f32 %v2881, %v3137
    %v3139 = vpop.f32.mrb[0].mxu0
    %v3140 = vadd.f32 %v2883, %v3139
    %3141 = vmatprep.mubr.f32.mxu0 %v447
    %3142 = vmatmul.mubr.f32.gmra.mrb[0].mxu0 %v446
    %v3143 = vpop.f32.mrb[0].mxu0
    %v3144 = vadd.f32 %v2887, %v3143
    %v3145 = vpop.f32.mrb[0].mxu0
    %v3146 = vadd.f32 %v2889, %v3145
    %3147 = vmatprep.mubr.f32.mxu0 %v455
    %3148 = vmatmul.mubr.f32.gmra.mrb[0].mxu0 %v454
    %v3149 = vpop.f32.mrb[0].mxu0
    %v3150 = vadd.f32 %v2893, %v3149
    %v3151 = vpop.f32.mrb[0].mxu0
    %v3152 = vadd.f32 %v2895, %v3151
    %3153 = vmatprep.mubr.f32.mxu0 %v463
    %3154 = vmatmul.mubr.f32.gmra.mrb[0].mxu0 %v462
    %v3155 = vpop.f32.mrb[0].mxu0
    %v3156 = vadd.f32 %v2899, %v3155
    %v3157 = vpop.f32.mrb[0].mxu0
    %v3158 = vadd.f32 %v2901, %v3157
    %3159 = vdwg.mxu0
    %v3160 = vadd.f32 %v464, %v1942
    %v3161 = vadd.f32 %v465, %v1944
    %v3162 = vadd.f32 %v466, %v2970
    %v3163 = vadd.f32 %v467, %v2972
    %v3164 = vadd.f32 %v468, %v1948
    %v3165 = vadd.f32 %v469, %v1950
    %v3166 = vadd.f32 %v470, %v2976
    %v3167 = vadd.f32 %v471, %v2978
    %v3168 = vadd.f32 %v472, %v1954
    %v3169 = vadd.f32 %v473, %v1956
    %v3170 = vadd.f32 %v474, %v2982
    %v3171 = vadd.f32 %v475, %v2984
    %v3172 = vadd.f32 %v476, %v1960
    %v3173 = vadd.f32 %v477, %v1962
    %v3174 = vadd.f32 %v478, %v2988
    %v3175 = vadd.f32 %v479, %v2990
    %v3176 = vadd.f32 %v480, %v1966
    %v3177 = vadd.f32 %v481, %v1968
    %v3178 = vadd.f32 %v482, %v2994
    %v3179 = vadd.f32 %v483, %v2996
    %v3180 = vadd.f32 %v484, %v1972
    %v3181 = vadd.f32 %v485, %v1974
    %v3182 = vadd.f32 %v486, %v3000
    %v3183 = vadd.f32 %v487, %v3002
    %v3184 = vadd.f32 %v488, %v1978
    %v3185 = vadd.f32 %v489, %v1980
    %v3186 = vadd.f32 %v490, %v3006
    %v3187 = vadd.f32 %v491, %v3008
    %v3188 = vadd.f32 %v492, %v1984
    %v3189 = vadd.f32 %v493, %v1986
    %v3190 = vadd.f32 %v494, %v3012
    %v3191 = vadd.f32 %v495, %v3014
    %v3192 = vadd.f32 %v496, %v1990
    %v3193 = vadd.f32 %v497, %v1992
    %v3194 = vadd.f32 %v498, %v3018
    %v3195 = vadd.f32 %v499, %v3020
    %v3196 = vadd.f32 %v500, %v1996
    %v3197 = vadd.f32 %v501, %v1998
    %v3198 = vadd.f32 %v502, %v3024
    %v3199 = vadd.f32 %v503, %v3026
    %v3200 = vadd.f32 %v504, %v2002
    %v3201 = vadd.f32 %v505, %v2004
    %v3202 = vadd.f32 %v506, %v3030
    %v3203 = vadd.f32 %v507, %v3032
    %v3204 = vadd.f32 %v508, %v2008
    %v3205 = vadd.f32 %v509, %v2010
    %v3206 = vadd.f32 %v510, %v3036
    %v3207 = vadd.f32 %v511, %v3038
    %v3208 = vadd.f32 %v512, %v2014
    %v3209 = vadd.f32 %v513, %v2016
    %v3210 = vadd.f32 %v514, %v3042
    %v3211 = vadd.f32 %v515, %v3044
    %v3212 = vadd.f32 %v516, %v2020
    %v3213 = vadd.f32 %v517, %v2022
    %v3214 = vadd.f32 %v518, %v3048
    %v3215 = vadd.f32 %v519, %v3050
    %v3216 = vadd.f32 %v520, %v2026
    %v3217 = vadd.f32 %v521, %v2028
    %v3218 = vadd.f32 %v522, %v3054
    %v3219 = vadd.f32 %v523, %v3056
    %v3220 = vadd.f32 %v524, %v2032
    %v3221 = vadd.f32 %v525, %v2034
    %v3222 = vadd.f32 %v526, %v3060
    %v3223 = vadd.f32 %v527, %v3062
    %v3224 = vadd.f32 %v528, %v2038
    %v3225 = vadd.f32 %v529, %v2040
    %v3226 = vadd.f32 %v530, %v3066
    %v3227 = vadd.f32 %v531, %v3068
    %v3228 = vadd.f32 %v532, %v2044
    %v3229 = vadd.f32 %v533, %v2046
    %v3230 = vadd.f32 %v534, %v3072
    %v3231 = vadd.f32 %v535, %v3074
    %v3232 = vadd.f32 %v536, %v2050
    %v3233 = vadd.f32 %v537, %v2052
    %v3234 = vadd.f32 %v538, %v3078
    %v3235 = vadd.f32 %v539, %v3080
    %v3236 = vadd.f32 %v540, %v2056
    %v3237 = vadd.f32 %v541, %v2058
    %v3238 = vadd.f32 %v542, %v3084
    %v3239 = vadd.f32 %v543, %v3086
    %v3240 = vadd.f32 %v544, %v2062
    %v3241 = vadd.f32 %v545, %v2064
    %v3242 = vadd.f32 %v546, %v3090
    %v3243 = vadd.f32 %v547, %v3092
    %v3244 = vadd.f32 %v548, %v2068
    %v3245 = vadd.f32 %v549, %v2070
    %v3246 = vadd.f32 %v550, %v3096
    %v3247 = vadd.f32 %v551, %v3098
    %v3248 = vadd.f32 %v552, %v2074
    %v3249 = vadd.f32 %v553, %v2076
    %v3250 = vadd.f32 %v554, %v3102
    %v3251 = vadd.f32 %v555, %v3104
    %v3252 = vadd.f32 %v556, %v2080
    %v3253 = vadd.f32 %v557, %v2082
    %v3254 = vadd.f32 %v558, %v3108
    %v3255 = vadd.f32 %v559, %v3110
    %v3256 = vadd.f32 %v560, %v2086
    %v3257 = vadd.f32 %v561, %v2088
    %v3258 = vadd.f32 %v562, %v3114
    %v3259 = vadd.f32 %v563, %v3116
    %v3260 = vadd.f32 %v564, %v2092
    %v3261 = vadd.f32 %v565, %v2094
    %v3262 = vadd.f32 %v566, %v3120
    %v3263 = vadd.f32 %v567, %v3122
    %v3264 = vadd.f32 %v568, %v2098
    %v3265 = vadd.f32 %v569, %v2100
    %v3266 = vadd.f32 %v570, %v3126
    %v3267 = vadd.f32 %v571, %v3128
    %v3268 = vadd.f32 %v572, %v2104
    %v3269 = vadd.f32 %v573, %v2106
    %v3270 = vadd.f32 %v574, %v3132
    %v3271 = vadd.f32 %v575, %v3134
    %v3272 = vadd.f32 %v576, %v2110
    %v3273 = vadd.f32 %v577, %v2112
    %v3274 = vadd.f32 %v578, %v3138
    %v3275 = vadd.f32 %v579, %v3140
    %v3276 = vadd.f32 %v580, %v2116
    %v3277 = vadd.f32 %v581, %v2118
    %v3278 = vadd.f32 %v582, %v3144
    %v3279 = vadd.f32 %v583, %v3146
    %v3280 = vadd.f32 %v584, %v2122
    %v3281 = vadd.f32 %v585, %v2124
    %v3282 = vadd.f32 %v586, %v3150
    %v3283 = vadd.f32 %v587, %v3152
    %v3284 = vadd.f32 %v588, %v2128
    %v3285 = vadd.f32 %v589, %v2130
    %v3286 = vadd.f32 %v590, %v3156
    %v3287 = vadd.f32 %v591, %v3158
    %3288 = vst [vmem:[#allocation8] sm:$0xff] %v3160
    %3289 = vst [vmem:[#allocation8 + $0x8] sm:$0xff] %v3161
    %3290 = vst [vmem:[#allocation8 + $0x10] sm:$0xff] %v3162
    %3291 = vst [vmem:[#allocation8 + $0x18] sm:$0xff] %v3163
    %3292 = vst [vmem:[#allocation8 + $0x20] sm:$0xff] %v3164
    %3293 = vst [vmem:[#allocation8 + $0x28] sm:$0xff] %v3165
    %3294 = vst [vmem:[#allocation8 + $0x30] sm:$0xff] %v3166
    %3295 = vst [vmem:[#allocation8 + $0x38] sm:$0xff] %v3167
    %3296 = vst [vmem:[#allocation8 + $0x40] sm:$0xff] %v3168
    %3297 = vst [vmem:[#allocation8 + $0x48] sm:$0xff] %v3169
    %3298 = vst [vmem:[#allocation8 + $0x50] sm:$0xff] %v3170
    %3299 = vst [vmem:[#allocation8 + $0x58] sm:$0xff] %v3171
    %3300 = vst [vmem:[#allocation8 + $0x60] sm:$0xff] %v3172
    %3301 = vst [vmem:[#allocation8 + $0x68] sm:$0xff] %v3173
    %3302 = vst [vmem:[#allocation8 + $0x70] sm:$0xff] %v3174
    %3303 = vst [vmem:[#allocation8 + $0x78] sm:$0xff] %v3175
    %3304 = vst [vmem:[#allocation8 + $0x80] sm:$0xff] %v3176
    %3305 = vst [vmem:[#allocation8 + $0x88] sm:$0xff] %v3177
    %3306 = vst [vmem:[#allocation8 + $0x90] sm:$0xff] %v3178
    %3307 = vst [vmem:[#allocation8 + $0x98] sm:$0xff] %v3179
    %3308 = vst [vmem:[#allocation8 + $0xa0] sm:$0xff] %v3180
    %3309 = vst [vmem:[#allocation8 + $0xa8] sm:$0xff] %v3181
    %3310 = vst [vmem:[#allocation8 + $0xb0] sm:$0xff] %v3182
    %3311 = vst [vmem:[#allocation8 + $0xb8] sm:$0xff] %v3183
    %3312 = vst [vmem:[#allocation8 + $0xc0] sm:$0xff] %v3184
    %3313 = vst [vmem:[#allocation8 + $0xc8] sm:$0xff] %v3185
    %3314 = vst [vmem:[#allocation8 + $0xd0] sm:$0xff] %v3186
    %3315 = vst [vmem:[#allocation8 + $0xd8] sm:$0xff] %v3187
    %3316 = vst [vmem:[#allocation8 + $0xe0] sm:$0xff] %v3188
    %3317 = vst [vmem:[#allocation8 + $0xe8] sm:$0xff] %v3189
    %3318 = vst [vmem:[#allocation8 + $0xf0] sm:$0xff] %v3190
    %3319 = vst [vmem:[#allocation8 + $0xf8] sm:$0xff] %v3191
    %3320 = vst [vmem:[#allocation8 + $0x100] sm:$0xff] %v3192
    %3321 = vst [vmem:[#allocation8 + $0x108] sm:$0xff] %v3193
    %3322 = vst [vmem:[#allocation8 + $0x110] sm:$0xff] %v3194
    %3323 = vst [vmem:[#allocation8 + $0x118] sm:$0xff] %v3195
    %3324 = vst [vmem:[#allocation8 + $0x120] sm:$0xff] %v3196
    %3325 = vst [vmem:[#allocation8 + $0x128] sm:$0xff] %v3197
    %3326 = vst [vmem:[#allocation8 + $0x130] sm:$0xff] %v3198
    %3327 = vst [vmem:[#allocation8 + $0x138] sm:$0xff] %v3199
    %3328 = vst [vmem:[#allocation8 + $0x140] sm:$0xff] %v3200
    %3329 = vst [vmem:[#allocation8 + $0x148] sm:$0xff] %v3201
    %3330 = vst [vmem:[#allocation8 + $0x150] sm:$0xff] %v3202
    %3331 = vst [vmem:[#allocation8 + $0x158] sm:$0xff] %v3203
    %3332 = vst [vmem:[#allocation8 + $0x160] sm:$0xff] %v3204
    %3333 = vst [vmem:[#allocation8 + $0x168] sm:$0xff] %v3205
    %3334 = vst [vmem:[#allocation8 + $0x170] sm:$0xff] %v3206
    %3335 = vst [vmem:[#allocation8 + $0x178] sm:$0xff] %v3207
    %3336 = vst [vmem:[#allocation8 + $0x180] sm:$0xff] %v3208
    %3337 = vst [vmem:[#allocation8 + $0x188] sm:$0xff] %v3209
    %3338 = vst [vmem:[#allocation8 + $0x190] sm:$0xff] %v3210
    %3339 = vst [vmem:[#allocation8 + $0x198] sm:$0xff] %v3211
    %3340 = vst [vmem:[#allocation8 + $0x1a0] sm:$0xff] %v3212
    %3341 = vst [vmem:[#allocation8 + $0x1a8] sm:$0xff] %v3213
    %3342 = vst [vmem:[#allocation8 + $0x1b0] sm:$0xff] %v3214
    %3343 = vst [vmem:[#allocation8 + $0x1b8] sm:$0xff] %v3215
    %3344 = vst [vmem:[#allocation8 + $0x1c0] sm:$0xff] %v3216
    %3345 = vst [vmem:[#allocation8 + $0x1c8] sm:$0xff] %v3217
    %3346 = vst [vmem:[#allocation8 + $0x1d0] sm:$0xff] %v3218
    %3347 = vst [vmem:[#allocation8 + $0x1d8] sm:$0xff] %v3219
    %3348 = vst [vmem:[#allocation8 + $0x1e0] sm:$0xff] %v3220
    %3349 = vst [vmem:[#allocation8 + $0x1e8] sm:$0xff] %v3221
    %3350 = vst [vmem:[#allocation8 + $0x1f0] sm:$0xff] %v3222
    %3351 = vst [vmem:[#allocation8 + $0x1f8] sm:$0xff] %v3223
    %3352 = vst [vmem:[#allocation8 + $0x200] sm:$0xff] %v3224
    %3353 = vst [vmem:[#allocation8 + $0x208] sm:$0xff] %v3225
    %3354 = vst [vmem:[#allocation8 + $0x210] sm:$0xff] %v3226
    %3355 = vst [vmem:[#allocation8 + $0x218] sm:$0xff] %v3227
    %3356 = vst [vmem:[#allocation8 + $0x220] sm:$0xff] %v3228
    %3357 = vst [vmem:[#allocation8 + $0x228] sm:$0xff] %v3229
    %3358 = vst [vmem:[#allocation8 + $0x230] sm:$0xff] %v3230
    %3359 = vst [vmem:[#allocation8 + $0x238] sm:$0xff] %v3231
    %3360 = vst [vmem:[#allocation8 + $0x240] sm:$0xff] %v3232
    %3361 = vst [vmem:[#allocation8 + $0x248] sm:$0xff] %v3233
    %3362 = vst [vmem:[#allocation8 + $0x250] sm:$0xff] %v3234
    %3363 = vst [vmem:[#allocation8 + $0x258] sm:$0xff] %v3235
    %3364 = vst [vmem:[#allocation8 + $0x260] sm:$0xff] %v3236
    %3365 = vst [vmem:[#allocation8 + $0x268] sm:$0xff] %v3237
    %3366 = vst [vmem:[#allocation8 + $0x270] sm:$0xff] %v3238
    %3367 = vst [vmem:[#allocation8 + $0x278] sm:$0xff] %v3239
    %3368 = vst [vmem:[#allocation8 + $0x280] sm:$0xff] %v3240
    %3369 = vst [vmem:[#allocation8 + $0x288] sm:$0xff] %v3241
    %3370 = vst [vmem:[#allocation8 + $0x290] sm:$0xff] %v3242
    %3371 = vst [vmem:[#allocation8 + $0x298] sm:$0xff] %v3243
    %3372 = vst [vmem:[#allocation8 + $0x2a0] sm:$0xff] %v3244
    %3373 = vst [vmem:[#allocation8 + $0x2a8] sm:$0xff] %v3245
    %3374 = vst [vmem:[#allocation8 + $0x2b0] sm:$0xff] %v3246
    %3375 = vst [vmem:[#allocation8 + $0x2b8] sm:$0xff] %v3247
    %3376 = vst [vmem:[#allocation8 + $0x2c0] sm:$0xff] %v3248
    %3377 = vst [vmem:[#allocation8 + $0x2c8] sm:$0xff] %v3249
    %3378 = vst [vmem:[#allocation8 + $0x2d0] sm:$0xff] %v3250
    %3379 = vst [vmem:[#allocation8 + $0x2d8] sm:$0xff] %v3251
    %3380 = vst [vmem:[#allocation8 + $0x2e0] sm:$0xff] %v3252
    %3381 = vst [vmem:[#allocation8 + $0x2e8] sm:$0xff] %v3253
    %3382 = vst [vmem:[#allocation8 + $0x2f0] sm:$0xff] %v3254
    %3383 = vst [vmem:[#allocation8 + $0x2f8] sm:$0xff] %v3255
    %3384 = vst [vmem:[#allocation8 + $0x300] sm:$0xff] %v3256
    %3385 = vst [vmem:[#allocation8 + $0x308] sm:$0xff] %v3257
    %3386 = vst [vmem:[#allocation8 + $0x310] sm:$0xff] %v3258
    %3387 = vst [vmem:[#allocation8 + $0x318] sm:$0xff] %v3259
    %3388 = vst [vmem:[#allocation8 + $0x320] sm:$0xff] %v3260
    %3389 = vst [vmem:[#allocation8 + $0x328] sm:$0xff] %v3261
    %3390 = vst [vmem:[#allocation8 + $0x330] sm:$0xff] %v3262
    %3391 = vst [vmem:[#allocation8 + $0x338] sm:$0xff] %v3263
    %3392 = vst [vmem:[#allocation8 + $0x340] sm:$0xff] %v3264
    %3393 = vst [vmem:[#allocation8 + $0x348] sm:$0xff] %v3265
    %3394 = vst [vmem:[#allocation8 + $0x350] sm:$0xff] %v3266
    %3395 = vst [vmem:[#allocation8 + $0x358] sm:$0xff] %v3267
    %3396 = vst [vmem:[#allocation8 + $0x360] sm:$0xff] %v3268
    %3397 = vst [vmem:[#allocation8 + $0x368] sm:$0xff] %v3269
    %3398 = vst [vmem:[#allocation8 + $0x370] sm:$0xff] %v3270
    %3399 = vst [vmem:[#allocation8 + $0x378] sm:$0xff] %v3271
    %3400 = vst [vmem:[#allocation8 + $0x380] sm:$0xff] %v3272
    %3401 = vst [vmem:[#allocation8 + $0x388] sm:$0xff] %v3273
    %3402 = vst [vmem:[#allocation8 + $0x390] sm:$0xff] %v3274
    %3403 = vst [vmem:[#allocation8 + $0x398] sm:$0xff] %v3275
    %3404 = vst [vmem:[#allocation8 + $0x3a0] sm:$0xff] %v3276
    %3405 = vst [vmem:[#allocation8 + $0x3a8] sm:$0xff] %v3277
    %3406 = vst [vmem:[#allocation8 + $0x3b0] sm:$0xff] %v3278
    %3407 = vst [vmem:[#allocation8 + $0x3b8] sm:$0xff] %v3279
    %3408 = vst [vmem:[#allocation8 + $0x3c0] sm:$0xff] %v3280
    %3409 = vst [vmem:[#allocation8 + $0x3c8] sm:$0xff] %v3281
    %3410 = vst [vmem:[#allocation8 + $0x3d0] sm:$0xff] %v3282
    %3411 = vst [vmem:[#allocation8 + $0x3d8] sm:$0xff] %v3283
    %3412 = vst [vmem:[#allocation8 + $0x3e0] sm:$0xff] %v3284
    %3413 = vst [vmem:[#allocation8 + $0x3e8] sm:$0xff] %v3285
    %3414 = vst [vmem:[#allocation8 + $0x3f0] sm:$0xff] %v3286
    %3415 = vst [vmem:[#allocation8 + $0x3f8] sm:$0xff] %v3287
    // Predicated region
    $region30: #{tpu_custom_call.1} parent=1 // pred_check
      _
    $region31: #{tpu_custom_call.1} parent=1 // pred_check_branch
      %3417 = sbr.rel (0) target = $region33
    $region32: #{tpu_custom_call.1} parent=1 // pred_region
      %s3419 = ssub.s32 16384, 16384
      %3420 = vsyncadd [#allocation4], %s3419
      %s3421 = sshll.u32 [#allocation8], 4
      %s3422 = int_to_ptr.vmem [resolvable:$true] %s3421
      %3427 = dma.vmem_to_hbm [thread:$0]  %s3422, 16384, %s3, [#allocation4], 512, 512, 32
    $region33: #{tpu_custom_call.1} parent=1 // pred_fallthru
      _
    // Predicated region
    $region34: #{tpu_custom_call.1} parent=1 // pred_check
      _
    $region35: #{tpu_custom_call.1} parent=1 // pred_check_branch
      %3429 = sbr.rel (0) target = $region37
    $region36: #{tpu_custom_call.1} parent=1 // pred_region
      %3430 = dma.done [#allocation4], 16384
    $region37: #{tpu_custom_call.1} parent=1 // pred_fallthru
      _
    %3431 = vsyncpa [#allocation3], 1
    %3432 = vsyncpa [#allocation6], 1
    %3433 = vsyncpa [#allocation4], 1

</llo_original>
